<compile_context>
chip_gen: v7x
topology: tpu7x:2x2x1
jax: 0.10.0
libtpu: 0.0.40
codegen_flags: <defaults>
</compile_context>

<pallas_src>
import functools
import math

import jax
import jax.numpy as jnp
from jax.experimental import pallas as pl
from jax.experimental.pallas import tpu as pltpu


# ---------------------------------------------------------------------------
# Fused kernel: one image (grid step) per invocation.
# ---------------------------------------------------------------------------
def _deblur_mask_kernel(
    blur_ref, reblur_ref,          # (1, C, H*W) f32 each
    wh_ref, bh_ref,                # head:      (F, 9*F) bf16 (channel-padded), (F, 1) f32
    wb_ref, bb_ref,                # body conv: (6, F, 9*F) bf16, (6, F, 1) f32
    wcd_ref, bcd_ref,              # CA down:   (3, F, Cr) f32, (3, 1, Cr) f32
    wcu_ref, bcu_ref,              # CA up:     (3, F, Cr) f32, (3, F, 1) f32
    wt_ref, bt_ref,                # tail:      (C, 9*F) bf16, (C, 1) f32
    o_ref,                         # (1, C, H*W) f32
    fbuf_ref,                      # VMEM (F, OFF + H*W + OFF) bf16 : flat zero-haloed activation
    col_ref,                       # VMEM (9*F, H*W) bf16           : transposed im2col staging
    *, H, W, C, F, OFF, alpha,
):
    HW = H * W

    # Zero only the two lane-aligned halo strips.  The interior [OFF, OFF+HW)
    # is fully rewritten before every read, so this (re-done per image) is the
    # only zeroing needed and keeps the kernel megacore-safe.
    fbuf_ref[:, pl.ds(0, OFF)] = jnp.zeros((F, OFF), jnp.bfloat16)
    fbuf_ref[:, pl.ds(OFF + HW, OFF)] = jnp.zeros((F, OFF), jnp.bfloat16)

    # Horizontal-border lane masks (x == 0 / x == W-1), shared by all 8 convs.
    xcoord = jax.lax.broadcasted_iota(jnp.int32, (1, HW), 1) % W
    left_ok = xcoord != 0          # valid lanes for taps with dx offset -1
    right_ok = xcoord != W - 1     # valid lanes for taps with dx offset +1

    def conv3x3(x2d, w_bf16, bias, act=None):
        # x2d: (F, HW) f32   w_bf16: (cout, 9*F) bf16   bias: (cout, 1) f32
        # One cast per conv: activations are staged in bf16, math stays f32.
        fbuf_ref[:, pl.ds(OFF, HW)] = x2d.astype(jnp.bfloat16)
        for t in range(9):
            dy, dx = divmod(t, 3)
            shift = (dy - 1) * W + (dx - 1)
            # Static, unaligned lane slice: vertical out-of-bounds lands in the
            # zero halo; horizontal out-of-bounds is cleared with a select.
            tap = fbuf_ref[:, pl.ds(OFF + shift, HW)]
            if dx == 0:
                tap = jnp.where(left_ok, tap, jnp.zeros_like(tap))
            elif dx == 2:
                tap = jnp.where(right_ok, tap, jnp.zeros_like(tap))
            col_ref[pl.ds(t * F, F), :] = tap          # aligned 16-row block, 256 dense lanes
        # Single MXU matmul: (cout, 9F) x (9F, HW) -> (cout, HW), f32 accumulation.
        acc = jnp.dot(w_bf16, col_ref[...], preferred_element_type=jnp.float32) + bias
        if act == "relu":
            acc = jnp.maximum(acc, 0.0)
        elif act == "sigmoid":
            acc = jax.nn.sigmoid(acc)
        return acc                                     # (cout, HW) f32

    # --- robust mask: 1 - tanh((softshrink(|blur - reblur|, a) / a)^2) ------
    diff = jnp.abs(blur_ref[0] - reblur_ref[0])        # (C, HW), >= 0
    shrunk = jnp.maximum(diff - alpha, 0.0)            # softshrink of |.|
    m = 1.0 - jnp.tanh((shrunk * (1.0 / alpha)) ** 2)
    if F > C:
        # Channel-pad C -> F so every im2col store stays 16-sublane aligned.
        # The padded head-weight columns are zero, so the extra rows are inert.
        m = jnp.concatenate([m, jnp.zeros((F - C, HW), jnp.float32)], axis=0)

    # --- head conv -----------------------------------------------------------
    x = conv3x3(m, wh_ref[...], bh_ref[...])                           # (F, HW)

    # --- 3x RCAB: conv -> ReLU -> conv -> channel attention -> + residual ----
    for i in range(3):
        res = conv3x3(x, wb_ref[2 * i], bb_ref[2 * i], "relu")
        res = conv3x3(res, wb_ref[2 * i + 1], bb_ref[2 * i + 1])
        # CALayer on VPU/XLU: lane reduce -> tiny broadcast matvecs -> scale.
        gap = jnp.mean(res, axis=1, keepdims=True)                     # (F, 1)
        z = jnp.maximum(
            jnp.sum(wcd_ref[i] * gap, axis=0, keepdims=True) + bcd_ref[i],
            0.0)                                                       # (1, Cr)
        s = jax.nn.sigmoid(
            jnp.sum(wcu_ref[i] * z, axis=1, keepdims=True) + bcu_ref[i])  # (F, 1)
        x = res * s + x                                                # (F, HW)

    # --- tail conv + sigmoid --------------------------------------------------
    out = conv3x3(x, wt_ref[...], bt_ref[...], "sigmoid")              # (C, HW)
    o_ref[0] = out                                     # lane-dense (C, 256) store


# ---------------------------------------------------------------------------
# Wrapper: NCHW-native I/O (pure reshapes, no transposes) + pallas_call.
# ---------------------------------------------------------------------------
def deblur_mask_forward(blur_nchw, reblur_nchw, params, *, alpha=0.05):
    N, C, H, W = blur_nchw.shape
    F = params["b_head"].shape[0]
    Cr = params["w_ca_down"].shape[-1]
    HW = H * W
    OFF = -(-(W + 1) // 128) * 128          # lane-aligned flat halo (>= W+1)

    blur = blur_nchw.reshape(N, C, HW).astype(jnp.float32)
    reblur = reblur_nchw.reshape(N, C, HW).astype(jnp.float32)

    # Zero-pad the head weight's input channels C -> F (tiny, folded by XLA).
    wh = params["w_head"].reshape(F, 9, C)
    wh = jnp.pad(wh, ((0, 0), (0, 0), (0, F - C))).reshape(F, 9 * F)
    wh = wh.astype(jnp.bfloat16)

    kernel = functools.partial(_deblur_mask_kernel,
                               H=H, W=W, C=C, F=F, OFF=OFF, alpha=alpha)

    def whole(shape):
        nd = len(shape)
        return pl.BlockSpec(shape, lambda n: (0,) * nd)

    out = pl.pallas_call(
        kernel,
        out_shape=jax.ShapeDtypeStruct((N, C, HW), jnp.float32),
        grid=(N,),
        in_specs=[
            pl.BlockSpec((1, C, HW), lambda n: (n, 0, 0)),
            pl.BlockSpec((1, C, HW), lambda n: (n, 0, 0)),
            whole((F, 9 * F)), whole((F, 1)),
            whole((6, F, 9 * F)), whole((6, F, 1)),
            whole((3, F, Cr)), whole((3, 1, Cr)),
            whole((3, F, Cr)), whole((3, F, 1)),
            whole((C, 9 * F)), whole((C, 1)),
        ],
        out_specs=pl.BlockSpec((1, C, HW), lambda n: (n, 0, 0)),
        scratch_shapes=[
            pltpu.VMEM((F, 2 * OFF + HW), jnp.bfloat16),
            pltpu.VMEM((9 * F, HW), jnp.bfloat16),
        ],
        compiler_params=pltpu.CompilerParams(
            dimension_semantics=("parallel",),   # batch axis feeds both v7x TCs
        ),
    )(
        blur, reblur,
        wh, params["b_head"],
        params["w_body"], params["b_body"],
        params["w_ca_down"], params["b_ca_down"],
        params["w_ca_up"], params["b_ca_up"],
        params["w_tail"], params["b_tail"],
    )

    return reblur_nchw, out.reshape(N, C, H, W)


# ---------------------------------------------------------------------------
# Parameter init (deterministic, PyTorch-Conv2d-style uniform bounds).
# Conv weights stored as (cout, 9*cin) bf16 with column order (tap, cin);
# the two 1x1 CA weights are stored as (F, Cr) for lane/sublane reductions.
# ---------------------------------------------------------------------------
def init_params(key, in_channels, n_feat, reduction):
    C, F = in_channels, n_feat
    Cr = max(n_feat // reduction, 1)
    keys = iter(jax.random.split(key, 32))

    def uniform(shape, fan_in):
        bound = 1.0 / math.sqrt(fan_in)
        return jax.random.uniform(next(keys), shape, jnp.float32, -bound, bound)

    def conv3x3_wb(cin, cout):
        w = uniform((cout, 3, 3, cin), cin * 9)              # [o, dy, dx, ci]
        b = uniform((cout, 1), cin * 9)
        return w.reshape(cout, 9 * cin).astype(jnp.bfloat16), b

    w_head, b_head = conv3x3_wb(C, F)
    w_tail, b_tail = conv3x3_wb(F, C)

    w_body, b_body = [], []
    w_cd, b_cd, w_cu, b_cu = [], [], [], []
    for _ in range(3):
        w1, b1 = conv3x3_wb(F, F)
        w2, b2 = conv3x3_wb(F, F)
        w_body += [w1, w2]
        b_body += [b1, b2]
        w_cd.append(uniform((F, Cr), F))       # 1x1 conv F -> Cr, stored [f, cr]
        b_cd.append(uniform((1, Cr), F))
        w_cu.append(uniform((F, Cr), Cr))      # 1x1 conv Cr -> F, stored [f, cr]
        b_cu.append(uniform((F, 1), Cr))

    return {
        "w_head": w_head, "b_head": b_head,
        "w_body": jnp.stack(w_body), "b_body": jnp.stack(b_body),
        "w_ca_down": jnp.stack(w_cd), "b_ca_down": jnp.stack(b_cd),
        "w_ca_up": jnp.stack(w_cu), "b_ca_up": jnp.stack(b_cu),
        "w_tail": w_tail, "b_tail": b_tail,
    }


# ---------------------------------------------------------------------------
# Pure-JAX (XLA) reference for correctness checking.
# ---------------------------------------------------------------------------
def reference_forward(blur_nchw, reblur_nchw, params, *, alpha=0.05):
    N, C, H, W = blur_nchw.shape
    F = params["b_head"].shape[0]
    x = jnp.transpose(blur_nchw, (0, 2, 3, 1)).astype(jnp.float32)
    r = jnp.transpose(reblur_nchw, (0, 2, 3, 1)).astype(jnp.float32)

    diff = jnp.abs(x - r)
    shrunk = jnp.maximum(diff - alpha, 0.0)
    h = 1.0 - jnp.tanh((shrunk / alpha) ** 2)

    def conv(inp, w_flat, b, cin, cout):
        w = w_flat.astype(jnp.float32).reshape(cout, 3, 3, cin).transpose(1, 2, 3, 0)
        y = jax.lax.conv_general_dilated(
            inp, w, window_strides=(1, 1), padding="SAME",
            dimension_numbers=("NHWC", "HWIO", "NHWC"))
        return y + b.reshape(1, 1, 1, cout)

    cur = conv(h, params["w_head"], params["b_head"], C, F)
    for i in range(3):
        res = jax.nn.relu(
            conv(cur, params["w_body"][2 * i], params["b_body"][2 * i], F, F))
        res = conv(res, params["w_body"][2 * i + 1], params["b_body"][2 * i + 1], F, F)
        gap = jnp.mean(res, axis=(1, 2), keepdims=True)                    # (N,1,1,F)
        wd, bd = params["w_ca_down"][i], params["b_ca_down"][i]            # (F,Cr),(1,Cr)
        wu, bu = params["w_ca_up"][i], params["b_ca_up"][i]                # (F,Cr),(F,1)
        z = jax.nn.relu(jnp.einsum("nijf,fc->nijc", gap, wd) + bd[0])
        s = jax.nn.sigmoid(jnp.einsum("nijc,fc->nijf", z, wu) + bu[:, 0])
        cur = res * s + cur
    out = jax.nn.sigmoid(conv(cur, params["w_tail"], params["b_tail"], F, C))
    return jnp.transpose(out, (0, 3, 1, 2))


if __name__ == "__main__":
    N, C, H, W = 2, 4, 16, 16
    n_feat, reduction = 16, 4   # RCAB channel-attention reduction -> Cr = 4

    key = jax.random.PRNGKey(0)
    k1, k2, k3 = jax.random.split(key, 3)
    blur = jax.random.uniform(k1, (N, C, H, W), jnp.float32)
    reblur = jax.random.uniform(k2, (N, C, H, W), jnp.float32)
    params = init_params(k3, C, n_feat, reduction)

    fwd = jax.jit(lambda b, r: deblur_mask_forward(b, r, params))
    reb_out, mask_out = fwd(blur, reblur)
    jax.block_until_ready((reb_out, mask_out))

    assert reb_out.shape == (N, C, H, W)
    assert mask_out.shape == (N, C, H, W)
    assert bool(jnp.all(jnp.isfinite(mask_out)))
    assert bool(jnp.all((mask_out >= 0.0) & (mask_out <= 1.0)))  # sigmoid output

    ref = reference_forward(blur, reblur, params)
    max_err = float(jnp.max(jnp.abs(mask_out - ref)))
    assert max_err < 5e-2, f"kernel vs reference mismatch: max abs err = {max_err}"

    print("KERNEL_OK")
</pallas_src>

<mosaic_0001>
module attributes {stable_mosaic.version = 11 : i64} {
  func.func @_deblur_mask_kernel(%arg0: i32, %arg1: memref<1x4x256xf32, #tpu.memory_space<vmem>>, %arg2: memref<1x4x256xf32, #tpu.memory_space<vmem>>, %arg3: memref<16x144xbf16, #tpu.memory_space<vmem>>, %arg4: memref<16x1xf32, #tpu.memory_space<vmem>>, %arg5: memref<6x16x144xbf16, #tpu.memory_space<vmem>>, %arg6: memref<6x16x1xf32, #tpu.memory_space<vmem>>, %arg7: memref<3x16x4xf32, #tpu.memory_space<vmem>>, %arg8: memref<3x1x4xf32, #tpu.memory_space<vmem>>, %arg9: memref<3x16x4xf32, #tpu.memory_space<vmem>>, %arg10: memref<3x16x1xf32, #tpu.memory_space<vmem>>, %arg11: memref<4x144xbf16, #tpu.memory_space<vmem>>, %arg12: memref<4x1xf32, #tpu.memory_space<vmem>>, %arg13: memref<1x4x256xf32, #tpu.memory_space<vmem>>, %arg14: memref<16x512xbf16, #tpu.memory_space<vmem>>, %arg15: memref<144x256xbf16, #tpu.memory_space<vmem>>) attributes {dimension_semantics = [#tpu.dimension_semantics<parallel>], iteration_bounds = array<i64: 2>, scalar_prefetch = 0 : i64, scratch_operands = 2 : i64, tpu.core_type = #tpu.core_type<tc>, window_params = [{transform_indices = @transform_0, window_bounds = array<i64: 1, 4, 256>}, {transform_indices = @transform_1, window_bounds = array<i64: 1, 4, 256>}, {pipeline_mode = #tpu.pipeline_mode<synchronous>, transform_indices = @transform_2, window_bounds = array<i64: 16, 144>}, {pipeline_mode = #tpu.pipeline_mode<synchronous>, transform_indices = @transform_3, window_bounds = array<i64: 16, 1>}, {pipeline_mode = #tpu.pipeline_mode<synchronous>, transform_indices = @transform_4, window_bounds = array<i64: 6, 16, 144>}, {pipeline_mode = #tpu.pipeline_mode<synchronous>, transform_indices = @transform_5, window_bounds = array<i64: 6, 16, 1>}, {pipeline_mode = #tpu.pipeline_mode<synchronous>, transform_indices = @transform_6, window_bounds = array<i64: 3, 16, 4>}, {pipeline_mode = #tpu.pipeline_mode<synchronous>, transform_indices = @transform_7, window_bounds = array<i64: 3, 1, 4>}, {pipeline_mode = #tpu.pipeline_mode<synchronous>, transform_indices = @transform_8, window_bounds = array<i64: 3, 16, 4>}, {pipeline_mode = #tpu.pipeline_mode<synchronous>, transform_indices = @transform_9, window_bounds = array<i64: 3, 16, 1>}, {pipeline_mode = #tpu.pipeline_mode<synchronous>, transform_indices = @transform_10, window_bounds = array<i64: 4, 144>}, {pipeline_mode = #tpu.pipeline_mode<synchronous>, transform_indices = @transform_11, window_bounds = array<i64: 4, 1>}, {transform_indices = @transform_12, window_bounds = array<i64: 1, 4, 256>}]} {
    %cst = arith.constant 0.000000e+00 : bf16
    %0 = vector.broadcast %cst : bf16 to vector<16x128xbf16>
    %c0 = arith.constant 0 : index
    %c0_0 = arith.constant 0 : index
    %1 = vector.load %arg14[%c0, %c0_0] : memref<16x512xbf16, #tpu.memory_space<vmem>>, vector<16x128xbf16>
    tpu.vector_store %arg14[%c0, %c0_0], %0 {strides = array<i32>} : memref<16x512xbf16, #tpu.memory_space<vmem>>, vector<16x128xbf16>,
    %cst_1 = arith.constant 0.000000e+00 : bf16
    %2 = vector.broadcast %cst_1 : bf16 to vector<16x128xbf16>
    %c0_2 = arith.constant 0 : index
    %c384 = arith.constant 384 : index
    %3 = vector.load %arg14[%c0_2, %c384] : memref<16x512xbf16, #tpu.memory_space<vmem>>, vector<16x128xbf16>
    tpu.vector_store %arg14[%c0_2, %c384], %2 {strides = array<i32>} : memref<16x512xbf16, #tpu.memory_space<vmem>>, vector<16x128xbf16>,
    %4 = tpu.iota {dimensions = array<i32: 1>} : vector<1x256xi32>
    %c16_i32 = arith.constant 16 : i32
    %c0_i32 = arith.constant 0 : i32
    %5 = arith.cmpi eq, %c16_i32, %c0_i32 : i32
    %c1_i32 = arith.constant 1 : i32
    %6 = arith.select %5, %c1_i32, %c16_i32 : i32
    %7 = vector.broadcast %6 : i32 to vector<1x256xi32>
    %8 = arith.remsi %4, %7 : vector<1x256xi32>
    %c0_i32_3 = arith.constant 0 : i32
    %9 = vector.broadcast %c0_i32_3 : i32 to vector<1x256xi32>
    %10 = arith.cmpi ne, %8, %9 : vector<1x256xi32>
    %c0_i32_4 = arith.constant 0 : i32
    %11 = vector.broadcast %c0_i32_4 : i32 to vector<1x256xi32>
    %12 = arith.cmpi slt, %8, %11 : vector<1x256xi32>
    %c0_i32_5 = arith.constant 0 : i32
    %13 = arith.cmpi slt, %6, %c0_i32_5 : i32
    %14 = vector.broadcast %13 : i1 to vector<1x256xi1>
    %15 = vector.broadcast %14 : vector<1x256xi1> to vector<1x256xi1>
    %16 = arith.xori %12, %15 : vector<1x256xi1>
    %17 = arith.andi %16, %10 : vector<1x256xi1>
    %18 = vector.broadcast %6 : i32 to vector<1x256xi32>
    %19 = arith.addi %8, %18 : vector<1x256xi32>
    %20 = arith.select %17, %19, %8 : vector<1x256xi1>, vector<1x256xi32>
    %c0_i32_6 = arith.constant 0 : i32
    %21 = vector.broadcast %c0_i32_6 : i32 to vector<1x256xi32>
    %22 = arith.cmpi ne, %20, %21 : vector<1x256xi32>
    %c15_i32 = arith.constant 15 : i32
    %23 = vector.broadcast %c15_i32 : i32 to vector<1x256xi32>
    %24 = arith.cmpi ne, %20, %23 : vector<1x256xi32>
    %c0_7 = arith.constant 0 : index
    %c0_8 = arith.constant 0 : index
    %c0_9 = arith.constant 0 : index
    %25 = vector.load %arg1[%c0_7, %c0_8, %c0_9] : memref<1x4x256xf32, #tpu.memory_space<vmem>>, vector<1x4x256xf32>
    %26 = vector.shape_cast %25 : vector<1x4x256xf32> to vector<4x256xf32>
    %c0_10 = arith.constant 0 : index
    %c0_11 = arith.constant 0 : index
    %c0_12 = arith.constant 0 : index
    %27 = vector.load %arg2[%c0_10, %c0_11, %c0_12] : memref<1x4x256xf32, #tpu.memory_space<vmem>>, vector<1x4x256xf32>
    %28 = vector.shape_cast %27 : vector<1x4x256xf32> to vector<4x256xf32>
    %29 = arith.subf %26, %28 : vector<4x256xf32>
    %30 = math.absf %29 : vector<4x256xf32>
    %cst_13 = arith.constant 5.000000e-02 : f32
    %31 = vector.broadcast %cst_13 : f32 to vector<4x256xf32>
    %32 = arith.subf %30, %31 : vector<4x256xf32>
    %cst_14 = arith.constant 0.000000e+00 : f32
    %33 = vector.broadcast %cst_14 : f32 to vector<4x256xf32>
    %34 = arith.maximumf %32, %33 : vector<4x256xf32>
    %cst_15 = arith.constant 2.000000e+01 : f32
    %35 = vector.broadcast %cst_15 : f32 to vector<4x256xf32>
    %36 = arith.mulf %34, %35 : vector<4x256xf32>
    %37 = arith.mulf %36, %36 : vector<4x256xf32>
    %38 = math.tanh %37 : vector<4x256xf32>
    %cst_16 = arith.constant 1.000000e+00 : f32
    %39 = vector.broadcast %cst_16 : f32 to vector<4x256xf32>
    %40 = arith.subf %39, %38 : vector<4x256xf32>
    %cst_17 = arith.constant 0.000000e+00 : f32
    %41 = vector.broadcast %cst_17 : f32 to vector<12x256xf32>
    %42 = tpu.concatenate %40, %41 in 0 : vector<4x256xf32>, vector<12x256xf32> -> vector<16x256xf32>
    %c0_18 = arith.constant 0 : index
    %c0_19 = arith.constant 0 : index
    %43 = vector.load %arg3[%c0_18, %c0_19] : memref<16x144xbf16, #tpu.memory_space<vmem>>, vector<16x144xbf16>
    %c0_20 = arith.constant 0 : index
    %c0_21 = arith.constant 0 : index
    %44 = vector.load %arg4[%c0_20, %c0_21] : memref<16x1xf32, #tpu.memory_space<vmem>>, vector<16x1xf32>
    %45 = arith.truncf %42 : vector<16x256xf32> to vector<16x256xbf16>
    %c0_22 = arith.constant 0 : index
    %c128 = arith.constant 128 : index
    %46 = vector.load %arg14[%c0_22, %c128] : memref<16x512xbf16, #tpu.memory_space<vmem>>, vector<16x256xbf16>
    tpu.vector_store %arg14[%c0_22, %c128], %45 {strides = array<i32>} : memref<16x512xbf16, #tpu.memory_space<vmem>>, vector<16x256xbf16>,
    %c0_23 = arith.constant 0 : index
    %c111 = arith.constant 111 : index
    %47 = vector.load %arg14[%c0_23, %c111] : memref<16x512xbf16, #tpu.memory_space<vmem>>, vector<16x256xbf16>
    %cst_24 = arith.constant 0.000000e+00 : bf16
    %48 = vector.broadcast %cst_24 : bf16 to vector<16x256xbf16>
    %49 = vector.shape_cast %22 : vector<1x256xi1> to vector<1x256xi1>
    %50 = vector.broadcast %49 : vector<1x256xi1> to vector<16x256xi1>
    %51 = arith.select %50, %47, %48 : vector<16x256xi1>, vector<16x256xbf16>
    %c0_25 = arith.constant 0 : index
    %c0_26 = arith.constant 0 : index
    %52 = vector.load %arg15[%c0_25, %c0_26] : memref<144x256xbf16, #tpu.memory_space<vmem>>, vector<16x256xbf16>
    tpu.vector_store %arg15[%c0_25, %c0_26], %51 {strides = array<i32>} : memref<144x256xbf16, #tpu.memory_space<vmem>>, vector<16x256xbf16>,
    %c0_27 = arith.constant 0 : index
    %c112 = arith.constant 112 : index
    %53 = vector.load %arg14[%c0_27, %c112] : memref<16x512xbf16, #tpu.memory_space<vmem>>, vector<16x256xbf16>
    %c16 = arith.constant 16 : index
    %c0_28 = arith.constant 0 : index
    %54 = vector.load %arg15[%c16, %c0_28] : memref<144x256xbf16, #tpu.memory_space<vmem>>, vector<16x256xbf16>
    tpu.vector_store %arg15[%c16, %c0_28], %53 {strides = array<i32>} : memref<144x256xbf16, #tpu.memory_space<vmem>>, vector<16x256xbf16>,
    %c0_29 = arith.constant 0 : index
    %c113 = arith.constant 113 : index
    %55 = vector.load %arg14[%c0_29, %c113] : memref<16x512xbf16, #tpu.memory_space<vmem>>, vector<16x256xbf16>
    %cst_30 = arith.constant 0.000000e+00 : bf16
    %56 = vector.broadcast %cst_30 : bf16 to vector<16x256xbf16>
    %57 = vector.shape_cast %24 : vector<1x256xi1> to vector<1x256xi1>
    %58 = vector.broadcast %57 : vector<1x256xi1> to vector<16x256xi1>
    %59 = arith.select %58, %55, %56 : vector<16x256xi1>, vector<16x256xbf16>
    %c32 = arith.constant 32 : index
    %c0_31 = arith.constant 0 : index
    %60 = vector.load %arg15[%c32, %c0_31] : memref<144x256xbf16, #tpu.memory_space<vmem>>, vector<16x256xbf16>
    tpu.vector_store %arg15[%c32, %c0_31], %59 {strides = array<i32>} : memref<144x256xbf16, #tpu.memory_space<vmem>>, vector<16x256xbf16>,
    %c0_32 = arith.constant 0 : index
    %c127 = arith.constant 127 : index
    %61 = vector.load %arg14[%c0_32, %c127] : memref<16x512xbf16, #tpu.memory_space<vmem>>, vector<16x256xbf16>
    %cst_33 = arith.constant 0.000000e+00 : bf16
    %62 = vector.broadcast %cst_33 : bf16 to vector<16x256xbf16>
    %63 = vector.shape_cast %22 : vector<1x256xi1> to vector<1x256xi1>
    %64 = vector.broadcast %63 : vector<1x256xi1> to vector<16x256xi1>
    %65 = arith.select %64, %61, %62 : vector<16x256xi1>, vector<16x256xbf16>
    %c48 = arith.constant 48 : index
    %c0_34 = arith.constant 0 : index
    %66 = vector.load %arg15[%c48, %c0_34] : memref<144x256xbf16, #tpu.memory_space<vmem>>, vector<16x256xbf16>
    tpu.vector_store %arg15[%c48, %c0_34], %65 {strides = array<i32>} : memref<144x256xbf16, #tpu.memory_space<vmem>>, vector<16x256xbf16>,
    %c0_35 = arith.constant 0 : index
    %c128_36 = arith.constant 128 : index
    %67 = vector.load %arg14[%c0_35, %c128_36] : memref<16x512xbf16, #tpu.memory_space<vmem>>, vector<16x256xbf16>
    %c64 = arith.constant 64 : index
    %c0_37 = arith.constant 0 : index
    %68 = vector.load %arg15[%c64, %c0_37] : memref<144x256xbf16, #tpu.memory_space<vmem>>, vector<16x256xbf16>
    tpu.vector_store %arg15[%c64, %c0_37], %67 {strides = array<i32>} : memref<144x256xbf16, #tpu.memory_space<vmem>>, vector<16x256xbf16>,
    %c0_38 = arith.constant 0 : index
    %c129 = arith.constant 129 : index
    %69 = vector.load %arg14[%c0_38, %c129] : memref<16x512xbf16, #tpu.memory_space<vmem>>, vector<16x256xbf16>
    %cst_39 = arith.constant 0.000000e+00 : bf16
    %70 = vector.broadcast %cst_39 : bf16 to vector<16x256xbf16>
    %71 = vector.shape_cast %24 : vector<1x256xi1> to vector<1x256xi1>
    %72 = vector.broadcast %71 : vector<1x256xi1> to vector<16x256xi1>
    %73 = arith.select %72, %69, %70 : vector<16x256xi1>, vector<16x256xbf16>
    %c80 = arith.constant 80 : index
    %c0_40 = arith.constant 0 : index
    %74 = vector.load %arg15[%c80, %c0_40] : memref<144x256xbf16, #tpu.memory_space<vmem>>, vector<16x256xbf16>
    tpu.vector_store %arg15[%c80, %c0_40], %73 {strides = array<i32>} : memref<144x256xbf16, #tpu.memory_space<vmem>>, vector<16x256xbf16>,
    %c0_41 = arith.constant 0 : index
    %c143 = arith.constant 143 : index
    %75 = vector.load %arg14[%c0_41, %c143] : memref<16x512xbf16, #tpu.memory_space<vmem>>, vector<16x256xbf16>
    %cst_42 = arith.constant 0.000000e+00 : bf16
    %76 = vector.broadcast %cst_42 : bf16 to vector<16x256xbf16>
    %77 = vector.shape_cast %22 : vector<1x256xi1> to vector<1x256xi1>
    %78 = vector.broadcast %77 : vector<1x256xi1> to vector<16x256xi1>
    %79 = arith.select %78, %75, %76 : vector<16x256xi1>, vector<16x256xbf16>
    %c96 = arith.constant 96 : index
    %c0_43 = arith.constant 0 : index
    %80 = vector.load %arg15[%c96, %c0_43] : memref<144x256xbf16, #tpu.memory_space<vmem>>, vector<16x256xbf16>
    tpu.vector_store %arg15[%c96, %c0_43], %79 {strides = array<i32>} : memref<144x256xbf16, #tpu.memory_space<vmem>>, vector<16x256xbf16>,
    %c0_44 = arith.constant 0 : index
    %c144 = arith.constant 144 : index
    %81 = vector.load %arg14[%c0_44, %c144] : memref<16x512xbf16, #tpu.memory_space<vmem>>, vector<16x256xbf16>
    %c112_45 = arith.constant 112 : index
    %c0_46 = arith.constant 0 : index
    %82 = vector.load %arg15[%c112_45, %c0_46] : memref<144x256xbf16, #tpu.memory_space<vmem>>, vector<16x256xbf16>
    tpu.vector_store %arg15[%c112_45, %c0_46], %81 {strides = array<i32>} : memref<144x256xbf16, #tpu.memory_space<vmem>>, vector<16x256xbf16>,
    %c0_47 = arith.constant 0 : index
    %c145 = arith.constant 145 : index
    %83 = vector.load %arg14[%c0_47, %c145] : memref<16x512xbf16, #tpu.memory_space<vmem>>, vector<16x256xbf16>
    %cst_48 = arith.constant 0.000000e+00 : bf16
    %84 = vector.broadcast %cst_48 : bf16 to vector<16x256xbf16>
    %85 = vector.shape_cast %24 : vector<1x256xi1> to vector<1x256xi1>
    %86 = vector.broadcast %85 : vector<1x256xi1> to vector<16x256xi1>
    %87 = arith.select %86, %83, %84 : vector<16x256xi1>, vector<16x256xbf16>
    %c128_49 = arith.constant 128 : index
    %c0_50 = arith.constant 0 : index
    %88 = vector.load %arg15[%c128_49, %c0_50] : memref<144x256xbf16, #tpu.memory_space<vmem>>, vector<16x256xbf16>
    tpu.vector_store %arg15[%c128_49, %c0_50], %87 {strides = array<i32>} : memref<144x256xbf16, #tpu.memory_space<vmem>>, vector<16x256xbf16>,
    %c0_51 = arith.constant 0 : index
    %c0_52 = arith.constant 0 : index
    %89 = vector.load %arg15[%c0_51, %c0_52] : memref<144x256xbf16, #tpu.memory_space<vmem>>, vector<144x256xbf16>
    %cst_53 = arith.constant dense<0.000000e+00> : vector<16x256xf32>
    %90 = tpu.matmul %43, %89, %cst_53 {dimension_numbers = #tpu.dot_dimension_numbers<[1], [0], [0], [1], [0, 0, 1, 1], [], []>} : vector<16x144xbf16>, vector<144x256xbf16>, vector<16x256xf32> -> vector<16x256xf32>
    %91 = vector.broadcast %44 : vector<16x1xf32> to vector<16x256xf32>
    %92 = arith.addf %90, %91 : vector<16x256xf32>
    %c0_54 = arith.constant 0 : index
    %c0_55 = arith.constant 0 : index
    %c0_56 = arith.constant 0 : index
    %93 = vector.load %arg5[%c0_54, %c0_55, %c0_56] : memref<6x16x144xbf16, #tpu.memory_space<vmem>>, vector<1x16x144xbf16>
    %94 = vector.shape_cast %93 : vector<1x16x144xbf16> to vector<16x144xbf16>
    %c0_57 = arith.constant 0 : index
    %c0_58 = arith.constant 0 : index
    %c0_59 = arith.constant 0 : index
    %95 = vector.load %arg6[%c0_57, %c0_58, %c0_59] : memref<6x16x1xf32, #tpu.memory_space<vmem>>, vector<1x16x1xf32>
    %96 = vector.shape_cast %95 : vector<1x16x1xf32> to vector<16x1xf32>
    %97 = arith.truncf %92 : vector<16x256xf32> to vector<16x256xbf16>
    %c0_60 = arith.constant 0 : index
    %c128_61 = arith.constant 128 : index
    %98 = vector.load %arg14[%c0_60, %c128_61] : memref<16x512xbf16, #tpu.memory_space<vmem>>, vector<16x256xbf16>
    tpu.vector_store %arg14[%c0_60, %c128_61], %97 {strides = array<i32>} : memref<16x512xbf16, #tpu.memory_space<vmem>>, vector<16x256xbf16>,
    %c0_62 = arith.constant 0 : index
    %c111_63 = arith.constant 111 : index
    %99 = vector.load %arg14[%c0_62, %c111_63] : memref<16x512xbf16, #tpu.memory_space<vmem>>, vector<16x256xbf16>
    %cst_64 = arith.constant 0.000000e+00 : bf16
    %100 = vector.broadcast %cst_64 : bf16 to vector<16x256xbf16>
    %101 = vector.shape_cast %22 : vector<1x256xi1> to vector<1x256xi1>
    %102 = vector.broadcast %101 : vector<1x256xi1> to vector<16x256xi1>
    %103 = arith.select %102, %99, %100 : vector<16x256xi1>, vector<16x256xbf16>
    %c0_65 = arith.constant 0 : index
    %c0_66 = arith.constant 0 : index
    %104 = vector.load %arg15[%c0_65, %c0_66] : memref<144x256xbf16, #tpu.memory_space<vmem>>, vector<16x256xbf16>
    tpu.vector_store %arg15[%c0_65, %c0_66], %103 {strides = array<i32>} : memref<144x256xbf16, #tpu.memory_space<vmem>>, vector<16x256xbf16>,
    %c0_67 = arith.constant 0 : index
    %c112_68 = arith.constant 112 : index
    %105 = vector.load %arg14[%c0_67, %c112_68] : memref<16x512xbf16, #tpu.memory_space<vmem>>, vector<16x256xbf16>
    %c16_69 = arith.constant 16 : index
    %c0_70 = arith.constant 0 : index
    %106 = vector.load %arg15[%c16_69, %c0_70] : memref<144x256xbf16, #tpu.memory_space<vmem>>, vector<16x256xbf16>
    tpu.vector_store %arg15[%c16_69, %c0_70], %105 {strides = array<i32>} : memref<144x256xbf16, #tpu.memory_space<vmem>>, vector<16x256xbf16>,
    %c0_71 = arith.constant 0 : index
    %c113_72 = arith.constant 113 : index
    %107 = vector.load %arg14[%c0_71, %c113_72] : memref<16x512xbf16, #tpu.memory_space<vmem>>, vector<16x256xbf16>
    %cst_73 = arith.constant 0.000000e+00 : bf16
    %108 = vector.broadcast %cst_73 : bf16 to vector<16x256xbf16>
    %109 = vector.shape_cast %24 : vector<1x256xi1> to vector<1x256xi1>
    %110 = vector.broadcast %109 : vector<1x256xi1> to vector<16x256xi1>
    %111 = arith.select %110, %107, %108 : vector<16x256xi1>, vector<16x256xbf16>
    %c32_74 = arith.constant 32 : index
    %c0_75 = arith.constant 0 : index
    %112 = vector.load %arg15[%c32_74, %c0_75] : memref<144x256xbf16, #tpu.memory_space<vmem>>, vector<16x256xbf16>
    tpu.vector_store %arg15[%c32_74, %c0_75], %111 {strides = array<i32>} : memref<144x256xbf16, #tpu.memory_space<vmem>>, vector<16x256xbf16>,
    %c0_76 = arith.constant 0 : index
    %c127_77 = arith.constant 127 : index
    %113 = vector.load %arg14[%c0_76, %c127_77] : memref<16x512xbf16, #tpu.memory_space<vmem>>, vector<16x256xbf16>
    %cst_78 = arith.constant 0.000000e+00 : bf16
    %114 = vector.broadcast %cst_78 : bf16 to vector<16x256xbf16>
    %115 = vector.shape_cast %22 : vector<1x256xi1> to vector<1x256xi1>
    %116 = vector.broadcast %115 : vector<1x256xi1> to vector<16x256xi1>
    %117 = arith.select %116, %113, %114 : vector<16x256xi1>, vector<16x256xbf16>
    %c48_79 = arith.constant 48 : index
    %c0_80 = arith.constant 0 : index
    %118 = vector.load %arg15[%c48_79, %c0_80] : memref<144x256xbf16, #tpu.memory_space<vmem>>, vector<16x256xbf16>
    tpu.vector_store %arg15[%c48_79, %c0_80], %117 {strides = array<i32>} : memref<144x256xbf16, #tpu.memory_space<vmem>>, vector<16x256xbf16>,
    %c0_81 = arith.constant 0 : index
    %c128_82 = arith.constant 128 : index
    %119 = vector.load %arg14[%c0_81, %c128_82] : memref<16x512xbf16, #tpu.memory_space<vmem>>, vector<16x256xbf16>
    %c64_83 = arith.constant 64 : index
    %c0_84 = arith.constant 0 : index
    %120 = vector.load %arg15[%c64_83, %c0_84] : memref<144x256xbf16, #tpu.memory_space<vmem>>, vector<16x256xbf16>
    tpu.vector_store %arg15[%c64_83, %c0_84], %119 {strides = array<i32>} : memref<144x256xbf16, #tpu.memory_space<vmem>>, vector<16x256xbf16>,
    %c0_85 = arith.constant 0 : index
    %c129_86 = arith.constant 129 : index
    %121 = vector.load %arg14[%c0_85, %c129_86] : memref<16x512xbf16, #tpu.memory_space<vmem>>, vector<16x256xbf16>
    %cst_87 = arith.constant 0.000000e+00 : bf16
    %122 = vector.broadcast %cst_87 : bf16 to vector<16x256xbf16>
    %123 = vector.shape_cast %24 : vector<1x256xi1> to vector<1x256xi1>
    %124 = vector.broadcast %123 : vector<1x256xi1> to vector<16x256xi1>
    %125 = arith.select %124, %121, %122 : vector<16x256xi1>, vector<16x256xbf16>
    %c80_88 = arith.constant 80 : index
    %c0_89 = arith.constant 0 : index
    %126 = vector.load %arg15[%c80_88, %c0_89] : memref<144x256xbf16, #tpu.memory_space<vmem>>, vector<16x256xbf16>
    tpu.vector_store %arg15[%c80_88, %c0_89], %125 {strides = array<i32>} : memref<144x256xbf16, #tpu.memory_space<vmem>>, vector<16x256xbf16>,
    %c0_90 = arith.constant 0 : index
    %c143_91 = arith.constant 143 : index
    %127 = vector.load %arg14[%c0_90, %c143_91] : memref<16x512xbf16, #tpu.memory_space<vmem>>, vector<16x256xbf16>
    %cst_92 = arith.constant 0.000000e+00 : bf16
    %128 = vector.broadcast %cst_92 : bf16 to vector<16x256xbf16>
    %129 = vector.shape_cast %22 : vector<1x256xi1> to vector<1x256xi1>
    %130 = vector.broadcast %129 : vector<1x256xi1> to vector<16x256xi1>
    %131 = arith.select %130, %127, %128 : vector<16x256xi1>, vector<16x256xbf16>
    %c96_93 = arith.constant 96 : index
    %c0_94 = arith.constant 0 : index
    %132 = vector.load %arg15[%c96_93, %c0_94] : memref<144x256xbf16, #tpu.memory_space<vmem>>, vector<16x256xbf16>
    tpu.vector_store %arg15[%c96_93, %c0_94], %131 {strides = array<i32>} : memref<144x256xbf16, #tpu.memory_space<vmem>>, vector<16x256xbf16>,
    %c0_95 = arith.constant 0 : index
    %c144_96 = arith.constant 144 : index
    %133 = vector.load %arg14[%c0_95, %c144_96] : memref<16x512xbf16, #tpu.memory_space<vmem>>, vector<16x256xbf16>
    %c112_97 = arith.constant 112 : index
    %c0_98 = arith.constant 0 : index
    %134 = vector.load %arg15[%c112_97, %c0_98] : memref<144x256xbf16, #tpu.memory_space<vmem>>, vector<16x256xbf16>
    tpu.vector_store %arg15[%c112_97, %c0_98], %133 {strides = array<i32>} : memref<144x256xbf16, #tpu.memory_space<vmem>>, vector<16x256xbf16>,
    %c0_99 = arith.constant 0 : index
    %c145_100 = arith.constant 145 : index
    %135 = vector.load %arg14[%c0_99, %c145_100] : memref<16x512xbf16, #tpu.memory_space<vmem>>, vector<16x256xbf16>
    %cst_101 = arith.constant 0.000000e+00 : bf16
    %136 = vector.broadcast %cst_101 : bf16 to vector<16x256xbf16>
    %137 = vector.shape_cast %24 : vector<1x256xi1> to vector<1x256xi1>
    %138 = vector.broadcast %137 : vector<1x256xi1> to vector<16x256xi1>
    %139 = arith.select %138, %135, %136 : vector<16x256xi1>, vector<16x256xbf16>
    %c128_102 = arith.constant 128 : index
    %c0_103 = arith.constant 0 : index
    %140 = vector.load %arg15[%c128_102, %c0_103] : memref<144x256xbf16, #tpu.memory_space<vmem>>, vector<16x256xbf16>
    tpu.vector_store %arg15[%c128_102, %c0_103], %139 {strides = array<i32>} : memref<144x256xbf16, #tpu.memory_space<vmem>>, vector<16x256xbf16>,
    %c0_104 = arith.constant 0 : index
    %c0_105 = arith.constant 0 : index
    %141 = vector.load %arg15[%c0_104, %c0_105] : memref<144x256xbf16, #tpu.memory_space<vmem>>, vector<144x256xbf16>
    %cst_106 = arith.constant dense<0.000000e+00> : vector<16x256xf32>
    %142 = tpu.matmul %94, %141, %cst_106 {dimension_numbers = #tpu.dot_dimension_numbers<[1], [0], [0], [1], [0, 0, 1, 1], [], []>} : vector<16x144xbf16>, vector<144x256xbf16>, vector<16x256xf32> -> vector<16x256xf32>
    %143 = vector.broadcast %96 : vector<16x1xf32> to vector<16x256xf32>
    %144 = arith.addf %142, %143 : vector<16x256xf32>
    %cst_107 = arith.constant 0.000000e+00 : f32
    %145 = vector.broadcast %cst_107 : f32 to vector<16x256xf32>
    %146 = arith.maximumf %144, %145 : vector<16x256xf32>
    %c1 = arith.constant 1 : index
    %c0_108 = arith.constant 0 : index
    %c0_109 = arith.constant 0 : index
    %147 = vector.load %arg5[%c1, %c0_108, %c0_109] : memref<6x16x144xbf16, #tpu.memory_space<vmem>>, vector<1x16x144xbf16>
    %148 = vector.shape_cast %147 : vector<1x16x144xbf16> to vector<16x144xbf16>
    %c1_110 = arith.constant 1 : index
    %c0_111 = arith.constant 0 : index
    %c0_112 = arith.constant 0 : index
    %149 = vector.load %arg6[%c1_110, %c0_111, %c0_112] : memref<6x16x1xf32, #tpu.memory_space<vmem>>, vector<1x16x1xf32>
    %150 = vector.shape_cast %149 : vector<1x16x1xf32> to vector<16x1xf32>
    %151 = arith.truncf %146 : vector<16x256xf32> to vector<16x256xbf16>
    %c0_113 = arith.constant 0 : index
    %c128_114 = arith.constant 128 : index
    %152 = vector.load %arg14[%c0_113, %c128_114] : memref<16x512xbf16, #tpu.memory_space<vmem>>, vector<16x256xbf16>
    tpu.vector_store %arg14[%c0_113, %c128_114], %151 {strides = array<i32>} : memref<16x512xbf16, #tpu.memory_space<vmem>>, vector<16x256xbf16>,
    %c0_115 = arith.constant 0 : index
    %c111_116 = arith.constant 111 : index
    %153 = vector.load %arg14[%c0_115, %c111_116] : memref<16x512xbf16, #tpu.memory_space<vmem>>, vector<16x256xbf16>
    %cst_117 = arith.constant 0.000000e+00 : bf16
    %154 = vector.broadcast %cst_117 : bf16 to vector<16x256xbf16>
    %155 = vector.shape_cast %22 : vector<1x256xi1> to vector<1x256xi1>
    %156 = vector.broadcast %155 : vector<1x256xi1> to vector<16x256xi1>
    %157 = arith.select %156, %153, %154 : vector<16x256xi1>, vector<16x256xbf16>
    %c0_118 = arith.constant 0 : index
    %c0_119 = arith.constant 0 : index
    %158 = vector.load %arg15[%c0_118, %c0_119] : memref<144x256xbf16, #tpu.memory_space<vmem>>, vector<16x256xbf16>
    tpu.vector_store %arg15[%c0_118, %c0_119], %157 {strides = array<i32>} : memref<144x256xbf16, #tpu.memory_space<vmem>>, vector<16x256xbf16>,
    %c0_120 = arith.constant 0 : index
    %c112_121 = arith.constant 112 : index
    %159 = vector.load %arg14[%c0_120, %c112_121] : memref<16x512xbf16, #tpu.memory_space<vmem>>, vector<16x256xbf16>
    %c16_122 = arith.constant 16 : index
    %c0_123 = arith.constant 0 : index
    %160 = vector.load %arg15[%c16_122, %c0_123] : memref<144x256xbf16, #tpu.memory_space<vmem>>, vector<16x256xbf16>
    tpu.vector_store %arg15[%c16_122, %c0_123], %159 {strides = array<i32>} : memref<144x256xbf16, #tpu.memory_space<vmem>>, vector<16x256xbf16>,
    %c0_124 = arith.constant 0 : index
    %c113_125 = arith.constant 113 : index
    %161 = vector.load %arg14[%c0_124, %c113_125] : memref<16x512xbf16, #tpu.memory_space<vmem>>, vector<16x256xbf16>
    %cst_126 = arith.constant 0.000000e+00 : bf16
    %162 = vector.broadcast %cst_126 : bf16 to vector<16x256xbf16>
    %163 = vector.shape_cast %24 : vector<1x256xi1> to vector<1x256xi1>
    %164 = vector.broadcast %163 : vector<1x256xi1> to vector<16x256xi1>
    %165 = arith.select %164, %161, %162 : vector<16x256xi1>, vector<16x256xbf16>
    %c32_127 = arith.constant 32 : index
    %c0_128 = arith.constant 0 : index
    %166 = vector.load %arg15[%c32_127, %c0_128] : memref<144x256xbf16, #tpu.memory_space<vmem>>, vector<16x256xbf16>
    tpu.vector_store %arg15[%c32_127, %c0_128], %165 {strides = array<i32>} : memref<144x256xbf16, #tpu.memory_space<vmem>>, vector<16x256xbf16>,
    %c0_129 = arith.constant 0 : index
    %c127_130 = arith.constant 127 : index
    %167 = vector.load %arg14[%c0_129, %c127_130] : memref<16x512xbf16, #tpu.memory_space<vmem>>, vector<16x256xbf16>
    %cst_131 = arith.constant 0.000000e+00 : bf16
    %168 = vector.broadcast %cst_131 : bf16 to vector<16x256xbf16>
    %169 = vector.shape_cast %22 : vector<1x256xi1> to vector<1x256xi1>
    %170 = vector.broadcast %169 : vector<1x256xi1> to vector<16x256xi1>
    %171 = arith.select %170, %167, %168 : vector<16x256xi1>, vector<16x256xbf16>
    %c48_132 = arith.constant 48 : index
    %c0_133 = arith.constant 0 : index
    %172 = vector.load %arg15[%c48_132, %c0_133] : memref<144x256xbf16, #tpu.memory_space<vmem>>, vector<16x256xbf16>
    tpu.vector_store %arg15[%c48_132, %c0_133], %171 {strides = array<i32>} : memref<144x256xbf16, #tpu.memory_space<vmem>>, vector<16x256xbf16>,
    %c0_134 = arith.constant 0 : index
    %c128_135 = arith.constant 128 : index
    %173 = vector.load %arg14[%c0_134, %c128_135] : memref<16x512xbf16, #tpu.memory_space<vmem>>, vector<16x256xbf16>
    %c64_136 = arith.constant 64 : index
    %c0_137 = arith.constant 0 : index
    %174 = vector.load %arg15[%c64_136, %c0_137] : memref<144x256xbf16, #tpu.memory_space<vmem>>, vector<16x256xbf16>
    tpu.vector_store %arg15[%c64_136, %c0_137], %173 {strides = array<i32>} : memref<144x256xbf16, #tpu.memory_space<vmem>>, vector<16x256xbf16>,
    %c0_138 = arith.constant 0 : index
    %c129_139 = arith.constant 129 : index
    %175 = vector.load %arg14[%c0_138, %c129_139] : memref<16x512xbf16, #tpu.memory_space<vmem>>, vector<16x256xbf16>
    %cst_140 = arith.constant 0.000000e+00 : bf16
    %176 = vector.broadcast %cst_140 : bf16 to vector<16x256xbf16>
    %177 = vector.shape_cast %24 : vector<1x256xi1> to vector<1x256xi1>
    %178 = vector.broadcast %177 : vector<1x256xi1> to vector<16x256xi1>
    %179 = arith.select %178, %175, %176 : vector<16x256xi1>, vector<16x256xbf16>
    %c80_141 = arith.constant 80 : index
    %c0_142 = arith.constant 0 : index
    %180 = vector.load %arg15[%c80_141, %c0_142] : memref<144x256xbf16, #tpu.memory_space<vmem>>, vector<16x256xbf16>
    tpu.vector_store %arg15[%c80_141, %c0_142], %179 {strides = array<i32>} : memref<144x256xbf16, #tpu.memory_space<vmem>>, vector<16x256xbf16>,
    %c0_143 = arith.constant 0 : index
    %c143_144 = arith.constant 143 : index
    %181 = vector.load %arg14[%c0_143, %c143_144] : memref<16x512xbf16, #tpu.memory_space<vmem>>, vector<16x256xbf16>
    %cst_145 = arith.constant 0.000000e+00 : bf16
    %182 = vector.broadcast %cst_145 : bf16 to vector<16x256xbf16>
    %183 = vector.shape_cast %22 : vector<1x256xi1> to vector<1x256xi1>
    %184 = vector.broadcast %183 : vector<1x256xi1> to vector<16x256xi1>
    %185 = arith.select %184, %181, %182 : vector<16x256xi1>, vector<16x256xbf16>
    %c96_146 = arith.constant 96 : index
    %c0_147 = arith.constant 0 : index
    %186 = vector.load %arg15[%c96_146, %c0_147] : memref<144x256xbf16, #tpu.memory_space<vmem>>, vector<16x256xbf16>
    tpu.vector_store %arg15[%c96_146, %c0_147], %185 {strides = array<i32>} : memref<144x256xbf16, #tpu.memory_space<vmem>>, vector<16x256xbf16>,
    %c0_148 = arith.constant 0 : index
    %c144_149 = arith.constant 144 : index
    %187 = vector.load %arg14[%c0_148, %c144_149] : memref<16x512xbf16, #tpu.memory_space<vmem>>, vector<16x256xbf16>
    %c112_150 = arith.constant 112 : index
    %c0_151 = arith.constant 0 : index
    %188 = vector.load %arg15[%c112_150, %c0_151] : memref<144x256xbf16, #tpu.memory_space<vmem>>, vector<16x256xbf16>
    tpu.vector_store %arg15[%c112_150, %c0_151], %187 {strides = array<i32>} : memref<144x256xbf16, #tpu.memory_space<vmem>>, vector<16x256xbf16>,
    %c0_152 = arith.constant 0 : index
    %c145_153 = arith.constant 145 : index
    %189 = vector.load %arg14[%c0_152, %c145_153] : memref<16x512xbf16, #tpu.memory_space<vmem>>, vector<16x256xbf16>
    %cst_154 = arith.constant 0.000000e+00 : bf16
    %190 = vector.broadcast %cst_154 : bf16 to vector<16x256xbf16>
    %191 = vector.shape_cast %24 : vector<1x256xi1> to vector<1x256xi1>
    %192 = vector.broadcast %191 : vector<1x256xi1> to vector<16x256xi1>
    %193 = arith.select %192, %189, %190 : vector<16x256xi1>, vector<16x256xbf16>
    %c128_155 = arith.constant 128 : index
    %c0_156 = arith.constant 0 : index
    %194 = vector.load %arg15[%c128_155, %c0_156] : memref<144x256xbf16, #tpu.memory_space<vmem>>, vector<16x256xbf16>
    tpu.vector_store %arg15[%c128_155, %c0_156], %193 {strides = array<i32>} : memref<144x256xbf16, #tpu.memory_space<vmem>>, vector<16x256xbf16>,
    %c0_157 = arith.constant 0 : index
    %c0_158 = arith.constant 0 : index
    %195 = vector.load %arg15[%c0_157, %c0_158] : memref<144x256xbf16, #tpu.memory_space<vmem>>, vector<144x256xbf16>
    %cst_159 = arith.constant dense<0.000000e+00> : vector<16x256xf32>
    %196 = tpu.matmul %148, %195, %cst_159 {dimension_numbers = #tpu.dot_dimension_numbers<[1], [0], [0], [1], [0, 0, 1, 1], [], []>} : vector<16x144xbf16>, vector<144x256xbf16>, vector<16x256xf32> -> vector<16x256xf32>
    %197 = vector.broadcast %150 : vector<16x1xf32> to vector<16x256xf32>
    %198 = arith.addf %196, %197 : vector<16x256xf32>
    %cst_160 = arith.constant dense<0.000000e+00> : vector<16xf32>
    %199 = vector.multi_reduction <add>, %198, %cst_160 [1] : vector<16x256xf32> to vector<16xf32>
    %200 = vector.shape_cast %199 : vector<16xf32> to vector<16x1xf32>
    %cst_161 = arith.constant 2.560000e+02 : f32
    %201 = vector.broadcast %cst_161 : f32 to vector<16x1xf32>
    %202 = arith.divf %200, %201 : vector<16x1xf32>
    %c0_162 = arith.constant 0 : index
    %c0_163 = arith.constant 0 : index
    %c0_164 = arith.constant 0 : index
    %203 = vector.load %arg7[%c0_162, %c0_163, %c0_164] : memref<3x16x4xf32, #tpu.memory_space<vmem>>, vector<1x16x4xf32>
    %204 = vector.shape_cast %203 : vector<1x16x4xf32> to vector<16x4xf32>
    %205 = vector.broadcast %202 : vector<16x1xf32> to vector<16x4xf32>
    %206 = arith.mulf %204, %205 : vector<16x4xf32>
    %cst_165 = arith.constant dense<0.000000e+00> : vector<4xf32>
    %207 = vector.multi_reduction <add>, %206, %cst_165 [0] : vector<16x4xf32> to vector<4xf32>
    %208 = vector.shape_cast %207 : vector<4xf32> to vector<1x4xf32>
    %c0_166 = arith.constant 0 : index
    %c0_167 = arith.constant 0 : index
    %c0_168 = arith.constant 0 : index
    %209 = vector.load %arg8[%c0_166, %c0_167, %c0_168] : memref<3x1x4xf32, #tpu.memory_space<vmem>>, vector<1x1x4xf32>
    %210 = vector.shape_cast %209 : vector<1x1x4xf32> to vector<1x4xf32>
    %211 = arith.addf %208, %210 : vector<1x4xf32>
    %cst_169 = arith.constant 0.000000e+00 : f32
    %212 = vector.broadcast %cst_169 : f32 to vector<1x4xf32>
    %213 = arith.maximumf %211, %212 : vector<1x4xf32>
    %c0_170 = arith.constant 0 : index
    %c0_171 = arith.constant 0 : index
    %c0_172 = arith.constant 0 : index
    %214 = vector.load %arg9[%c0_170, %c0_171, %c0_172] : memref<3x16x4xf32, #tpu.memory_space<vmem>>, vector<1x16x4xf32>
    %215 = vector.shape_cast %214 : vector<1x16x4xf32> to vector<16x4xf32>
    %216 = vector.broadcast %213 : vector<1x4xf32> to vector<16x4xf32>
    %217 = arith.mulf %215, %216 : vector<16x4xf32>
    %cst_173 = arith.constant dense<0.000000e+00> : vector<16xf32>
    %218 = vector.multi_reduction <add>, %217, %cst_173 [1] : vector<16x4xf32> to vector<16xf32>
    %219 = vector.shape_cast %218 : vector<16xf32> to vector<16x1xf32>
    %c0_174 = arith.constant 0 : index
    %c0_175 = arith.constant 0 : index
    %c0_176 = arith.constant 0 : index
    %220 = vector.load %arg10[%c0_174, %c0_175, %c0_176] : memref<3x16x1xf32, #tpu.memory_space<vmem>>, vector<1x16x1xf32>
    %221 = vector.shape_cast %220 : vector<1x16x1xf32> to vector<16x1xf32>
    %222 = arith.addf %219, %221 : vector<16x1xf32>
    %223 = arith.negf %222 : vector<16x1xf32>
    %224 = math.exp %223 : vector<16x1xf32>
    %cst_177 = arith.constant 1.000000e+00 : f32
    %225 = vector.broadcast %cst_177 : f32 to vector<16x1xf32>
    %226 = arith.addf %225, %224 : vector<16x1xf32>
    %227 = arith.divf %225, %226 : vector<16x1xf32>
    %228 = vector.broadcast %227 : vector<16x1xf32> to vector<16x256xf32>
    %229 = arith.mulf %198, %228 : vector<16x256xf32>
    %230 = arith.addf %229, %92 : vector<16x256xf32>
    %c2 = arith.constant 2 : index
    %c0_178 = arith.constant 0 : index
    %c0_179 = arith.constant 0 : index
    %231 = vector.load %arg5[%c2, %c0_178, %c0_179] : memref<6x16x144xbf16, #tpu.memory_space<vmem>>, vector<1x16x144xbf16>
    %232 = vector.shape_cast %231 : vector<1x16x144xbf16> to vector<16x144xbf16>
    %c2_180 = arith.constant 2 : index
    %c0_181 = arith.constant 0 : index
    %c0_182 = arith.constant 0 : index
    %233 = vector.load %arg6[%c2_180, %c0_181, %c0_182] : memref<6x16x1xf32, #tpu.memory_space<vmem>>, vector<1x16x1xf32>
    %234 = vector.shape_cast %233 : vector<1x16x1xf32> to vector<16x1xf32>
    %235 = arith.truncf %230 : vector<16x256xf32> to vector<16x256xbf16>
    %c0_183 = arith.constant 0 : index
    %c128_184 = arith.constant 128 : index
    %236 = vector.load %arg14[%c0_183, %c128_184] : memref<16x512xbf16, #tpu.memory_space<vmem>>, vector<16x256xbf16>
    tpu.vector_store %arg14[%c0_183, %c128_184], %235 {strides = array<i32>} : memref<16x512xbf16, #tpu.memory_space<vmem>>, vector<16x256xbf16>,
    %c0_185 = arith.constant 0 : index
    %c111_186 = arith.constant 111 : index
    %237 = vector.load %arg14[%c0_185, %c111_186] : memref<16x512xbf16, #tpu.memory_space<vmem>>, vector<16x256xbf16>
    %cst_187 = arith.constant 0.000000e+00 : bf16
    %238 = vector.broadcast %cst_187 : bf16 to vector<16x256xbf16>
    %239 = vector.shape_cast %22 : vector<1x256xi1> to vector<1x256xi1>
    %240 = vector.broadcast %239 : vector<1x256xi1> to vector<16x256xi1>
    %241 = arith.select %240, %237, %238 : vector<16x256xi1>, vector<16x256xbf16>
    %c0_188 = arith.constant 0 : index
    %c0_189 = arith.constant 0 : index
    %242 = vector.load %arg15[%c0_188, %c0_189] : memref<144x256xbf16, #tpu.memory_space<vmem>>, vector<16x256xbf16>
    tpu.vector_store %arg15[%c0_188, %c0_189], %241 {strides = array<i32>} : memref<144x256xbf16, #tpu.memory_space<vmem>>, vector<16x256xbf16>,
    %c0_190 = arith.constant 0 : index
    %c112_191 = arith.constant 112 : index
    %243 = vector.load %arg14[%c0_190, %c112_191] : memref<16x512xbf16, #tpu.memory_space<vmem>>, vector<16x256xbf16>
    %c16_192 = arith.constant 16 : index
    %c0_193 = arith.constant 0 : index
    %244 = vector.load %arg15[%c16_192, %c0_193] : memref<144x256xbf16, #tpu.memory_space<vmem>>, vector<16x256xbf16>
    tpu.vector_store %arg15[%c16_192, %c0_193], %243 {strides = array<i32>} : memref<144x256xbf16, #tpu.memory_space<vmem>>, vector<16x256xbf16>,
    %c0_194 = arith.constant 0 : index
    %c113_195 = arith.constant 113 : index
    %245 = vector.load %arg14[%c0_194, %c113_195] : memref<16x512xbf16, #tpu.memory_space<vmem>>, vector<16x256xbf16>
    %cst_196 = arith.constant 0.000000e+00 : bf16
    %246 = vector.broadcast %cst_196 : bf16 to vector<16x256xbf16>
    %247 = vector.shape_cast %24 : vector<1x256xi1> to vector<1x256xi1>
    %248 = vector.broadcast %247 : vector<1x256xi1> to vector<16x256xi1>
    %249 = arith.select %248, %245, %246 : vector<16x256xi1>, vector<16x256xbf16>
    %c32_197 = arith.constant 32 : index
    %c0_198 = arith.constant 0 : index
    %250 = vector.load %arg15[%c32_197, %c0_198] : memref<144x256xbf16, #tpu.memory_space<vmem>>, vector<16x256xbf16>
    tpu.vector_store %arg15[%c32_197, %c0_198], %249 {strides = array<i32>} : memref<144x256xbf16, #tpu.memory_space<vmem>>, vector<16x256xbf16>,
    %c0_199 = arith.constant 0 : index
    %c127_200 = arith.constant 127 : index
    %251 = vector.load %arg14[%c0_199, %c127_200] : memref<16x512xbf16, #tpu.memory_space<vmem>>, vector<16x256xbf16>
    %cst_201 = arith.constant 0.000000e+00 : bf16
    %252 = vector.broadcast %cst_201 : bf16 to vector<16x256xbf16>
    %253 = vector.shape_cast %22 : vector<1x256xi1> to vector<1x256xi1>
    %254 = vector.broadcast %253 : vector<1x256xi1> to vector<16x256xi1>
    %255 = arith.select %254, %251, %252 : vector<16x256xi1>, vector<16x256xbf16>
    %c48_202 = arith.constant 48 : index
    %c0_203 = arith.constant 0 : index
    %256 = vector.load %arg15[%c48_202, %c0_203] : memref<144x256xbf16, #tpu.memory_space<vmem>>, vector<16x256xbf16>
    tpu.vector_store %arg15[%c48_202, %c0_203], %255 {strides = array<i32>} : memref<144x256xbf16, #tpu.memory_space<vmem>>, vector<16x256xbf16>,
    %c0_204 = arith.constant 0 : index
    %c128_205 = arith.constant 128 : index
    %257 = vector.load %arg14[%c0_204, %c128_205] : memref<16x512xbf16, #tpu.memory_space<vmem>>, vector<16x256xbf16>
    %c64_206 = arith.constant 64 : index
    %c0_207 = arith.constant 0 : index
    %258 = vector.load %arg15[%c64_206, %c0_207] : memref<144x256xbf16, #tpu.memory_space<vmem>>, vector<16x256xbf16>
    tpu.vector_store %arg15[%c64_206, %c0_207], %257 {strides = array<i32>} : memref<144x256xbf16, #tpu.memory_space<vmem>>, vector<16x256xbf16>,
    %c0_208 = arith.constant 0 : index
    %c129_209 = arith.constant 129 : index
    %259 = vector.load %arg14[%c0_208, %c129_209] : memref<16x512xbf16, #tpu.memory_space<vmem>>, vector<16x256xbf16>
    %cst_210 = arith.constant 0.000000e+00 : bf16
    %260 = vector.broadcast %cst_210 : bf16 to vector<16x256xbf16>
    %261 = vector.shape_cast %24 : vector<1x256xi1> to vector<1x256xi1>
    %262 = vector.broadcast %261 : vector<1x256xi1> to vector<16x256xi1>
    %263 = arith.select %262, %259, %260 : vector<16x256xi1>, vector<16x256xbf16>
    %c80_211 = arith.constant 80 : index
    %c0_212 = arith.constant 0 : index
    %264 = vector.load %arg15[%c80_211, %c0_212] : memref<144x256xbf16, #tpu.memory_space<vmem>>, vector<16x256xbf16>
    tpu.vector_store %arg15[%c80_211, %c0_212], %263 {strides = array<i32>} : memref<144x256xbf16, #tpu.memory_space<vmem>>, vector<16x256xbf16>,
    %c0_213 = arith.constant 0 : index
    %c143_214 = arith.constant 143 : index
    %265 = vector.load %arg14[%c0_213, %c143_214] : memref<16x512xbf16, #tpu.memory_space<vmem>>, vector<16x256xbf16>
    %cst_215 = arith.constant 0.000000e+00 : bf16
    %266 = vector.broadcast %cst_215 : bf16 to vector<16x256xbf16>
    %267 = vector.shape_cast %22 : vector<1x256xi1> to vector<1x256xi1>
    %268 = vector.broadcast %267 : vector<1x256xi1> to vector<16x256xi1>
    %269 = arith.select %268, %265, %266 : vector<16x256xi1>, vector<16x256xbf16>
    %c96_216 = arith.constant 96 : index
    %c0_217 = arith.constant 0 : index
    %270 = vector.load %arg15[%c96_216, %c0_217] : memref<144x256xbf16, #tpu.memory_space<vmem>>, vector<16x256xbf16>
    tpu.vector_store %arg15[%c96_216, %c0_217], %269 {strides = array<i32>} : memref<144x256xbf16, #tpu.memory_space<vmem>>, vector<16x256xbf16>,
    %c0_218 = arith.constant 0 : index
    %c144_219 = arith.constant 144 : index
    %271 = vector.load %arg14[%c0_218, %c144_219] : memref<16x512xbf16, #tpu.memory_space<vmem>>, vector<16x256xbf16>
    %c112_220 = arith.constant 112 : index
    %c0_221 = arith.constant 0 : index
    %272 = vector.load %arg15[%c112_220, %c0_221] : memref<144x256xbf16, #tpu.memory_space<vmem>>, vector<16x256xbf16>
    tpu.vector_store %arg15[%c112_220, %c0_221], %271 {strides = array<i32>} : memref<144x256xbf16, #tpu.memory_space<vmem>>, vector<16x256xbf16>,
    %c0_222 = arith.constant 0 : index
    %c145_223 = arith.constant 145 : index
    %273 = vector.load %arg14[%c0_222, %c145_223] : memref<16x512xbf16, #tpu.memory_space<vmem>>, vector<16x256xbf16>
    %cst_224 = arith.constant 0.000000e+00 : bf16
    %274 = vector.broadcast %cst_224 : bf16 to vector<16x256xbf16>
    %275 = vector.shape_cast %24 : vector<1x256xi1> to vector<1x256xi1>
    %276 = vector.broadcast %275 : vector<1x256xi1> to vector<16x256xi1>
    %277 = arith.select %276, %273, %274 : vector<16x256xi1>, vector<16x256xbf16>
    %c128_225 = arith.constant 128 : index
    %c0_226 = arith.constant 0 : index
    %278 = vector.load %arg15[%c128_225, %c0_226] : memref<144x256xbf16, #tpu.memory_space<vmem>>, vector<16x256xbf16>
    tpu.vector_store %arg15[%c128_225, %c0_226], %277 {strides = array<i32>} : memref<144x256xbf16, #tpu.memory_space<vmem>>, vector<16x256xbf16>,
    %c0_227 = arith.constant 0 : index
    %c0_228 = arith.constant 0 : index
    %279 = vector.load %arg15[%c0_227, %c0_228] : memref<144x256xbf16, #tpu.memory_space<vmem>>, vector<144x256xbf16>
    %cst_229 = arith.constant dense<0.000000e+00> : vector<16x256xf32>
    %280 = tpu.matmul %232, %279, %cst_229 {dimension_numbers = #tpu.dot_dimension_numbers<[1], [0], [0], [1], [0, 0, 1, 1], [], []>} : vector<16x144xbf16>, vector<144x256xbf16>, vector<16x256xf32> -> vector<16x256xf32>
    %281 = vector.broadcast %234 : vector<16x1xf32> to vector<16x256xf32>
    %282 = arith.addf %280, %281 : vector<16x256xf32>
    %cst_230 = arith.constant 0.000000e+00 : f32
    %283 = vector.broadcast %cst_230 : f32 to vector<16x256xf32>
    %284 = arith.maximumf %282, %283 : vector<16x256xf32>
    %c3 = arith.constant 3 : index
    %c0_231 = arith.constant 0 : index
    %c0_232 = arith.constant 0 : index
    %285 = vector.load %arg5[%c3, %c0_231, %c0_232] : memref<6x16x144xbf16, #tpu.memory_space<vmem>>, vector<1x16x144xbf16>
    %286 = vector.shape_cast %285 : vector<1x16x144xbf16> to vector<16x144xbf16>
    %c3_233 = arith.constant 3 : index
    %c0_234 = arith.constant 0 : index
    %c0_235 = arith.constant 0 : index
    %287 = vector.load %arg6[%c3_233, %c0_234, %c0_235] : memref<6x16x1xf32, #tpu.memory_space<vmem>>, vector<1x16x1xf32>
    %288 = vector.shape_cast %287 : vector<1x16x1xf32> to vector<16x1xf32>
    %289 = arith.truncf %284 : vector<16x256xf32> to vector<16x256xbf16>
    %c0_236 = arith.constant 0 : index
    %c128_237 = arith.constant 128 : index
    %290 = vector.load %arg14[%c0_236, %c128_237] : memref<16x512xbf16, #tpu.memory_space<vmem>>, vector<16x256xbf16>
    tpu.vector_store %arg14[%c0_236, %c128_237], %289 {strides = array<i32>} : memref<16x512xbf16, #tpu.memory_space<vmem>>, vector<16x256xbf16>,
    %c0_238 = arith.constant 0 : index
    %c111_239 = arith.constant 111 : index
    %291 = vector.load %arg14[%c0_238, %c111_239] : memref<16x512xbf16, #tpu.memory_space<vmem>>, vector<16x256xbf16>
    %cst_240 = arith.constant 0.000000e+00 : bf16
    %292 = vector.broadcast %cst_240 : bf16 to vector<16x256xbf16>
    %293 = vector.shape_cast %22 : vector<1x256xi1> to vector<1x256xi1>
    %294 = vector.broadcast %293 : vector<1x256xi1> to vector<16x256xi1>
    %295 = arith.select %294, %291, %292 : vector<16x256xi1>, vector<16x256xbf16>
    %c0_241 = arith.constant 0 : index
    %c0_242 = arith.constant 0 : index
    %296 = vector.load %arg15[%c0_241, %c0_242] : memref<144x256xbf16, #tpu.memory_space<vmem>>, vector<16x256xbf16>
    tpu.vector_store %arg15[%c0_241, %c0_242], %295 {strides = array<i32>} : memref<144x256xbf16, #tpu.memory_space<vmem>>, vector<16x256xbf16>,
    %c0_243 = arith.constant 0 : index
    %c112_244 = arith.constant 112 : index
    %297 = vector.load %arg14[%c0_243, %c112_244] : memref<16x512xbf16, #tpu.memory_space<vmem>>, vector<16x256xbf16>
    %c16_245 = arith.constant 16 : index
    %c0_246 = arith.constant 0 : index
    %298 = vector.load %arg15[%c16_245, %c0_246] : memref<144x256xbf16, #tpu.memory_space<vmem>>, vector<16x256xbf16>
    tpu.vector_store %arg15[%c16_245, %c0_246], %297 {strides = array<i32>} : memref<144x256xbf16, #tpu.memory_space<vmem>>, vector<16x256xbf16>,
    %c0_247 = arith.constant 0 : index
    %c113_248 = arith.constant 113 : index
    %299 = vector.load %arg14[%c0_247, %c113_248] : memref<16x512xbf16, #tpu.memory_space<vmem>>, vector<16x256xbf16>
    %cst_249 = arith.constant 0.000000e+00 : bf16
    %300 = vector.broadcast %cst_249 : bf16 to vector<16x256xbf16>
    %301 = vector.shape_cast %24 : vector<1x256xi1> to vector<1x256xi1>
    %302 = vector.broadcast %301 : vector<1x256xi1> to vector<16x256xi1>
    %303 = arith.select %302, %299, %300 : vector<16x256xi1>, vector<16x256xbf16>
    %c32_250 = arith.constant 32 : index
    %c0_251 = arith.constant 0 : index
    %304 = vector.load %arg15[%c32_250, %c0_251] : memref<144x256xbf16, #tpu.memory_space<vmem>>, vector<16x256xbf16>
    tpu.vector_store %arg15[%c32_250, %c0_251], %303 {strides = array<i32>} : memref<144x256xbf16, #tpu.memory_space<vmem>>, vector<16x256xbf16>,
    %c0_252 = arith.constant 0 : index
    %c127_253 = arith.constant 127 : index
    %305 = vector.load %arg14[%c0_252, %c127_253] : memref<16x512xbf16, #tpu.memory_space<vmem>>, vector<16x256xbf16>
    %cst_254 = arith.constant 0.000000e+00 : bf16
    %306 = vector.broadcast %cst_254 : bf16 to vector<16x256xbf16>
    %307 = vector.shape_cast %22 : vector<1x256xi1> to vector<1x256xi1>
    %308 = vector.broadcast %307 : vector<1x256xi1> to vector<16x256xi1>
    %309 = arith.select %308, %305, %306 : vector<16x256xi1>, vector<16x256xbf16>
    %c48_255 = arith.constant 48 : index
    %c0_256 = arith.constant 0 : index
    %310 = vector.load %arg15[%c48_255, %c0_256] : memref<144x256xbf16, #tpu.memory_space<vmem>>, vector<16x256xbf16>
    tpu.vector_store %arg15[%c48_255, %c0_256], %309 {strides = array<i32>} : memref<144x256xbf16, #tpu.memory_space<vmem>>, vector<16x256xbf16>,
    %c0_257 = arith.constant 0 : index
    %c128_258 = arith.constant 128 : index
    %311 = vector.load %arg14[%c0_257, %c128_258] : memref<16x512xbf16, #tpu.memory_space<vmem>>, vector<16x256xbf16>
    %c64_259 = arith.constant 64 : index
    %c0_260 = arith.constant 0 : index
    %312 = vector.load %arg15[%c64_259, %c0_260] : memref<144x256xbf16, #tpu.memory_space<vmem>>, vector<16x256xbf16>
    tpu.vector_store %arg15[%c64_259, %c0_260], %311 {strides = array<i32>} : memref<144x256xbf16, #tpu.memory_space<vmem>>, vector<16x256xbf16>,
    %c0_261 = arith.constant 0 : index
    %c129_262 = arith.constant 129 : index
    %313 = vector.load %arg14[%c0_261, %c129_262] : memref<16x512xbf16, #tpu.memory_space<vmem>>, vector<16x256xbf16>
    %cst_263 = arith.constant 0.000000e+00 : bf16
    %314 = vector.broadcast %cst_263 : bf16 to vector<16x256xbf16>
    %315 = vector.shape_cast %24 : vector<1x256xi1> to vector<1x256xi1>
    %316 = vector.broadcast %315 : vector<1x256xi1> to vector<16x256xi1>
    %317 = arith.select %316, %313, %314 : vector<16x256xi1>, vector<16x256xbf16>
    %c80_264 = arith.constant 80 : index
    %c0_265 = arith.constant 0 : index
    %318 = vector.load %arg15[%c80_264, %c0_265] : memref<144x256xbf16, #tpu.memory_space<vmem>>, vector<16x256xbf16>
    tpu.vector_store %arg15[%c80_264, %c0_265], %317 {strides = array<i32>} : memref<144x256xbf16, #tpu.memory_space<vmem>>, vector<16x256xbf16>,
    %c0_266 = arith.constant 0 : index
    %c143_267 = arith.constant 143 : index
    %319 = vector.load %arg14[%c0_266, %c143_267] : memref<16x512xbf16, #tpu.memory_space<vmem>>, vector<16x256xbf16>
    %cst_268 = arith.constant 0.000000e+00 : bf16
    %320 = vector.broadcast %cst_268 : bf16 to vector<16x256xbf16>
    %321 = vector.shape_cast %22 : vector<1x256xi1> to vector<1x256xi1>
    %322 = vector.broadcast %321 : vector<1x256xi1> to vector<16x256xi1>
    %323 = arith.select %322, %319, %320 : vector<16x256xi1>, vector<16x256xbf16>
    %c96_269 = arith.constant 96 : index
    %c0_270 = arith.constant 0 : index
    %324 = vector.load %arg15[%c96_269, %c0_270] : memref<144x256xbf16, #tpu.memory_space<vmem>>, vector<16x256xbf16>
    tpu.vector_store %arg15[%c96_269, %c0_270], %323 {strides = array<i32>} : memref<144x256xbf16, #tpu.memory_space<vmem>>, vector<16x256xbf16>,
    %c0_271 = arith.constant 0 : index
    %c144_272 = arith.constant 144 : index
    %325 = vector.load %arg14[%c0_271, %c144_272] : memref<16x512xbf16, #tpu.memory_space<vmem>>, vector<16x256xbf16>
    %c112_273 = arith.constant 112 : index
    %c0_274 = arith.constant 0 : index
    %326 = vector.load %arg15[%c112_273, %c0_274] : memref<144x256xbf16, #tpu.memory_space<vmem>>, vector<16x256xbf16>
    tpu.vector_store %arg15[%c112_273, %c0_274], %325 {strides = array<i32>} : memref<144x256xbf16, #tpu.memory_space<vmem>>, vector<16x256xbf16>,
    %c0_275 = arith.constant 0 : index
    %c145_276 = arith.constant 145 : index
    %327 = vector.load %arg14[%c0_275, %c145_276] : memref<16x512xbf16, #tpu.memory_space<vmem>>, vector<16x256xbf16>
    %cst_277 = arith.constant 0.000000e+00 : bf16
    %328 = vector.broadcast %cst_277 : bf16 to vector<16x256xbf16>
    %329 = vector.shape_cast %24 : vector<1x256xi1> to vector<1x256xi1>
    %330 = vector.broadcast %329 : vector<1x256xi1> to vector<16x256xi1>
    %331 = arith.select %330, %327, %328 : vector<16x256xi1>, vector<16x256xbf16>
    %c128_278 = arith.constant 128 : index
    %c0_279 = arith.constant 0 : index
    %332 = vector.load %arg15[%c128_278, %c0_279] : memref<144x256xbf16, #tpu.memory_space<vmem>>, vector<16x256xbf16>
    tpu.vector_store %arg15[%c128_278, %c0_279], %331 {strides = array<i32>} : memref<144x256xbf16, #tpu.memory_space<vmem>>, vector<16x256xbf16>,
    %c0_280 = arith.constant 0 : index
    %c0_281 = arith.constant 0 : index
    %333 = vector.load %arg15[%c0_280, %c0_281] : memref<144x256xbf16, #tpu.memory_space<vmem>>, vector<144x256xbf16>
    %cst_282 = arith.constant dense<0.000000e+00> : vector<16x256xf32>
    %334 = tpu.matmul %286, %333, %cst_282 {dimension_numbers = #tpu.dot_dimension_numbers<[1], [0], [0], [1], [0, 0, 1, 1], [], []>} : vector<16x144xbf16>, vector<144x256xbf16>, vector<16x256xf32> -> vector<16x256xf32>
    %335 = vector.broadcast %288 : vector<16x1xf32> to vector<16x256xf32>
    %336 = arith.addf %334, %335 : vector<16x256xf32>
    %cst_283 = arith.constant dense<0.000000e+00> : vector<16xf32>
    %337 = vector.multi_reduction <add>, %336, %cst_283 [1] : vector<16x256xf32> to vector<16xf32>
    %338 = vector.shape_cast %337 : vector<16xf32> to vector<16x1xf32>
    %cst_284 = arith.constant 2.560000e+02 : f32
    %339 = vector.broadcast %cst_284 : f32 to vector<16x1xf32>
    %340 = arith.divf %338, %339 : vector<16x1xf32>
    %c1_285 = arith.constant 1 : index
    %c0_286 = arith.constant 0 : index
    %c0_287 = arith.constant 0 : index
    %341 = vector.load %arg7[%c1_285, %c0_286, %c0_287] : memref<3x16x4xf32, #tpu.memory_space<vmem>>, vector<1x16x4xf32>
    %342 = vector.shape_cast %341 : vector<1x16x4xf32> to vector<16x4xf32>
    %343 = vector.broadcast %340 : vector<16x1xf32> to vector<16x4xf32>
    %344 = arith.mulf %342, %343 : vector<16x4xf32>
    %cst_288 = arith.constant dense<0.000000e+00> : vector<4xf32>
    %345 = vector.multi_reduction <add>, %344, %cst_288 [0] : vector<16x4xf32> to vector<4xf32>
    %346 = vector.shape_cast %345 : vector<4xf32> to vector<1x4xf32>
    %c1_289 = arith.constant 1 : index
    %c0_290 = arith.constant 0 : index
    %c0_291 = arith.constant 0 : index
    %347 = vector.load %arg8[%c1_289, %c0_290, %c0_291] : memref<3x1x4xf32, #tpu.memory_space<vmem>>, vector<1x1x4xf32>
    %348 = vector.shape_cast %347 : vector<1x1x4xf32> to vector<1x4xf32>
    %349 = arith.addf %346, %348 : vector<1x4xf32>
    %cst_292 = arith.constant 0.000000e+00 : f32
    %350 = vector.broadcast %cst_292 : f32 to vector<1x4xf32>
    %351 = arith.maximumf %349, %350 : vector<1x4xf32>
    %c1_293 = arith.constant 1 : index
    %c0_294 = arith.constant 0 : index
    %c0_295 = arith.constant 0 : index
    %352 = vector.load %arg9[%c1_293, %c0_294, %c0_295] : memref<3x16x4xf32, #tpu.memory_space<vmem>>, vector<1x16x4xf32>
    %353 = vector.shape_cast %352 : vector<1x16x4xf32> to vector<16x4xf32>
    %354 = vector.broadcast %351 : vector<1x4xf32> to vector<16x4xf32>
    %355 = arith.mulf %353, %354 : vector<16x4xf32>
    %cst_296 = arith.constant dense<0.000000e+00> : vector<16xf32>
    %356 = vector.multi_reduction <add>, %355, %cst_296 [1] : vector<16x4xf32> to vector<16xf32>
    %357 = vector.shape_cast %356 : vector<16xf32> to vector<16x1xf32>
    %c1_297 = arith.constant 1 : index
    %c0_298 = arith.constant 0 : index
    %c0_299 = arith.constant 0 : index
    %358 = vector.load %arg10[%c1_297, %c0_298, %c0_299] : memref<3x16x1xf32, #tpu.memory_space<vmem>>, vector<1x16x1xf32>
    %359 = vector.shape_cast %358 : vector<1x16x1xf32> to vector<16x1xf32>
    %360 = arith.addf %357, %359 : vector<16x1xf32>
    %361 = arith.negf %360 : vector<16x1xf32>
    %362 = math.exp %361 : vector<16x1xf32>
    %cst_300 = arith.constant 1.000000e+00 : f32
    %363 = vector.broadcast %cst_300 : f32 to vector<16x1xf32>
    %364 = arith.addf %363, %362 : vector<16x1xf32>
    %365 = arith.divf %363, %364 : vector<16x1xf32>
    %366 = vector.broadcast %365 : vector<16x1xf32> to vector<16x256xf32>
    %367 = arith.mulf %336, %366 : vector<16x256xf32>
    %368 = arith.addf %367, %230 : vector<16x256xf32>
    %c4 = arith.constant 4 : index
    %c0_301 = arith.constant 0 : index
    %c0_302 = arith.constant 0 : index
    %369 = vector.load %arg5[%c4, %c0_301, %c0_302] : memref<6x16x144xbf16, #tpu.memory_space<vmem>>, vector<1x16x144xbf16>
    %370 = vector.shape_cast %369 : vector<1x16x144xbf16> to vector<16x144xbf16>
    %c4_303 = arith.constant 4 : index
    %c0_304 = arith.constant 0 : index
    %c0_305 = arith.constant 0 : index
    %371 = vector.load %arg6[%c4_303, %c0_304, %c0_305] : memref<6x16x1xf32, #tpu.memory_space<vmem>>, vector<1x16x1xf32>
    %372 = vector.shape_cast %371 : vector<1x16x1xf32> to vector<16x1xf32>
    %373 = arith.truncf %368 : vector<16x256xf32> to vector<16x256xbf16>
    %c0_306 = arith.constant 0 : index
    %c128_307 = arith.constant 128 : index
    %374 = vector.load %arg14[%c0_306, %c128_307] : memref<16x512xbf16, #tpu.memory_space<vmem>>, vector<16x256xbf16>
    tpu.vector_store %arg14[%c0_306, %c128_307], %373 {strides = array<i32>} : memref<16x512xbf16, #tpu.memory_space<vmem>>, vector<16x256xbf16>,
    %c0_308 = arith.constant 0 : index
    %c111_309 = arith.constant 111 : index
    %375 = vector.load %arg14[%c0_308, %c111_309] : memref<16x512xbf16, #tpu.memory_space<vmem>>, vector<16x256xbf16>
    %cst_310 = arith.constant 0.000000e+00 : bf16
    %376 = vector.broadcast %cst_310 : bf16 to vector<16x256xbf16>
    %377 = vector.shape_cast %22 : vector<1x256xi1> to vector<1x256xi1>
    %378 = vector.broadcast %377 : vector<1x256xi1> to vector<16x256xi1>
    %379 = arith.select %378, %375, %376 : vector<16x256xi1>, vector<16x256xbf16>
    %c0_311 = arith.constant 0 : index
    %c0_312 = arith.constant 0 : index
    %380 = vector.load %arg15[%c0_311, %c0_312] : memref<144x256xbf16, #tpu.memory_space<vmem>>, vector<16x256xbf16>
    tpu.vector_store %arg15[%c0_311, %c0_312], %379 {strides = array<i32>} : memref<144x256xbf16, #tpu.memory_space<vmem>>, vector<16x256xbf16>,
    %c0_313 = arith.constant 0 : index
    %c112_314 = arith.constant 112 : index
    %381 = vector.load %arg14[%c0_313, %c112_314] : memref<16x512xbf16, #tpu.memory_space<vmem>>, vector<16x256xbf16>
    %c16_315 = arith.constant 16 : index
    %c0_316 = arith.constant 0 : index
    %382 = vector.load %arg15[%c16_315, %c0_316] : memref<144x256xbf16, #tpu.memory_space<vmem>>, vector<16x256xbf16>
    tpu.vector_store %arg15[%c16_315, %c0_316], %381 {strides = array<i32>} : memref<144x256xbf16, #tpu.memory_space<vmem>>, vector<16x256xbf16>,
    %c0_317 = arith.constant 0 : index
    %c113_318 = arith.constant 113 : index
    %383 = vector.load %arg14[%c0_317, %c113_318] : memref<16x512xbf16, #tpu.memory_space<vmem>>, vector<16x256xbf16>
    %cst_319 = arith.constant 0.000000e+00 : bf16
    %384 = vector.broadcast %cst_319 : bf16 to vector<16x256xbf16>
    %385 = vector.shape_cast %24 : vector<1x256xi1> to vector<1x256xi1>
    %386 = vector.broadcast %385 : vector<1x256xi1> to vector<16x256xi1>
    %387 = arith.select %386, %383, %384 : vector<16x256xi1>, vector<16x256xbf16>
    %c32_320 = arith.constant 32 : index
    %c0_321 = arith.constant 0 : index
    %388 = vector.load %arg15[%c32_320, %c0_321] : memref<144x256xbf16, #tpu.memory_space<vmem>>, vector<16x256xbf16>
    tpu.vector_store %arg15[%c32_320, %c0_321], %387 {strides = array<i32>} : memref<144x256xbf16, #tpu.memory_space<vmem>>, vector<16x256xbf16>,
    %c0_322 = arith.constant 0 : index
    %c127_323 = arith.constant 127 : index
    %389 = vector.load %arg14[%c0_322, %c127_323] : memref<16x512xbf16, #tpu.memory_space<vmem>>, vector<16x256xbf16>
    %cst_324 = arith.constant 0.000000e+00 : bf16
    %390 = vector.broadcast %cst_324 : bf16 to vector<16x256xbf16>
    %391 = vector.shape_cast %22 : vector<1x256xi1> to vector<1x256xi1>
    %392 = vector.broadcast %391 : vector<1x256xi1> to vector<16x256xi1>
    %393 = arith.select %392, %389, %390 : vector<16x256xi1>, vector<16x256xbf16>
    %c48_325 = arith.constant 48 : index
    %c0_326 = arith.constant 0 : index
    %394 = vector.load %arg15[%c48_325, %c0_326] : memref<144x256xbf16, #tpu.memory_space<vmem>>, vector<16x256xbf16>
    tpu.vector_store %arg15[%c48_325, %c0_326], %393 {strides = array<i32>} : memref<144x256xbf16, #tpu.memory_space<vmem>>, vector<16x256xbf16>,
    %c0_327 = arith.constant 0 : index
    %c128_328 = arith.constant 128 : index
    %395 = vector.load %arg14[%c0_327, %c128_328] : memref<16x512xbf16, #tpu.memory_space<vmem>>, vector<16x256xbf16>
    %c64_329 = arith.constant 64 : index
    %c0_330 = arith.constant 0 : index
    %396 = vector.load %arg15[%c64_329, %c0_330] : memref<144x256xbf16, #tpu.memory_space<vmem>>, vector<16x256xbf16>
    tpu.vector_store %arg15[%c64_329, %c0_330], %395 {strides = array<i32>} : memref<144x256xbf16, #tpu.memory_space<vmem>>, vector<16x256xbf16>,
    %c0_331 = arith.constant 0 : index
    %c129_332 = arith.constant 129 : index
    %397 = vector.load %arg14[%c0_331, %c129_332] : memref<16x512xbf16, #tpu.memory_space<vmem>>, vector<16x256xbf16>
    %cst_333 = arith.constant 0.000000e+00 : bf16
    %398 = vector.broadcast %cst_333 : bf16 to vector<16x256xbf16>
    %399 = vector.shape_cast %24 : vector<1x256xi1> to vector<1x256xi1>
    %400 = vector.broadcast %399 : vector<1x256xi1> to vector<16x256xi1>
    %401 = arith.select %400, %397, %398 : vector<16x256xi1>, vector<16x256xbf16>
    %c80_334 = arith.constant 80 : index
    %c0_335 = arith.constant 0 : index
    %402 = vector.load %arg15[%c80_334, %c0_335] : memref<144x256xbf16, #tpu.memory_space<vmem>>, vector<16x256xbf16>
    tpu.vector_store %arg15[%c80_334, %c0_335], %401 {strides = array<i32>} : memref<144x256xbf16, #tpu.memory_space<vmem>>, vector<16x256xbf16>,
    %c0_336 = arith.constant 0 : index
    %c143_337 = arith.constant 143 : index
    %403 = vector.load %arg14[%c0_336, %c143_337] : memref<16x512xbf16, #tpu.memory_space<vmem>>, vector<16x256xbf16>
    %cst_338 = arith.constant 0.000000e+00 : bf16
    %404 = vector.broadcast %cst_338 : bf16 to vector<16x256xbf16>
    %405 = vector.shape_cast %22 : vector<1x256xi1> to vector<1x256xi1>
    %406 = vector.broadcast %405 : vector<1x256xi1> to vector<16x256xi1>
    %407 = arith.select %406, %403, %404 : vector<16x256xi1>, vector<16x256xbf16>
    %c96_339 = arith.constant 96 : index
    %c0_340 = arith.constant 0 : index
    %408 = vector.load %arg15[%c96_339, %c0_340] : memref<144x256xbf16, #tpu.memory_space<vmem>>, vector<16x256xbf16>
    tpu.vector_store %arg15[%c96_339, %c0_340], %407 {strides = array<i32>} : memref<144x256xbf16, #tpu.memory_space<vmem>>, vector<16x256xbf16>,
    %c0_341 = arith.constant 0 : index
    %c144_342 = arith.constant 144 : index
    %409 = vector.load %arg14[%c0_341, %c144_342] : memref<16x512xbf16, #tpu.memory_space<vmem>>, vector<16x256xbf16>
    %c112_343 = arith.constant 112 : index
    %c0_344 = arith.constant 0 : index
    %410 = vector.load %arg15[%c112_343, %c0_344] : memref<144x256xbf16, #tpu.memory_space<vmem>>, vector<16x256xbf16>
    tpu.vector_store %arg15[%c112_343, %c0_344], %409 {strides = array<i32>} : memref<144x256xbf16, #tpu.memory_space<vmem>>, vector<16x256xbf16>,
    %c0_345 = arith.constant 0 : index
    %c145_346 = arith.constant 145 : index
    %411 = vector.load %arg14[%c0_345, %c145_346] : memref<16x512xbf16, #tpu.memory_space<vmem>>, vector<16x256xbf16>
    %cst_347 = arith.constant 0.000000e+00 : bf16
    %412 = vector.broadcast %cst_347 : bf16 to vector<16x256xbf16>
    %413 = vector.shape_cast %24 : vector<1x256xi1> to vector<1x256xi1>
    %414 = vector.broadcast %413 : vector<1x256xi1> to vector<16x256xi1>
    %415 = arith.select %414, %411, %412 : vector<16x256xi1>, vector<16x256xbf16>
    %c128_348 = arith.constant 128 : index
    %c0_349 = arith.constant 0 : index
    %416 = vector.load %arg15[%c128_348, %c0_349] : memref<144x256xbf16, #tpu.memory_space<vmem>>, vector<16x256xbf16>
    tpu.vector_store %arg15[%c128_348, %c0_349], %415 {strides = array<i32>} : memref<144x256xbf16, #tpu.memory_space<vmem>>, vector<16x256xbf16>,
    %c0_350 = arith.constant 0 : index
    %c0_351 = arith.constant 0 : index
    %417 = vector.load %arg15[%c0_350, %c0_351] : memref<144x256xbf16, #tpu.memory_space<vmem>>, vector<144x256xbf16>
    %cst_352 = arith.constant dense<0.000000e+00> : vector<16x256xf32>
    %418 = tpu.matmul %370, %417, %cst_352 {dimension_numbers = #tpu.dot_dimension_numbers<[1], [0], [0], [1], [0, 0, 1, 1], [], []>} : vector<16x144xbf16>, vector<144x256xbf16>, vector<16x256xf32> -> vector<16x256xf32>
    %419 = vector.broadcast %372 : vector<16x1xf32> to vector<16x256xf32>
    %420 = arith.addf %418, %419 : vector<16x256xf32>
    %cst_353 = arith.constant 0.000000e+00 : f32
    %421 = vector.broadcast %cst_353 : f32 to vector<16x256xf32>
    %422 = arith.maximumf %420, %421 : vector<16x256xf32>
    %c5 = arith.constant 5 : index
    %c0_354 = arith.constant 0 : index
    %c0_355 = arith.constant 0 : index
    %423 = vector.load %arg5[%c5, %c0_354, %c0_355] : memref<6x16x144xbf16, #tpu.memory_space<vmem>>, vector<1x16x144xbf16>
    %424 = vector.shape_cast %423 : vector<1x16x144xbf16> to vector<16x144xbf16>
    %c5_356 = arith.constant 5 : index
    %c0_357 = arith.constant 0 : index
    %c0_358 = arith.constant 0 : index
    %425 = vector.load %arg6[%c5_356, %c0_357, %c0_358] : memref<6x16x1xf32, #tpu.memory_space<vmem>>, vector<1x16x1xf32>
    %426 = vector.shape_cast %425 : vector<1x16x1xf32> to vector<16x1xf32>
    %427 = arith.truncf %422 : vector<16x256xf32> to vector<16x256xbf16>
    %c0_359 = arith.constant 0 : index
    %c128_360 = arith.constant 128 : index
    %428 = vector.load %arg14[%c0_359, %c128_360] : memref<16x512xbf16, #tpu.memory_space<vmem>>, vector<16x256xbf16>
    tpu.vector_store %arg14[%c0_359, %c128_360], %427 {strides = array<i32>} : memref<16x512xbf16, #tpu.memory_space<vmem>>, vector<16x256xbf16>,
    %c0_361 = arith.constant 0 : index
    %c111_362 = arith.constant 111 : index
    %429 = vector.load %arg14[%c0_361, %c111_362] : memref<16x512xbf16, #tpu.memory_space<vmem>>, vector<16x256xbf16>
    %cst_363 = arith.constant 0.000000e+00 : bf16
    %430 = vector.broadcast %cst_363 : bf16 to vector<16x256xbf16>
    %431 = vector.shape_cast %22 : vector<1x256xi1> to vector<1x256xi1>
    %432 = vector.broadcast %431 : vector<1x256xi1> to vector<16x256xi1>
    %433 = arith.select %432, %429, %430 : vector<16x256xi1>, vector<16x256xbf16>
    %c0_364 = arith.constant 0 : index
    %c0_365 = arith.constant 0 : index
    %434 = vector.load %arg15[%c0_364, %c0_365] : memref<144x256xbf16, #tpu.memory_space<vmem>>, vector<16x256xbf16>
    tpu.vector_store %arg15[%c0_364, %c0_365], %433 {strides = array<i32>} : memref<144x256xbf16, #tpu.memory_space<vmem>>, vector<16x256xbf16>,
    %c0_366 = arith.constant 0 : index
    %c112_367 = arith.constant 112 : index
    %435 = vector.load %arg14[%c0_366, %c112_367] : memref<16x512xbf16, #tpu.memory_space<vmem>>, vector<16x256xbf16>
    %c16_368 = arith.constant 16 : index
    %c0_369 = arith.constant 0 : index
    %436 = vector.load %arg15[%c16_368, %c0_369] : memref<144x256xbf16, #tpu.memory_space<vmem>>, vector<16x256xbf16>
    tpu.vector_store %arg15[%c16_368, %c0_369], %435 {strides = array<i32>} : memref<144x256xbf16, #tpu.memory_space<vmem>>, vector<16x256xbf16>,
    %c0_370 = arith.constant 0 : index
    %c113_371 = arith.constant 113 : index
    %437 = vector.load %arg14[%c0_370, %c113_371] : memref<16x512xbf16, #tpu.memory_space<vmem>>, vector<16x256xbf16>
    %cst_372 = arith.constant 0.000000e+00 : bf16
    %438 = vector.broadcast %cst_372 : bf16 to vector<16x256xbf16>
    %439 = vector.shape_cast %24 : vector<1x256xi1> to vector<1x256xi1>
    %440 = vector.broadcast %439 : vector<1x256xi1> to vector<16x256xi1>
    %441 = arith.select %440, %437, %438 : vector<16x256xi1>, vector<16x256xbf16>
    %c32_373 = arith.constant 32 : index
    %c0_374 = arith.constant 0 : index
    %442 = vector.load %arg15[%c32_373, %c0_374] : memref<144x256xbf16, #tpu.memory_space<vmem>>, vector<16x256xbf16>
    tpu.vector_store %arg15[%c32_373, %c0_374], %441 {strides = array<i32>} : memref<144x256xbf16, #tpu.memory_space<vmem>>, vector<16x256xbf16>,
    %c0_375 = arith.constant 0 : index
    %c127_376 = arith.constant 127 : index
    %443 = vector.load %arg14[%c0_375, %c127_376] : memref<16x512xbf16, #tpu.memory_space<vmem>>, vector<16x256xbf16>
    %cst_377 = arith.constant 0.000000e+00 : bf16
    %444 = vector.broadcast %cst_377 : bf16 to vector<16x256xbf16>
    %445 = vector.shape_cast %22 : vector<1x256xi1> to vector<1x256xi1>
    %446 = vector.broadcast %445 : vector<1x256xi1> to vector<16x256xi1>
    %447 = arith.select %446, %443, %444 : vector<16x256xi1>, vector<16x256xbf16>
    %c48_378 = arith.constant 48 : index
    %c0_379 = arith.constant 0 : index
    %448 = vector.load %arg15[%c48_378, %c0_379] : memref<144x256xbf16, #tpu.memory_space<vmem>>, vector<16x256xbf16>
    tpu.vector_store %arg15[%c48_378, %c0_379], %447 {strides = array<i32>} : memref<144x256xbf16, #tpu.memory_space<vmem>>, vector<16x256xbf16>,
    %c0_380 = arith.constant 0 : index
    %c128_381 = arith.constant 128 : index
    %449 = vector.load %arg14[%c0_380, %c128_381] : memref<16x512xbf16, #tpu.memory_space<vmem>>, vector<16x256xbf16>
    %c64_382 = arith.constant 64 : index
    %c0_383 = arith.constant 0 : index
    %450 = vector.load %arg15[%c64_382, %c0_383] : memref<144x256xbf16, #tpu.memory_space<vmem>>, vector<16x256xbf16>
    tpu.vector_store %arg15[%c64_382, %c0_383], %449 {strides = array<i32>} : memref<144x256xbf16, #tpu.memory_space<vmem>>, vector<16x256xbf16>,
    %c0_384 = arith.constant 0 : index
    %c129_385 = arith.constant 129 : index
    %451 = vector.load %arg14[%c0_384, %c129_385] : memref<16x512xbf16, #tpu.memory_space<vmem>>, vector<16x256xbf16>
    %cst_386 = arith.constant 0.000000e+00 : bf16
    %452 = vector.broadcast %cst_386 : bf16 to vector<16x256xbf16>
    %453 = vector.shape_cast %24 : vector<1x256xi1> to vector<1x256xi1>
    %454 = vector.broadcast %453 : vector<1x256xi1> to vector<16x256xi1>
    %455 = arith.select %454, %451, %452 : vector<16x256xi1>, vector<16x256xbf16>
    %c80_387 = arith.constant 80 : index
    %c0_388 = arith.constant 0 : index
    %456 = vector.load %arg15[%c80_387, %c0_388] : memref<144x256xbf16, #tpu.memory_space<vmem>>, vector<16x256xbf16>
    tpu.vector_store %arg15[%c80_387, %c0_388], %455 {strides = array<i32>} : memref<144x256xbf16, #tpu.memory_space<vmem>>, vector<16x256xbf16>,
    %c0_389 = arith.constant 0 : index
    %c143_390 = arith.constant 143 : index
    %457 = vector.load %arg14[%c0_389, %c143_390] : memref<16x512xbf16, #tpu.memory_space<vmem>>, vector<16x256xbf16>
    %cst_391 = arith.constant 0.000000e+00 : bf16
    %458 = vector.broadcast %cst_391 : bf16 to vector<16x256xbf16>
    %459 = vector.shape_cast %22 : vector<1x256xi1> to vector<1x256xi1>
    %460 = vector.broadcast %459 : vector<1x256xi1> to vector<16x256xi1>
    %461 = arith.select %460, %457, %458 : vector<16x256xi1>, vector<16x256xbf16>
    %c96_392 = arith.constant 96 : index
    %c0_393 = arith.constant 0 : index
    %462 = vector.load %arg15[%c96_392, %c0_393] : memref<144x256xbf16, #tpu.memory_space<vmem>>, vector<16x256xbf16>
    tpu.vector_store %arg15[%c96_392, %c0_393], %461 {strides = array<i32>} : memref<144x256xbf16, #tpu.memory_space<vmem>>, vector<16x256xbf16>,
    %c0_394 = arith.constant 0 : index
    %c144_395 = arith.constant 144 : index
    %463 = vector.load %arg14[%c0_394, %c144_395] : memref<16x512xbf16, #tpu.memory_space<vmem>>, vector<16x256xbf16>
    %c112_396 = arith.constant 112 : index
    %c0_397 = arith.constant 0 : index
    %464 = vector.load %arg15[%c112_396, %c0_397] : memref<144x256xbf16, #tpu.memory_space<vmem>>, vector<16x256xbf16>
    tpu.vector_store %arg15[%c112_396, %c0_397], %463 {strides = array<i32>} : memref<144x256xbf16, #tpu.memory_space<vmem>>, vector<16x256xbf16>,
    %c0_398 = arith.constant 0 : index
    %c145_399 = arith.constant 145 : index
    %465 = vector.load %arg14[%c0_398, %c145_399] : memref<16x512xbf16, #tpu.memory_space<vmem>>, vector<16x256xbf16>
    %cst_400 = arith.constant 0.000000e+00 : bf16
    %466 = vector.broadcast %cst_400 : bf16 to vector<16x256xbf16>
    %467 = vector.shape_cast %24 : vector<1x256xi1> to vector<1x256xi1>
    %468 = vector.broadcast %467 : vector<1x256xi1> to vector<16x256xi1>
    %469 = arith.select %468, %465, %466 : vector<16x256xi1>, vector<16x256xbf16>
    %c128_401 = arith.constant 128 : index
    %c0_402 = arith.constant 0 : index
    %470 = vector.load %arg15[%c128_401, %c0_402] : memref<144x256xbf16, #tpu.memory_space<vmem>>, vector<16x256xbf16>
    tpu.vector_store %arg15[%c128_401, %c0_402], %469 {strides = array<i32>} : memref<144x256xbf16, #tpu.memory_space<vmem>>, vector<16x256xbf16>,
    %c0_403 = arith.constant 0 : index
    %c0_404 = arith.constant 0 : index
    %471 = vector.load %arg15[%c0_403, %c0_404] : memref<144x256xbf16, #tpu.memory_space<vmem>>, vector<144x256xbf16>
    %cst_405 = arith.constant dense<0.000000e+00> : vector<16x256xf32>
    %472 = tpu.matmul %424, %471, %cst_405 {dimension_numbers = #tpu.dot_dimension_numbers<[1], [0], [0], [1], [0, 0, 1, 1], [], []>} : vector<16x144xbf16>, vector<144x256xbf16>, vector<16x256xf32> -> vector<16x256xf32>
    %473 = vector.broadcast %426 : vector<16x1xf32> to vector<16x256xf32>
    %474 = arith.addf %472, %473 : vector<16x256xf32>
    %cst_406 = arith.constant dense<0.000000e+00> : vector<16xf32>
    %475 = vector.multi_reduction <add>, %474, %cst_406 [1] : vector<16x256xf32> to vector<16xf32>
    %476 = vector.shape_cast %475 : vector<16xf32> to vector<16x1xf32>
    %cst_407 = arith.constant 2.560000e+02 : f32
    %477 = vector.broadcast %cst_407 : f32 to vector<16x1xf32>
    %478 = arith.divf %476, %477 : vector<16x1xf32>
    %c2_408 = arith.constant 2 : index
    %c0_409 = arith.constant 0 : index
    %c0_410 = arith.constant 0 : index
    %479 = vector.load %arg7[%c2_408, %c0_409, %c0_410] : memref<3x16x4xf32, #tpu.memory_space<vmem>>, vector<1x16x4xf32>
    %480 = vector.shape_cast %479 : vector<1x16x4xf32> to vector<16x4xf32>
    %481 = vector.broadcast %478 : vector<16x1xf32> to vector<16x4xf32>
    %482 = arith.mulf %480, %481 : vector<16x4xf32>
    %cst_411 = arith.constant dense<0.000000e+00> : vector<4xf32>
    %483 = vector.multi_reduction <add>, %482, %cst_411 [0] : vector<16x4xf32> to vector<4xf32>
    %484 = vector.shape_cast %483 : vector<4xf32> to vector<1x4xf32>
    %c2_412 = arith.constant 2 : index
    %c0_413 = arith.constant 0 : index
    %c0_414 = arith.constant 0 : index
    %485 = vector.load %arg8[%c2_412, %c0_413, %c0_414] : memref<3x1x4xf32, #tpu.memory_space<vmem>>, vector<1x1x4xf32>
    %486 = vector.shape_cast %485 : vector<1x1x4xf32> to vector<1x4xf32>
    %487 = arith.addf %484, %486 : vector<1x4xf32>
    %cst_415 = arith.constant 0.000000e+00 : f32
    %488 = vector.broadcast %cst_415 : f32 to vector<1x4xf32>
    %489 = arith.maximumf %487, %488 : vector<1x4xf32>
    %c2_416 = arith.constant 2 : index
    %c0_417 = arith.constant 0 : index
    %c0_418 = arith.constant 0 : index
    %490 = vector.load %arg9[%c2_416, %c0_417, %c0_418] : memref<3x16x4xf32, #tpu.memory_space<vmem>>, vector<1x16x4xf32>
    %491 = vector.shape_cast %490 : vector<1x16x4xf32> to vector<16x4xf32>
    %492 = vector.broadcast %489 : vector<1x4xf32> to vector<16x4xf32>
    %493 = arith.mulf %491, %492 : vector<16x4xf32>
    %cst_419 = arith.constant dense<0.000000e+00> : vector<16xf32>
    %494 = vector.multi_reduction <add>, %493, %cst_419 [1] : vector<16x4xf32> to vector<16xf32>
    %495 = vector.shape_cast %494 : vector<16xf32> to vector<16x1xf32>
    %c2_420 = arith.constant 2 : index
    %c0_421 = arith.constant 0 : index
    %c0_422 = arith.constant 0 : index
    %496 = vector.load %arg10[%c2_420, %c0_421, %c0_422] : memref<3x16x1xf32, #tpu.memory_space<vmem>>, vector<1x16x1xf32>
    %497 = vector.shape_cast %496 : vector<1x16x1xf32> to vector<16x1xf32>
    %498 = arith.addf %495, %497 : vector<16x1xf32>
    %499 = arith.negf %498 : vector<16x1xf32>
    %500 = math.exp %499 : vector<16x1xf32>
    %cst_423 = arith.constant 1.000000e+00 : f32
    %501 = vector.broadcast %cst_423 : f32 to vector<16x1xf32>
    %502 = arith.addf %501, %500 : vector<16x1xf32>
    %503 = arith.divf %501, %502 : vector<16x1xf32>
    %504 = vector.broadcast %503 : vector<16x1xf32> to vector<16x256xf32>
    %505 = arith.mulf %474, %504 : vector<16x256xf32>
    %506 = arith.addf %505, %368 : vector<16x256xf32>
    %c0_424 = arith.constant 0 : index
    %c0_425 = arith.constant 0 : index
    %507 = vector.load %arg11[%c0_424, %c0_425] : memref<4x144xbf16, #tpu.memory_space<vmem>>, vector<4x144xbf16>
    %c0_426 = arith.constant 0 : index
    %c0_427 = arith.constant 0 : index
    %508 = vector.load %arg12[%c0_426, %c0_427] : memref<4x1xf32, #tpu.memory_space<vmem>>, vector<4x1xf32>
    %509 = arith.truncf %506 : vector<16x256xf32> to vector<16x256xbf16>
    %c0_428 = arith.constant 0 : index
    %c128_429 = arith.constant 128 : index
    %510 = vector.load %arg14[%c0_428, %c128_429] : memref<16x512xbf16, #tpu.memory_space<vmem>>, vector<16x256xbf16>
    tpu.vector_store %arg14[%c0_428, %c128_429], %509 {strides = array<i32>} : memref<16x512xbf16, #tpu.memory_space<vmem>>, vector<16x256xbf16>,
    %c0_430 = arith.constant 0 : index
    %c111_431 = arith.constant 111 : index
    %511 = vector.load %arg14[%c0_430, %c111_431] : memref<16x512xbf16, #tpu.memory_space<vmem>>, vector<16x256xbf16>
    %cst_432 = arith.constant 0.000000e+00 : bf16
    %512 = vector.broadcast %cst_432 : bf16 to vector<16x256xbf16>
    %513 = vector.shape_cast %22 : vector<1x256xi1> to vector<1x256xi1>
    %514 = vector.broadcast %513 : vector<1x256xi1> to vector<16x256xi1>
    %515 = arith.select %514, %511, %512 : vector<16x256xi1>, vector<16x256xbf16>
    %c0_433 = arith.constant 0 : index
    %c0_434 = arith.constant 0 : index
    %516 = vector.load %arg15[%c0_433, %c0_434] : memref<144x256xbf16, #tpu.memory_space<vmem>>, vector<16x256xbf16>
    tpu.vector_store %arg15[%c0_433, %c0_434], %515 {strides = array<i32>} : memref<144x256xbf16, #tpu.memory_space<vmem>>, vector<16x256xbf16>,
    %c0_435 = arith.constant 0 : index
    %c112_436 = arith.constant 112 : index
    %517 = vector.load %arg14[%c0_435, %c112_436] : memref<16x512xbf16, #tpu.memory_space<vmem>>, vector<16x256xbf16>
    %c16_437 = arith.constant 16 : index
    %c0_438 = arith.constant 0 : index
    %518 = vector.load %arg15[%c16_437, %c0_438] : memref<144x256xbf16, #tpu.memory_space<vmem>>, vector<16x256xbf16>
    tpu.vector_store %arg15[%c16_437, %c0_438], %517 {strides = array<i32>} : memref<144x256xbf16, #tpu.memory_space<vmem>>, vector<16x256xbf16>,
    %c0_439 = arith.constant 0 : index
    %c113_440 = arith.constant 113 : index
    %519 = vector.load %arg14[%c0_439, %c113_440] : memref<16x512xbf16, #tpu.memory_space<vmem>>, vector<16x256xbf16>
    %cst_441 = arith.constant 0.000000e+00 : bf16
    %520 = vector.broadcast %cst_441 : bf16 to vector<16x256xbf16>
    %521 = vector.shape_cast %24 : vector<1x256xi1> to vector<1x256xi1>
    %522 = vector.broadcast %521 : vector<1x256xi1> to vector<16x256xi1>
    %523 = arith.select %522, %519, %520 : vector<16x256xi1>, vector<16x256xbf16>
    %c32_442 = arith.constant 32 : index
    %c0_443 = arith.constant 0 : index
    %524 = vector.load %arg15[%c32_442, %c0_443] : memref<144x256xbf16, #tpu.memory_space<vmem>>, vector<16x256xbf16>
    tpu.vector_store %arg15[%c32_442, %c0_443], %523 {strides = array<i32>} : memref<144x256xbf16, #tpu.memory_space<vmem>>, vector<16x256xbf16>,
    %c0_444 = arith.constant 0 : index
    %c127_445 = arith.constant 127 : index
    %525 = vector.load %arg14[%c0_444, %c127_445] : memref<16x512xbf16, #tpu.memory_space<vmem>>, vector<16x256xbf16>
    %cst_446 = arith.constant 0.000000e+00 : bf16
    %526 = vector.broadcast %cst_446 : bf16 to vector<16x256xbf16>
    %527 = vector.shape_cast %22 : vector<1x256xi1> to vector<1x256xi1>
    %528 = vector.broadcast %527 : vector<1x256xi1> to vector<16x256xi1>
    %529 = arith.select %528, %525, %526 : vector<16x256xi1>, vector<16x256xbf16>
    %c48_447 = arith.constant 48 : index
    %c0_448 = arith.constant 0 : index
    %530 = vector.load %arg15[%c48_447, %c0_448] : memref<144x256xbf16, #tpu.memory_space<vmem>>, vector<16x256xbf16>
    tpu.vector_store %arg15[%c48_447, %c0_448], %529 {strides = array<i32>} : memref<144x256xbf16, #tpu.memory_space<vmem>>, vector<16x256xbf16>,
    %c0_449 = arith.constant 0 : index
    %c128_450 = arith.constant 128 : index
    %531 = vector.load %arg14[%c0_449, %c128_450] : memref<16x512xbf16, #tpu.memory_space<vmem>>, vector<16x256xbf16>
    %c64_451 = arith.constant 64 : index
    %c0_452 = arith.constant 0 : index
    %532 = vector.load %arg15[%c64_451, %c0_452] : memref<144x256xbf16, #tpu.memory_space<vmem>>, vector<16x256xbf16>
    tpu.vector_store %arg15[%c64_451, %c0_452], %531 {strides = array<i32>} : memref<144x256xbf16, #tpu.memory_space<vmem>>, vector<16x256xbf16>,
    %c0_453 = arith.constant 0 : index
    %c129_454 = arith.constant 129 : index
    %533 = vector.load %arg14[%c0_453, %c129_454] : memref<16x512xbf16, #tpu.memory_space<vmem>>, vector<16x256xbf16>
    %cst_455 = arith.constant 0.000000e+00 : bf16
    %534 = vector.broadcast %cst_455 : bf16 to vector<16x256xbf16>
    %535 = vector.shape_cast %24 : vector<1x256xi1> to vector<1x256xi1>
    %536 = vector.broadcast %535 : vector<1x256xi1> to vector<16x256xi1>
    %537 = arith.select %536, %533, %534 : vector<16x256xi1>, vector<16x256xbf16>
    %c80_456 = arith.constant 80 : index
    %c0_457 = arith.constant 0 : index
    %538 = vector.load %arg15[%c80_456, %c0_457] : memref<144x256xbf16, #tpu.memory_space<vmem>>, vector<16x256xbf16>
    tpu.vector_store %arg15[%c80_456, %c0_457], %537 {strides = array<i32>} : memref<144x256xbf16, #tpu.memory_space<vmem>>, vector<16x256xbf16>,
    %c0_458 = arith.constant 0 : index
    %c143_459 = arith.constant 143 : index
    %539 = vector.load %arg14[%c0_458, %c143_459] : memref<16x512xbf16, #tpu.memory_space<vmem>>, vector<16x256xbf16>
    %cst_460 = arith.constant 0.000000e+00 : bf16
    %540 = vector.broadcast %cst_460 : bf16 to vector<16x256xbf16>
    %541 = vector.shape_cast %22 : vector<1x256xi1> to vector<1x256xi1>
    %542 = vector.broadcast %541 : vector<1x256xi1> to vector<16x256xi1>
    %543 = arith.select %542, %539, %540 : vector<16x256xi1>, vector<16x256xbf16>
    %c96_461 = arith.constant 96 : index
    %c0_462 = arith.constant 0 : index
    %544 = vector.load %arg15[%c96_461, %c0_462] : memref<144x256xbf16, #tpu.memory_space<vmem>>, vector<16x256xbf16>
    tpu.vector_store %arg15[%c96_461, %c0_462], %543 {strides = array<i32>} : memref<144x256xbf16, #tpu.memory_space<vmem>>, vector<16x256xbf16>,
    %c0_463 = arith.constant 0 : index
    %c144_464 = arith.constant 144 : index
    %545 = vector.load %arg14[%c0_463, %c144_464] : memref<16x512xbf16, #tpu.memory_space<vmem>>, vector<16x256xbf16>
    %c112_465 = arith.constant 112 : index
    %c0_466 = arith.constant 0 : index
    %546 = vector.load %arg15[%c112_465, %c0_466] : memref<144x256xbf16, #tpu.memory_space<vmem>>, vector<16x256xbf16>
    tpu.vector_store %arg15[%c112_465, %c0_466], %545 {strides = array<i32>} : memref<144x256xbf16, #tpu.memory_space<vmem>>, vector<16x256xbf16>,
    %c0_467 = arith.constant 0 : index
    %c145_468 = arith.constant 145 : index
    %547 = vector.load %arg14[%c0_467, %c145_468] : memref<16x512xbf16, #tpu.memory_space<vmem>>, vector<16x256xbf16>
    %cst_469 = arith.constant 0.000000e+00 : bf16
    %548 = vector.broadcast %cst_469 : bf16 to vector<16x256xbf16>
    %549 = vector.shape_cast %24 : vector<1x256xi1> to vector<1x256xi1>
    %550 = vector.broadcast %549 : vector<1x256xi1> to vector<16x256xi1>
    %551 = arith.select %550, %547, %548 : vector<16x256xi1>, vector<16x256xbf16>
    %c128_470 = arith.constant 128 : index
    %c0_471 = arith.constant 0 : index
    %552 = vector.load %arg15[%c128_470, %c0_471] : memref<144x256xbf16, #tpu.memory_space<vmem>>, vector<16x256xbf16>
    tpu.vector_store %arg15[%c128_470, %c0_471], %551 {strides = array<i32>} : memref<144x256xbf16, #tpu.memory_space<vmem>>, vector<16x256xbf16>,
    %c0_472 = arith.constant 0 : index
    %c0_473 = arith.constant 0 : index
    %553 = vector.load %arg15[%c0_472, %c0_473] : memref<144x256xbf16, #tpu.memory_space<vmem>>, vector<144x256xbf16>
    %cst_474 = arith.constant dense<0.000000e+00> : vector<4x256xf32>
    %554 = tpu.matmul %507, %553, %cst_474 {dimension_numbers = #tpu.dot_dimension_numbers<[1], [0], [0], [1], [0, 0, 1, 1], [], []>} : vector<4x144xbf16>, vector<144x256xbf16>, vector<4x256xf32> -> vector<4x256xf32>
    %555 = vector.broadcast %508 : vector<4x1xf32> to vector<4x256xf32>
    %556 = arith.addf %554, %555 : vector<4x256xf32>
    %557 = arith.negf %556 : vector<4x256xf32>
    %558 = math.exp %557 : vector<4x256xf32>
    %cst_475 = arith.constant 1.000000e+00 : f32
    %559 = vector.broadcast %cst_475 : f32 to vector<4x256xf32>
    %560 = arith.addf %559, %558 : vector<4x256xf32>
    %561 = arith.divf %559, %560 : vector<4x256xf32>
    %c0_476 = arith.constant 0 : index
    %c0_477 = arith.constant 0 : index
    %c0_478 = arith.constant 0 : index
    %562 = vector.load %arg13[%c0_476, %c0_477, %c0_478] : memref<1x4x256xf32, #tpu.memory_space<vmem>>, vector<1x4x256xf32>
    %563 = vector.shape_cast %562 : vector<1x4x256xf32> to vector<4x256xf32>
    %564 = vector.shape_cast %561 : vector<4x256xf32> to vector<1x4x256xf32>
    tpu.vector_store %arg13[%c0_476, %c0_477, %c0_478], %564 {strides = array<i32>} : memref<1x4x256xf32, #tpu.memory_space<vmem>>, vector<1x4x256xf32>,
    return
  }
  func.func @transform_0(%arg0: i32) -> (i32, i32, i32) {
    %c0_i32 = arith.constant 0 : i32
    %c0_i32_0 = arith.constant 0 : i32
    %c0_i32_1 = arith.constant 0 : i32
    return %arg0, %c0_i32, %c0_i32_0 : i32, i32, i32
  }
  func.func @transform_1(%arg0: i32) -> (i32, i32, i32) {
    %c0_i32 = arith.constant 0 : i32
    %c0_i32_0 = arith.constant 0 : i32
    %c0_i32_1 = arith.constant 0 : i32
    return %arg0, %c0_i32, %c0_i32_0 : i32, i32, i32
  }
  func.func @transform_2(%arg0: i32) -> (i32, i32) {
    %c0_i32 = arith.constant 0 : i32
    %c0_i32_0 = arith.constant 0 : i32
    %c0_i32_1 = arith.constant 0 : i32
    return %c0_i32, %c0_i32_0 : i32, i32
  }
  func.func @transform_3(%arg0: i32) -> (i32, i32) {
    %c0_i32 = arith.constant 0 : i32
    %c0_i32_0 = arith.constant 0 : i32
    %c0_i32_1 = arith.constant 0 : i32
    return %c0_i32, %c0_i32_0 : i32, i32
  }
  func.func @transform_4(%arg0: i32) -> (i32, i32, i32) {
    %c0_i32 = arith.constant 0 : i32
    %c0_i32_0 = arith.constant 0 : i32
    %c0_i32_1 = arith.constant 0 : i32
    %c0_i32_2 = arith.constant 0 : i32
    return %c0_i32, %c0_i32_0, %c0_i32_1 : i32, i32, i32
  }
  func.func @transform_5(%arg0: i32) -> (i32, i32, i32) {
    %c0_i32 = arith.constant 0 : i32
    %c0_i32_0 = arith.constant 0 : i32
    %c0_i32_1 = arith.constant 0 : i32
    %c0_i32_2 = arith.constant 0 : i32
    return %c0_i32, %c0_i32_0, %c0_i32_1 : i32, i32, i32
  }
  func.func @transform_6(%arg0: i32) -> (i32, i32, i32) {
    %c0_i32 = arith.constant 0 : i32
    %c0_i32_0 = arith.constant 0 : i32
    %c0_i32_1 = arith.constant 0 : i32
    %c0_i32_2 = arith.constant 0 : i32
    return %c0_i32, %c0_i32_0, %c0_i32_1 : i32, i32, i32
  }
  func.func @transform_7(%arg0: i32) -> (i32, i32, i32) {
    %c0_i32 = arith.constant 0 : i32
    %c0_i32_0 = arith.constant 0 : i32
    %c0_i32_1 = arith.constant 0 : i32
    %c0_i32_2 = arith.constant 0 : i32
    return %c0_i32, %c0_i32_0, %c0_i32_1 : i32, i32, i32
  }
  func.func @transform_8(%arg0: i32) -> (i32, i32, i32) {
    %c0_i32 = arith.constant 0 : i32
    %c0_i32_0 = arith.constant 0 : i32
    %c0_i32_1 = arith.constant 0 : i32
    %c0_i32_2 = arith.constant 0 : i32
    return %c0_i32, %c0_i32_0, %c0_i32_1 : i32, i32, i32
  }
  func.func @transform_9(%arg0: i32) -> (i32, i32, i32) {
    %c0_i32 = arith.constant 0 : i32
    %c0_i32_0 = arith.constant 0 : i32
    %c0_i32_1 = arith.constant 0 : i32
    %c0_i32_2 = arith.constant 0 : i32
    return %c0_i32, %c0_i32_0, %c0_i32_1 : i32, i32, i32
  }
  func.func @transform_10(%arg0: i32) -> (i32, i32) {
    %c0_i32 = arith.constant 0 : i32
    %c0_i32_0 = arith.constant 0 : i32
    %c0_i32_1 = arith.constant 0 : i32
    return %c0_i32, %c0_i32_0 : i32, i32
  }
  func.func @transform_11(%arg0: i32) -> (i32, i32) {
    %c0_i32 = arith.constant 0 : i32
    %c0_i32_0 = arith.constant 0 : i32
    %c0_i32_1 = arith.constant 0 : i32
    return %c0_i32, %c0_i32_0 : i32, i32
  }
  func.func @transform_12(%arg0: i32) -> (i32, i32, i32) {
    %c0_i32 = arith.constant 0 : i32
    %c0_i32_0 = arith.constant 0 : i32
    %c0_i32_1 = arith.constant 0 : i32
    return %arg0, %c0_i32, %c0_i32_0 : i32, i32, i32
  }
}

</mosaic_0001>

<llo_original>
// kernel: _lambda_.1
$region0: #{_lambda_.1}
  #allocation0 [shape = 'u32[]', space=smem, size = 0x4, offset = 0x4, fixed_abs, tag = 'smem constant byte address 0x4 - core index']
  #allocation1 [shape = 'u32[144,128]{1,0:T(1,128)}', space=vmem, size = 0x12000, scoped, tag = 'internal scratch']
  #allocation2 [shape = 'bf16[16,512]{1,0:T(16,128)(2,1)}', space=vmem, size = 0x4000, scoped, tag = 'scratch operand']
  #allocation3 [shape = 'bf16[144,256]{1,0:T(16,128)(2,1)}', space=vmem, size = 0x12000, scoped, tag = 'scratch operand']
  %s0 = inlined_call_operand.vmem [shape: f32[2,4,256], index: 0, kind: input, shape index: {}]
  %s1 = inlined_call_operand.vmem [shape: f32[2,4,256], index: 1, kind: input, shape index: {}]
  %s2 = inlined_call_operand.vmem [shape: bf16[16,144], index: 2, kind: input, shape index: {}]
  %s3 = inlined_call_operand.vmem [shape: f32[16,1], index: 3, kind: input, shape index: {}]
  %s4 = inlined_call_operand.vmem [shape: bf16[6,16,144], index: 4, kind: input, shape index: {}]
  %s5 = inlined_call_operand.vmem [shape: f32[6,16,1], index: 5, kind: input, shape index: {}]
  %s6 = inlined_call_operand.vmem [shape: f32[3,16,4], index: 6, kind: input, shape index: {}]
  %s7 = inlined_call_operand.vmem [shape: f32[3,1,4], index: 7, kind: input, shape index: {}]
  %s8 = inlined_call_operand.vmem [shape: f32[3,16,4], index: 8, kind: input, shape index: {}]
  %s9 = inlined_call_operand.vmem [shape: f32[3,16,1], index: 9, kind: input, shape index: {}]
  %s10 = inlined_call_operand.vmem [shape: bf16[4,144], index: 10, kind: input, shape index: {}]
  %s11 = inlined_call_operand.vmem [shape: f32[4,1], index: 11, kind: input, shape index: {}]
  %s12 = inlined_call_operand.vmem [shape: f32[2,4,256], index: 12, kind: output, shape index: {}]
  %s13 = sld [smem:[#allocation0]]
  $region81: #{_lambda_.1} parent=0
    _
  %s15 = ssub.s32 1, %s13
  %s16 = scalar_select 0, %s15, %s13
  loop: start=0, step=1, limit=4
  $region2: #{_lambda_.1} parent=0 // loop_pre_header
    _
  $region3: #{_lambda_.1} parent=0 // loop_header
    %s18 = sphi 0, %s22
    %p19 = scmp.ge.s32.totalorder %s18, 4
    %s28 = sphi 0, %s30
    %s31 = sphi 0, %s28
    %s32 = sphi 0, %s31
    %s48 = sphi 0, %s32
    %s54 = sphi 0, %s56
    %s57 = sphi 0, %s54
    %s58 = sphi 0, %s57
    %s74 = sphi 0, %s58
    %s78 = sphi 0, %s78
    %s80 = sphi 0, %s78
    %s81 = sphi 0, %s80
    %s95 = sphi 0, %s81
    %s99 = sphi 0, %s99
    %s101 = sphi 0, %s99
    %s102 = sphi 0, %s101
    %s116 = sphi 0, %s102
    %s120 = sphi 0, %s120
    %s122 = sphi 0, %s120
    %s123 = sphi 0, %s122
    %s137 = sphi 0, %s123
    %s141 = sphi 0, %s141
    %s143 = sphi 0, %s141
    %s144 = sphi 0, %s143
    %s158 = sphi 0, %s144
    %s162 = sphi 0, %s162
    %s164 = sphi 0, %s162
    %s165 = sphi 0, %s164
    %s179 = sphi 0, %s165
    %s183 = sphi 0, %s183
    %s185 = sphi 0, %s183
    %s186 = sphi 0, %s185
    %s200 = sphi 0, %s186
    %s204 = sphi 0, %s204
    %s206 = sphi 0, %s204
    %s207 = sphi 0, %s206
    %s221 = sphi 0, %s207
    %s225 = sphi 0, %s225
    %s227 = sphi 0, %s225
    %s228 = sphi 0, %s227
    %s242 = sphi 0, %s228
    %s246 = sphi 0, %s246
    %s248 = sphi 0, %s246
    %s249 = sphi 0, %s248
    %s263 = sphi 0, %s249
    %s267 = sphi 0, %s267
    %s269 = sphi 0, %s267
    %s270 = sphi 0, %s269
    %s284 = sphi 0, %s270
    %s290 = sphi 0, %s292
    %s293 = sphi 0, %s290
    %s294 = sphi 0, %s293
    %s310 = sphi 0, %s294
  $region4: #{_lambda_.1} parent=0 // loop_header_branch
    %21 = sbr.rel (%p19) target = $region8
  $region5: #{_lambda_.1} parent=0 // loop_body
    %s23 = ssub.s32 %s18, 1
    %s24 = ssub.s32 %s18, 2
    %s25 = sadd.s32 %s18, 1
    %s26 = ssub.s32 %s18, %s25
    %p27 = scmp.eq.s32.totalorder %s26, 0
    %s29 = sadd.s32 %s28, 1
    %s30 = scalar_select %p27, %s28, %s29
    %p33 = pneg %p27
    %p34 = scmp.eq.s32.totalorder %s18, 1
    %p35 = por %p33, %p34
    %p36 = scmp.ne.s32.totalorder %s28, %s31
    %p37 = scmp.eq.s32.totalorder %s18, 0
    %p38 = por %p36, %p37
    %p39 = scmp.ne.s32.totalorder %s28, %s31
    %p40 = scmp.eq.s32.totalorder %s23, 1
    %p41 = por %p39, %p40
    %p42 = scmp.ne.s32.totalorder %s31, %s32
    %p43 = scmp.eq.s32.totalorder %s23, 0
    %p44 = por %p42, %p43
    %p45 = scmp.ne.s32.totalorder %s31, %s32
    %p46 = scmp.eq.s32.totalorder %s24, 1
    %p47 = por %p45, %p46
    %p49 = scmp.ne.s32.totalorder %s32, %s48
    %p50 = scmp.eq.s32.totalorder %s24, 0
    %p51 = por %p49, %p50
    %s52 = ssub.s32 %s18, %s25
    %p53 = scmp.eq.s32.totalorder %s52, 0
    %s55 = sadd.s32 %s54, 1
    %s56 = scalar_select %p53, %s54, %s55
    %p59 = pneg %p53
    %p60 = scmp.eq.s32.totalorder %s18, 1
    %p61 = por %p59, %p60
    %p62 = scmp.ne.s32.totalorder %s54, %s57
    %p63 = scmp.eq.s32.totalorder %s18, 0
    %p64 = por %p62, %p63
    %p65 = scmp.ne.s32.totalorder %s54, %s57
    %p66 = scmp.eq.s32.totalorder %s23, 1
    %p67 = por %p65, %p66
    %p68 = scmp.ne.s32.totalorder %s57, %s58
    %p69 = scmp.eq.s32.totalorder %s23, 0
    %p70 = por %p68, %p69
    %p71 = scmp.ne.s32.totalorder %s57, %s58
    %p72 = scmp.eq.s32.totalorder %s24, 1
    %p73 = por %p71, %p72
    %p75 = scmp.ne.s32.totalorder %s58, %s74
    %p76 = scmp.eq.s32.totalorder %s24, 0
    %p77 = por %p75, %p76
    %s79 = sadd.s32 %s78, 1
    %p82 = scmp.eq.s32.totalorder %s18, 1
    %p83 = scmp.ne.s32.totalorder %s78, %s80
    %p84 = scmp.eq.s32.totalorder %s18, 0
    %p85 = por %p83, %p84
    %p86 = scmp.ne.s32.totalorder %s78, %s80
    %p87 = scmp.eq.s32.totalorder %s23, 1
    %p88 = por %p86, %p87
    %p89 = scmp.ne.s32.totalorder %s80, %s81
    %p90 = scmp.eq.s32.totalorder %s23, 0
    %p91 = por %p89, %p90
    %p92 = scmp.ne.s32.totalorder %s80, %s81
    %p93 = scmp.eq.s32.totalorder %s24, 1
    %p94 = por %p92, %p93
    %p96 = scmp.ne.s32.totalorder %s81, %s95
    %p97 = scmp.eq.s32.totalorder %s24, 0
    %p98 = por %p96, %p97
    %s100 = sadd.s32 %s99, 1
    %p103 = scmp.eq.s32.totalorder %s18, 1
    %p104 = scmp.ne.s32.totalorder %s99, %s101
    %p105 = scmp.eq.s32.totalorder %s18, 0
    %p106 = por %p104, %p105
    %p107 = scmp.ne.s32.totalorder %s99, %s101
    %p108 = scmp.eq.s32.totalorder %s23, 1
    %p109 = por %p107, %p108
    %p110 = scmp.ne.s32.totalorder %s101, %s102
    %p111 = scmp.eq.s32.totalorder %s23, 0
    %p112 = por %p110, %p111
    %p113 = scmp.ne.s32.totalorder %s101, %s102
    %p114 = scmp.eq.s32.totalorder %s24, 1
    %p115 = por %p113, %p114
    %p117 = scmp.ne.s32.totalorder %s102, %s116
    %p118 = scmp.eq.s32.totalorder %s24, 0
    %p119 = por %p117, %p118
    %s121 = sadd.s32 %s120, 1
    %p124 = scmp.eq.s32.totalorder %s18, 1
    %p125 = scmp.ne.s32.totalorder %s120, %s122
    %p126 = scmp.eq.s32.totalorder %s18, 0
    %p127 = por %p125, %p126
    %p128 = scmp.ne.s32.totalorder %s120, %s122
    %p129 = scmp.eq.s32.totalorder %s23, 1
    %p130 = por %p128, %p129
    %p131 = scmp.ne.s32.totalorder %s122, %s123
    %p132 = scmp.eq.s32.totalorder %s23, 0
    %p133 = por %p131, %p132
    %p134 = scmp.ne.s32.totalorder %s122, %s123
    %p135 = scmp.eq.s32.totalorder %s24, 1
    %p136 = por %p134, %p135
    %p138 = scmp.ne.s32.totalorder %s123, %s137
    %p139 = scmp.eq.s32.totalorder %s24, 0
    %p140 = por %p138, %p139
    %s142 = sadd.s32 %s141, 1
    %p145 = scmp.eq.s32.totalorder %s18, 1
    %p146 = scmp.ne.s32.totalorder %s141, %s143
    %p147 = scmp.eq.s32.totalorder %s18, 0
    %p148 = por %p146, %p147
    %p149 = scmp.ne.s32.totalorder %s141, %s143
    %p150 = scmp.eq.s32.totalorder %s23, 1
    %p151 = por %p149, %p150
    %p152 = scmp.ne.s32.totalorder %s143, %s144
    %p153 = scmp.eq.s32.totalorder %s23, 0
    %p154 = por %p152, %p153
    %p155 = scmp.ne.s32.totalorder %s143, %s144
    %p156 = scmp.eq.s32.totalorder %s24, 1
    %p157 = por %p155, %p156
    %p159 = scmp.ne.s32.totalorder %s144, %s158
    %p160 = scmp.eq.s32.totalorder %s24, 0
    %p161 = por %p159, %p160
    %s163 = sadd.s32 %s162, 1
    %p166 = scmp.eq.s32.totalorder %s18, 1
    %p167 = scmp.ne.s32.totalorder %s162, %s164
    %p168 = scmp.eq.s32.totalorder %s18, 0
    %p169 = por %p167, %p168
    %p170 = scmp.ne.s32.totalorder %s162, %s164
    %p171 = scmp.eq.s32.totalorder %s23, 1
    %p172 = por %p170, %p171
    %p173 = scmp.ne.s32.totalorder %s164, %s165
    %p174 = scmp.eq.s32.totalorder %s23, 0
    %p175 = por %p173, %p174
    %p176 = scmp.ne.s32.totalorder %s164, %s165
    %p177 = scmp.eq.s32.totalorder %s24, 1
    %p178 = por %p176, %p177
    %p180 = scmp.ne.s32.totalorder %s165, %s179
    %p181 = scmp.eq.s32.totalorder %s24, 0
    %p182 = por %p180, %p181
    %s184 = sadd.s32 %s183, 1
    %p187 = scmp.eq.s32.totalorder %s18, 1
    %p188 = scmp.ne.s32.totalorder %s183, %s185
    %p189 = scmp.eq.s32.totalorder %s18, 0
    %p190 = por %p188, %p189
    %p191 = scmp.ne.s32.totalorder %s183, %s185
    %p192 = scmp.eq.s32.totalorder %s23, 1
    %p193 = por %p191, %p192
    %p194 = scmp.ne.s32.totalorder %s185, %s186
    %p195 = scmp.eq.s32.totalorder %s23, 0
    %p196 = por %p194, %p195
    %p197 = scmp.ne.s32.totalorder %s185, %s186
    %p198 = scmp.eq.s32.totalorder %s24, 1
    %p199 = por %p197, %p198
    %p201 = scmp.ne.s32.totalorder %s186, %s200
    %p202 = scmp.eq.s32.totalorder %s24, 0
    %p203 = por %p201, %p202
    %s205 = sadd.s32 %s204, 1
    %p208 = scmp.eq.s32.totalorder %s18, 1
    %p209 = scmp.ne.s32.totalorder %s204, %s206
    %p210 = scmp.eq.s32.totalorder %s18, 0
    %p211 = por %p209, %p210
    %p212 = scmp.ne.s32.totalorder %s204, %s206
    %p213 = scmp.eq.s32.totalorder %s23, 1
    %p214 = por %p212, %p213
    %p215 = scmp.ne.s32.totalorder %s206, %s207
    %p216 = scmp.eq.s32.totalorder %s23, 0
    %p217 = por %p215, %p216
    %p218 = scmp.ne.s32.totalorder %s206, %s207
    %p219 = scmp.eq.s32.totalorder %s24, 1
    %p220 = por %p218, %p219
    %p222 = scmp.ne.s32.totalorder %s207, %s221
    %p223 = scmp.eq.s32.totalorder %s24, 0
    %p224 = por %p222, %p223
    %s226 = sadd.s32 %s225, 1
    %p229 = scmp.eq.s32.totalorder %s18, 1
    %p230 = scmp.ne.s32.totalorder %s225, %s227
    %p231 = scmp.eq.s32.totalorder %s18, 0
    %p232 = por %p230, %p231
    %p233 = scmp.ne.s32.totalorder %s225, %s227
    %p234 = scmp.eq.s32.totalorder %s23, 1
    %p235 = por %p233, %p234
    %p236 = scmp.ne.s32.totalorder %s227, %s228
    %p237 = scmp.eq.s32.totalorder %s23, 0
    %p238 = por %p236, %p237
    %p239 = scmp.ne.s32.totalorder %s227, %s228
    %p240 = scmp.eq.s32.totalorder %s24, 1
    %p241 = por %p239, %p240
    %p243 = scmp.ne.s32.totalorder %s228, %s242
    %p244 = scmp.eq.s32.totalorder %s24, 0
    %p245 = por %p243, %p244
    %s247 = sadd.s32 %s246, 1
    %p250 = scmp.eq.s32.totalorder %s18, 1
    %p251 = scmp.ne.s32.totalorder %s246, %s248
    %p252 = scmp.eq.s32.totalorder %s18, 0
    %p253 = por %p251, %p252
    %p254 = scmp.ne.s32.totalorder %s246, %s248
    %p255 = scmp.eq.s32.totalorder %s23, 1
    %p256 = por %p254, %p255
    %p257 = scmp.ne.s32.totalorder %s248, %s249
    %p258 = scmp.eq.s32.totalorder %s23, 0
    %p259 = por %p257, %p258
    %p260 = scmp.ne.s32.totalorder %s248, %s249
    %p261 = scmp.eq.s32.totalorder %s24, 1
    %p262 = por %p260, %p261
    %p264 = scmp.ne.s32.totalorder %s249, %s263
    %p265 = scmp.eq.s32.totalorder %s24, 0
    %p266 = por %p264, %p265
    %s268 = sadd.s32 %s267, 1
    %p271 = scmp.eq.s32.totalorder %s18, 1
    %p272 = scmp.ne.s32.totalorder %s267, %s269
    %p273 = scmp.eq.s32.totalorder %s18, 0
    %p274 = por %p272, %p273
    %p275 = scmp.ne.s32.totalorder %s267, %s269
    %p276 = scmp.eq.s32.totalorder %s23, 1
    %p277 = por %p275, %p276
    %p278 = scmp.ne.s32.totalorder %s269, %s270
    %p279 = scmp.eq.s32.totalorder %s23, 0
    %p280 = por %p278, %p279
    %p281 = scmp.ne.s32.totalorder %s269, %s270
    %p282 = scmp.eq.s32.totalorder %s24, 1
    %p283 = por %p281, %p282
    %p285 = scmp.ne.s32.totalorder %s270, %s284
    %p286 = scmp.eq.s32.totalorder %s24, 0
    %p287 = por %p285, %p286
    %s288 = ssub.s32 %s18, %s25
    %p289 = scmp.eq.s32.totalorder %s288, 0
    %s291 = sadd.s32 %s290, 1
    %s292 = scalar_select %p289, %s290, %s291
    %p295 = pneg %p289
    %p296 = scmp.eq.s32.totalorder %s18, 1
    %p297 = por %p295, %p296
    %p298 = scmp.ne.s32.totalorder %s290, %s293
    %p299 = scmp.eq.s32.totalorder %s18, 0
    %p300 = por %p298, %p299
    %p301 = scmp.ne.s32.totalorder %s290, %s293
    %p302 = scmp.eq.s32.totalorder %s23, 1
    %p303 = por %p301, %p302
    %p304 = scmp.ne.s32.totalorder %s293, %s294
    %p305 = scmp.eq.s32.totalorder %s23, 0
    %p306 = por %p304, %p305
    %p307 = scmp.ne.s32.totalorder %s293, %s294
    %p308 = scmp.eq.s32.totalorder %s24, 1
    %p309 = por %p307, %p308
    %p311 = scmp.ne.s32.totalorder %s294, %s310
    %p312 = scmp.eq.s32.totalorder %s24, 0
    %p313 = por %p311, %p312
    %p314 = scmp.le.s32.totalorder 1, %s18
    %p315 = scmp.lt.s32.totalorder %s18, 3
    %p316 = pnand %p314, %p315
    %p317 = pneg %p316
    // Predicated region
    $region9: #{_lambda_.1} parent=5 // pred_check
      _
    $region10: #{_lambda_.1} parent=5 // pred_check_branch
      %319 = sbr.rel (%p316) target = $region12
    $region11: #{_lambda_.1} parent=5 // pred_region
      %s320 = ssub.s32 %s18, 1
      // Predicated region
      $region13: #{_lambda_.1} parent=11 // pred_check
        %p321 = pneg %p91
      $region14: #{_lambda_.1} parent=11 // pred_check_branch
        %323 = sbr.rel (%p321) target = $region16
      $region15: #{_lambda_.1} parent=11 // pred_region
        _
      $region16: #{_lambda_.1} parent=11 // pred_fallthru
        _
      // Predicated region
      $region17: #{_lambda_.1} parent=11 // pred_check
        %p324 = pneg %p112
      $region18: #{_lambda_.1} parent=11 // pred_check_branch
        %326 = sbr.rel (%p324) target = $region20
      $region19: #{_lambda_.1} parent=11 // pred_region
        _
      $region20: #{_lambda_.1} parent=11 // pred_fallthru
        _
      // Predicated region
      $region21: #{_lambda_.1} parent=11 // pred_check
        %p327 = pneg %p133
      $region22: #{_lambda_.1} parent=11 // pred_check_branch
        %329 = sbr.rel (%p327) target = $region24
      $region23: #{_lambda_.1} parent=11 // pred_region
        _
      $region24: #{_lambda_.1} parent=11 // pred_fallthru
        _
      // Predicated region
      $region25: #{_lambda_.1} parent=11 // pred_check
        %p330 = pneg %p154
      $region26: #{_lambda_.1} parent=11 // pred_check_branch
        %332 = sbr.rel (%p330) target = $region28
      $region27: #{_lambda_.1} parent=11 // pred_region
        _
      $region28: #{_lambda_.1} parent=11 // pred_fallthru
        _
      // Predicated region
      $region29: #{_lambda_.1} parent=11 // pred_check
        %p333 = pneg %p175
      $region30: #{_lambda_.1} parent=11 // pred_check_branch
        %335 = sbr.rel (%p333) target = $region32
      $region31: #{_lambda_.1} parent=11 // pred_region
        _
      $region32: #{_lambda_.1} parent=11 // pred_fallthru
        _
      // Predicated region
      $region33: #{_lambda_.1} parent=11 // pred_check
        %p336 = pneg %p196
      $region34: #{_lambda_.1} parent=11 // pred_check_branch
        %338 = sbr.rel (%p336) target = $region36
      $region35: #{_lambda_.1} parent=11 // pred_region
        _
      $region36: #{_lambda_.1} parent=11 // pred_fallthru
        _
      // Predicated region
      $region37: #{_lambda_.1} parent=11 // pred_check
        %p339 = pneg %p217
      $region38: #{_lambda_.1} parent=11 // pred_check_branch
        %341 = sbr.rel (%p339) target = $region40
      $region39: #{_lambda_.1} parent=11 // pred_region
        _
      $region40: #{_lambda_.1} parent=11 // pred_fallthru
        _
      // Predicated region
      $region41: #{_lambda_.1} parent=11 // pred_check
        %p342 = pneg %p238
      $region42: #{_lambda_.1} parent=11 // pred_check_branch
        %344 = sbr.rel (%p342) target = $region44
      $region43: #{_lambda_.1} parent=11 // pred_region
        _
      $region44: #{_lambda_.1} parent=11 // pred_fallthru
        _
      // Predicated region
      $region45: #{_lambda_.1} parent=11 // pred_check
        %p345 = pneg %p259
      $region46: #{_lambda_.1} parent=11 // pred_check_branch
        %347 = sbr.rel (%p345) target = $region48
      $region47: #{_lambda_.1} parent=11 // pred_region
        _
      $region48: #{_lambda_.1} parent=11 // pred_fallthru
        _
      // Predicated region
      $region49: #{_lambda_.1} parent=11 // pred_check
        %p348 = pneg %p280
      $region50: #{_lambda_.1} parent=11 // pred_check_branch
        %350 = sbr.rel (%p348) target = $region52
      $region51: #{_lambda_.1} parent=11 // pred_region
        _
      $region52: #{_lambda_.1} parent=11 // pred_fallthru
        _
    $region12: #{_lambda_.1} parent=5 // pred_fallthru
      _
    %p351 = scmp.lt.s32.totalorder %s18, 2
    // Predicated region
    $region53: #{_lambda_.1} parent=5 // pred_check
      %p352 = pneg %p351
    $region54: #{_lambda_.1} parent=5 // pred_check_branch
      %354 = sbr.rel (%p352) target = $region56
    $region55: #{_lambda_.1} parent=5 // pred_region
      // Predicated region
      $region57: #{_lambda_.1} parent=55 // pred_check
        %p355 = pneg %p38
      $region58: #{_lambda_.1} parent=55 // pred_check_branch
        %357 = sbr.rel (%p355) target = $region60
      $region59: #{_lambda_.1} parent=55 // pred_region
        %p358 = scmp.lt.s32.totalorder %s18, 1
        %s359 = scalar_select %p358, %s18, 1
        %s360 = smul.addr %s359, 2
        %s361 = smul.addr %s360, 4
        %s362 = scalar_lea.vmem %s0, %s361
      $region60: #{_lambda_.1} parent=55 // pred_fallthru
        _
      // Predicated region
      $region61: #{_lambda_.1} parent=55 // pred_check
        %p363 = pneg %p64
      $region62: #{_lambda_.1} parent=55 // pred_check_branch
        %365 = sbr.rel (%p363) target = $region64
      $region63: #{_lambda_.1} parent=55 // pred_region
        %p366 = scmp.lt.s32.totalorder %s18, 1
        %s367 = scalar_select %p366, %s18, 1
        %s368 = smul.addr %s367, 2
        %s369 = smul.addr %s368, 4
        %s370 = scalar_lea.vmem %s1, %s369
      $region64: #{_lambda_.1} parent=55 // pred_fallthru
        _
    $region56: #{_lambda_.1} parent=5 // pred_fallthru
      _
    %p371 = scmp.le.s32.totalorder 1, %s18
    %p372 = scmp.lt.s32.totalorder %s18, 3
    %p373 = pnand %p371, %p372
    %p374 = pneg %p373
    // Predicated region
    $region65: #{_lambda_.1} parent=5 // pred_check
      _
    $region66: #{_lambda_.1} parent=5 // pred_check_branch
      %376 = sbr.rel (%p373) target = $region68
    $region67: #{_lambda_.1} parent=5 // pred_region
      %s377 = ssub.s32 %s18, 1
      %p378 = scmp.lt.s32.totalorder %s23, 1
      %s379 = scalar_select %p378, %s23, 1
      %s380 = smul.addr %s379, 2
      %s381 = smul.addr %s380, 4
      %s382 = scalar_lea.vmem %s0, %s381
      %p383 = pneg %p44
      %p384 = pneg %p41
      %p385 = scmp.lt.s32.totalorder %s23, 1
      %s386 = scalar_select %p385, %s23, 1
      %s387 = smul.addr %s386, 2
      %s388 = smul.addr %s387, 4
      %s389 = scalar_lea.vmem %s1, %s388
      %p390 = pneg %p70
      %p391 = pneg %p67
      %p392 = pneg %p91
      %p393 = pneg %p88
      %p394 = pneg %p112
      %p395 = pneg %p109
      %p396 = pneg %p133
      %p397 = pneg %p130
      %p398 = pneg %p154
      %p399 = pneg %p151
      %p400 = pneg %p175
      %p401 = pneg %p172
      %p402 = pneg %p196
      %p403 = pneg %p193
      %p404 = pneg %p217
      %p405 = pneg %p214
      %p406 = pneg %p238
      %p407 = pneg %p235
      %p408 = pneg %p259
      %p409 = pneg %p256
      %p410 = pneg %p280
      %p411 = pneg %p277
      %p412 = pneg %p306
      %p413 = pneg %p303
      %p414 = scmp.lt.s32.totalorder %s23, 1
      %s415 = scalar_select %p414, %s23, 1
      %s416 = smul.addr %s415, 2
      %s417 = smul.addr %s416, 4
      %s418 = scalar_lea.vmem %s12, %s417
      %p419 = scmp.lt.s32.totalorder %s23, 1
      %s420 = scalar_select %p419, %s23, 1
      %s421 = smul.addr %s420, 2
      %s422 = smul.addr %s421, 4
      %s423 = scalar_lea.vmem %s0, %s422
      %p424 = scmp.lt.s32.totalorder %s23, 1
      %s425 = scalar_select %p424, %s23, 1
      %s426 = smul.addr %s425, 2
      %s427 = smul.addr %s426, 4
      %s428 = scalar_lea.vmem %s1, %s427
      %p429 = scmp.lt.s32.totalorder %s23, 1
      %s430 = scalar_select %p429, %s23, 1
      %s431 = smul.addr %s430, 2
      %s432 = smul.addr %s431, 4
      %s433 = scalar_lea.vmem %s12, %s432
      %437 = vst [vmem:[#allocation2] sm:$0xff] 0
      %438 = vst [vmem:[#allocation2 + $0x18] sm:$0xff] 0
      %v439 = vlaneseq
      %v440 = vand.u32 %v439, 127
      %v441 = vadd.s32 %v440, 128
      %vm442 = vcmp.lt.s32.totalorder %v440, 0
      %v443 = vsub.s32 0, %v440
      %v444 = vsel %vm442, %v443, %v440
      %v445 = vshrl.u32 %v444, 4
      %v446 = vand.u32 %v444, 15
      %v447 = vsub.s32 0, %v446
      %v448 = vsel %vm442, %v447, %v446
      %vm449 = vcmp.lt.s32.totalorder %v441, 0
      %v450 = vsub.s32 0, %v441
      %v451 = vsel %vm449, %v450, %v441
      %v452 = vshrl.u32 %v451, 4
      %v453 = vand.u32 %v451, 15
      %v454 = vsub.s32 0, %v453
      %v455 = vsel %vm449, %v454, %v453
      %vm456 = vcmp.ne.s32.totalorder %v448, 0
      %vm457 = vcmp.ne.s32.totalorder %v455, 0
      %vm458 = vcmp.lt.s32.totalorder %v448, 0
      %vm459 = vcmp.lt.s32.totalorder %v455, 0
      %vm460 = vmand %vm458, %vm456
      %vm461 = vmand %vm459, %vm457
      %v462 = vadd.s32 %v448, 16
      %v463 = vadd.s32 %v455, 16
      %v464 = vsel %vm460, %v462, %v448
      %v465 = vsel %vm461, %v463, %v455
      %vm466 = vcmp.ne.s32.totalorder %v464, 0
      %vm467 = vcmp.ne.s32.totalorder %v465, 0
      %vm468 = vcmp.ne.s32.totalorder %v464, 15
      %vm469 = vcmp.ne.s32.totalorder %v465, 15
      %v470 = vld [vmem:[%s423] sm:$0xff]
      %v471 = vld [vmem:[%s428] sm:$0xff]
      %v472 = vsub.f32 %v470, %v471
      %v473 = vand.u32 2147483647, %v472
      %v474 = vsub.f32 %v473, 0.05
      %v475 = vmax.f32 %v474, 0.0
      %v476 = vmul.f32 %v475, 20.0
      %v477 = vmul.f32 %v476, %v476
      %v478 = vtanh.pop %v477
      %v479 = vsub.f32 1.0, %v478
      %v481 = vcombine.high %v479, %v479
      %vm483 = vcmask 1043456
      %v484 = vsel %vm483, %v479, 0.0
      %v485 = vsel %vm483, %v481, 0.0
      %v486 = vld [vmem:[%s2] sm:$0xff]
      %v487 = vld [vmem:[%s2 + $0x8] sm:$0xff]
      %v488 = vld [vmem:[%s3] sm:$0xff]
      %v489 = vld [vmem:[%s3 + $0x8] sm:$0xff]
      %v490 = vpack.c.bf16 0.0, %v484
      %v491 = vpack.c.bf16 0.0, %v485
      %492 = vst [vmem:[#allocation2 + $0x8] sm:$0xff] %v490
      %493 = vst [vmem:[#allocation2 + $0x10] sm:$0xff] %v491
      %v494 = vld [vmem:[#allocation2] sm:$0xff]
      %v495 = vld [vmem:[#allocation2 + $0x8] sm:$0xff]
      %v496 = vld [vmem:[#allocation2 + $0x10] sm:$0xff]
      %v497 = vsel %vm466, 1, 0
      %v498 = vsel %vm467, 1, 0
      %vm499 = vcmp.eq.s32.totalorder %v497, 1
      %vm500 = vcmp.eq.s32.totalorder %v498, 1
      %vm501 = vmpackc.low %vm500, %vm499
      %v502 = vsel %vm501, 65537, 0
      %v503 = vlaneseq
      %v504 = vshrl.u32 %v503, 7
      %v505 = vsub.s32 0, %v504
      %v506 = vrot.slane %v502, %v505
      %v507 = vlaneseq
      %v508 = vshrl.u32 %v507, 7
      %v509 = vsub.s32 4, %v508
      %v510 = vrot.slane %v502, %v509
      %511 = vrot.lane.b32.xlu0 %v506, 111
      %v512 = vpop.permute.xlu0 %511
      %513 = vrot.lane.b32.xlu0 %v510, 111
      %v514 = vpop.permute.xlu0 %513
      %vm515 = vcmask 908288
      %v516 = vsel %vm515, %v512, %v514
      %vm517 = vcmp.ne.s16.totalorder %v512, 0
      %vm518 = vcmp.ne.s16.totalorder %v516, 0
      %vm519 = vcmp.ne.s16.totalorder %v514, 0
      %v520 = vsel %vm517, %v494, 0
      %v521 = vsel %vm518, %v495, 0
      %v522 = vsel %vm519, %v496, 0
      %526 = vrot.lane.b32.xlu0 %v520, 17
      %v527 = vpop.permute.xlu0 %526
      %528 = vrot.lane.b32.xlu0 %v521, 17
      %v529 = vpop.permute.xlu0 %528
      %530 = vrot.lane.b32.xlu0 %v522, 17
      %v531 = vpop.permute.xlu0 %530
      %vm532 = vcmask 138240
      %v533 = vsel %vm532, %v527, %v529
      %v534 = vsel %vm532, %v529, %v531
      %537 = vst [vmem:[#allocation3] sm:$0xff] %v533
      %538 = vst [vmem:[#allocation3 + $0x8] sm:$0xff] %v534
      %v539 = vld [vmem:[#allocation2] sm:$0xff]
      %v540 = vld [vmem:[#allocation2 + $0x8] sm:$0xff]
      %v541 = vld [vmem:[#allocation2 + $0x10] sm:$0xff]
      %545 = vrot.lane.b32.xlu0 %v539, 16
      %v546 = vpop.permute.xlu0 %545
      %547 = vrot.lane.b32.xlu0 %v540, 16
      %v548 = vpop.permute.xlu0 %547
      %549 = vrot.lane.b32.xlu0 %v541, 16
      %v550 = vpop.permute.xlu0 %549
      %vm551 = vcmask 130048
      %v552 = vsel %vm551, %v546, %v548
      %v553 = vsel %vm551, %v548, %v550
      %556 = vst [vmem:[#allocation3 + $0x10] sm:$0xff] %v552
      %557 = vst [vmem:[#allocation3 + $0x18] sm:$0xff] %v553
      %v558 = vld [vmem:[#allocation2] sm:$0xff]
      %v559 = vld [vmem:[#allocation2 + $0x8] sm:$0xff]
      %v560 = vld [vmem:[#allocation2 + $0x10] sm:$0xff]
      %v561 = vsel %vm468, 1, 0
      %v562 = vsel %vm469, 1, 0
      %vm563 = vcmp.eq.s32.totalorder %v561, 1
      %vm564 = vcmp.eq.s32.totalorder %v562, 1
      %vm565 = vmpackc.low %vm564, %vm563
      %v566 = vsel %vm565, 65537, 0
      %v567 = vlaneseq
      %v568 = vshrl.u32 %v567, 7
      %v569 = vsub.s32 0, %v568
      %v570 = vrot.slane %v566, %v569
      %v571 = vlaneseq
      %v572 = vshrl.u32 %v571, 7
      %v573 = vsub.s32 4, %v572
      %v574 = vrot.slane %v566, %v573
      %575 = vrot.lane.b32.xlu0 %v570, 113
      %v576 = vpop.permute.xlu0 %575
      %577 = vrot.lane.b32.xlu0 %v574, 113
      %v578 = vpop.permute.xlu0 %577
      %vm579 = vcmask 924672
      %v580 = vsel %vm579, %v576, %v578
      %vm581 = vcmp.ne.s16.totalorder %v576, 0
      %vm582 = vcmp.ne.s16.totalorder %v580, 0
      %vm583 = vcmp.ne.s16.totalorder %v578, 0
      %v584 = vsel %vm581, %v558, 0
      %v585 = vsel %vm582, %v559, 0
      %v586 = vsel %vm583, %v560, 0
      %590 = vrot.lane.b32.xlu0 %v584, 15
      %v591 = vpop.permute.xlu0 %590
      %592 = vrot.lane.b32.xlu0 %v585, 15
      %v593 = vpop.permute.xlu0 %592
      %594 = vrot.lane.b32.xlu0 %v586, 15
      %v595 = vpop.permute.xlu0 %594
      %vm596 = vcmask 121856
      %v597 = vsel %vm596, %v591, %v593
      %v598 = vsel %vm596, %v593, %v595
      %601 = vst [vmem:[#allocation3 + $0x20] sm:$0xff] %v597
      %602 = vst [vmem:[#allocation3 + $0x28] sm:$0xff] %v598
      %v603 = vld [vmem:[#allocation2] sm:$0xff]
      %v604 = vld [vmem:[#allocation2 + $0x8] sm:$0xff]
      %v605 = vld [vmem:[#allocation2 + $0x10] sm:$0xff]
      %606 = vrot.lane.b32.xlu0 %v506, 127
      %v607 = vpop.permute.xlu0 %606
      %608 = vrot.lane.b32.xlu0 %v510, 127
      %v609 = vpop.permute.xlu0 %608
      %vm610 = vcmask 1039360
      %v611 = vsel %vm610, %v607, %v609
      %vm612 = vcmp.ne.s16.totalorder %v607, 0
      %vm613 = vcmp.ne.s16.totalorder %v611, 0
      %vm614 = vcmp.ne.s16.totalorder %v609, 0
      %v615 = vsel %vm612, %v603, 0
      %v616 = vsel %vm613, %v604, 0
      %v617 = vsel %vm614, %v605, 0
      %621 = vrot.lane.b32.xlu0 %v615, 1
      %v622 = vpop.permute.xlu0 %621
      %623 = vrot.lane.b32.xlu0 %v616, 1
      %v624 = vpop.permute.xlu0 %623
      %625 = vrot.lane.b32.xlu0 %v617, 1
      %v626 = vpop.permute.xlu0 %625
      %vm627 = vcmask 7168
      %v628 = vsel %vm627, %v622, %v624
      %v629 = vsel %vm627, %v624, %v626
      %632 = vst [vmem:[#allocation3 + $0x30] sm:$0xff] %v628
      %633 = vst [vmem:[#allocation3 + $0x38] sm:$0xff] %v629
      %v634 = vld [vmem:[#allocation2 + $0x8] sm:$0xff]
      %v635 = vld [vmem:[#allocation2 + $0x10] sm:$0xff]
      %636 = vst [vmem:[#allocation3 + $0x40] sm:$0xff] %v634
      %637 = vst [vmem:[#allocation3 + $0x48] sm:$0xff] %v635
      %v638 = vld [vmem:[#allocation2 + $0x8] sm:$0xff]
      %v639 = vld [vmem:[#allocation2 + $0x10] sm:$0xff]
      %v640 = vld [vmem:[#allocation2 + $0x18] sm:$0xff]
      %641 = vrot.lane.b32.xlu0 %v570, 1
      %v642 = vpop.permute.xlu0 %641
      %643 = vrot.lane.b32.xlu0 %v574, 1
      %v644 = vpop.permute.xlu0 %643
      %v645 = vsel %vm627, %v642, %v644
      %vm646 = vcmp.ne.s16.totalorder %v642, 0
      %vm647 = vcmp.ne.s16.totalorder %v645, 0
      %vm648 = vcmp.ne.s16.totalorder %v644, 0
      %v649 = vsel %vm646, %v638, 0
      %v650 = vsel %vm647, %v639, 0
      %v651 = vsel %vm648, %v640, 0
      %655 = vrot.lane.b32.xlu0 %v649, 127
      %v656 = vpop.permute.xlu0 %655
      %657 = vrot.lane.b32.xlu0 %v650, 127
      %v658 = vpop.permute.xlu0 %657
      %659 = vrot.lane.b32.xlu0 %v651, 127
      %v660 = vpop.permute.xlu0 %659
      %v661 = vsel %vm610, %v656, %v658
      %v662 = vsel %vm610, %v658, %v660
      %665 = vst [vmem:[#allocation3 + $0x50] sm:$0xff] %v661
      %666 = vst [vmem:[#allocation3 + $0x58] sm:$0xff] %v662
      %v667 = vld [vmem:[#allocation2 + $0x8] sm:$0xff]
      %v668 = vld [vmem:[#allocation2 + $0x10] sm:$0xff]
      %v669 = vld [vmem:[#allocation2 + $0x18] sm:$0xff]
      %670 = vrot.lane.b32.xlu0 %v506, 15
      %v671 = vpop.permute.xlu0 %670
      %672 = vrot.lane.b32.xlu0 %v510, 15
      %v673 = vpop.permute.xlu0 %672
      %v674 = vsel %vm596, %v671, %v673
      %vm675 = vcmp.ne.s16.totalorder %v671, 0
      %vm676 = vcmp.ne.s16.totalorder %v674, 0
      %vm677 = vcmp.ne.s16.totalorder %v673, 0
      %v678 = vsel %vm675, %v667, 0
      %v679 = vsel %vm676, %v668, 0
      %v680 = vsel %vm677, %v669, 0
      %684 = vrot.lane.b32.xlu0 %v678, 113
      %v685 = vpop.permute.xlu0 %684
      %686 = vrot.lane.b32.xlu0 %v679, 113
      %v687 = vpop.permute.xlu0 %686
      %688 = vrot.lane.b32.xlu0 %v680, 113
      %v689 = vpop.permute.xlu0 %688
      %v690 = vsel %vm579, %v685, %v687
      %v691 = vsel %vm579, %v687, %v689
      %694 = vst [vmem:[#allocation3 + $0x60] sm:$0xff] %v690
      %695 = vst [vmem:[#allocation3 + $0x68] sm:$0xff] %v691
      %v696 = vld [vmem:[#allocation2 + $0x8] sm:$0xff]
      %v697 = vld [vmem:[#allocation2 + $0x10] sm:$0xff]
      %v698 = vld [vmem:[#allocation2 + $0x18] sm:$0xff]
      %702 = vrot.lane.b32.xlu0 %v696, 112
      %v703 = vpop.permute.xlu0 %702
      %704 = vrot.lane.b32.xlu0 %v697, 112
      %v705 = vpop.permute.xlu0 %704
      %706 = vrot.lane.b32.xlu0 %v698, 112
      %v707 = vpop.permute.xlu0 %706
      %vm708 = vcmask 916480
      %v709 = vsel %vm708, %v703, %v705
      %v710 = vsel %vm708, %v705, %v707
      %713 = vst [vmem:[#allocation3 + $0x70] sm:$0xff] %v709
      %714 = vst [vmem:[#allocation3 + $0x78] sm:$0xff] %v710
      %v715 = vld [vmem:[#allocation2 + $0x8] sm:$0xff]
      %v716 = vld [vmem:[#allocation2 + $0x10] sm:$0xff]
      %v717 = vld [vmem:[#allocation2 + $0x18] sm:$0xff]
      %718 = vrot.lane.b32.xlu0 %v570, 17
      %v719 = vpop.permute.xlu0 %718
      %720 = vrot.lane.b32.xlu0 %v574, 17
      %v721 = vpop.permute.xlu0 %720
      %v722 = vsel %vm532, %v719, %v721
      %vm723 = vcmp.ne.s16.totalorder %v719, 0
      %vm724 = vcmp.ne.s16.totalorder %v722, 0
      %vm725 = vcmp.ne.s16.totalorder %v721, 0
      %v726 = vsel %vm723, %v715, 0
      %v727 = vsel %vm724, %v716, 0
      %v728 = vsel %vm725, %v717, 0
      %732 = vrot.lane.b32.xlu0 %v726, 111
      %v733 = vpop.permute.xlu0 %732
      %734 = vrot.lane.b32.xlu0 %v727, 111
      %v735 = vpop.permute.xlu0 %734
      %736 = vrot.lane.b32.xlu0 %v728, 111
      %v737 = vpop.permute.xlu0 %736
      %v738 = vsel %vm515, %v733, %v735
      %v739 = vsel %vm515, %v735, %v737
      %742 = vst [vmem:[#allocation3 + $0x80] sm:$0xff] %v738
      %743 = vst [vmem:[#allocation3 + $0x88] sm:$0xff] %v739
      %v744 = vld [vmem:[#allocation3] sm:$0xff]
      %v745 = vld [vmem:[#allocation3 + $0x8] sm:$0xff]
      %v746 = vld [vmem:[#allocation3 + $0x10] sm:$0xff]
      %v747 = vld [vmem:[#allocation3 + $0x18] sm:$0xff]
      %v748 = vld [vmem:[#allocation3 + $0x20] sm:$0xff]
      %v749 = vld [vmem:[#allocation3 + $0x28] sm:$0xff]
      %v750 = vld [vmem:[#allocation3 + $0x30] sm:$0xff]
      %v751 = vld [vmem:[#allocation3 + $0x38] sm:$0xff]
      %v752 = vld [vmem:[#allocation3 + $0x40] sm:$0xff]
      %v753 = vld [vmem:[#allocation3 + $0x48] sm:$0xff]
      %v754 = vld [vmem:[#allocation3 + $0x50] sm:$0xff]
      %v755 = vld [vmem:[#allocation3 + $0x58] sm:$0xff]
      %v756 = vld [vmem:[#allocation3 + $0x60] sm:$0xff]
      %v757 = vld [vmem:[#allocation3 + $0x68] sm:$0xff]
      %v758 = vld [vmem:[#allocation3 + $0x70] sm:$0xff]
      %v759 = vld [vmem:[#allocation3 + $0x78] sm:$0xff]
      %v760 = vld [vmem:[#allocation3 + $0x80] sm:$0xff]
      %v761 = vld [vmem:[#allocation3 + $0x88] sm:$0xff]
      %763 = vset.pattern.permute.xlu0 0
      %764 = vperm.xlu0 %763, %v488
      %v765 = vpop.permute.xlu0 %764
      %768 = vset.pattern.permute.xlu0 0
      %769 = vperm.xlu0 %768, %v489
      %v770 = vpop.permute.xlu0 %769
      %v774 = vunpack.c.l.b16 %v486
      %v775 = vunpack.c.h.b16 %v486
      %v776 = vunpack.c.l.b16 %v487
      %v777 = vunpack.c.h.b16 %v487
      %v778 = vpack.c.b16 %v776, %v774
      %v779 = vpack.c.b16 %v777, %v775
      %vm781 = vcmask 130048
      %v783 = vsel %vm781, %v779, 0
      %785 = vmatprep.subr.bf16.mxu0 %v745
      %786 = vmatpush1.bf16.msra.mxu0 %v744
      %787 = vmatprep.subr.bf16.mxu0 %v747
      %788 = vmatpush1.bf16.msra.mxu0 %v746
      %789 = vmatprep.subr.bf16.mxu0 %v749
      %790 = vmatpush1.bf16.msra.mxu0 %v748
      %791 = vmatprep.subr.bf16.mxu0 %v751
      %792 = vmatpush1.bf16.msra.mxu0 %v750
      %793 = vmatprep.subr.bf16.mxu0 %v753
      %794 = vmatpush1.bf16.msra.mxu0 %v752
      %795 = vmatprep.subr.bf16.mxu0 %v755
      %796 = vmatpush1.bf16.msra.mxu0 %v754
      %797 = vmatprep.subr.bf16.mxu0 %v757
      %798 = vmatpush1.bf16.msra.mxu0 %v756
      %799 = vmatprep.subr.bf16.mxu0 %v759
      %800 = vmatpush1.bf16.msra.mxu0 %v758
      %801 = vmatprep.subr.bf16.mxu0 %v761
      %802 = vmatpush1.bf16.msra.mxu0 %v760
      %803 = vmatprep.subr.bf16.mxu0 0
      %804 = vmatpush1.bf16.msra.mxu0 0
      %805 = vmatprep.subr.bf16.mxu0 0
      %806 = vmatpush1.bf16.msra.mxu0 0
      %807 = vmatprep.subr.bf16.mxu0 0
      %808 = vmatpush1.bf16.msra.mxu0 0
      %809 = vmatprep.subr.bf16.mxu0 0
      %810 = vmatpush1.bf16.msra.mxu0 0
      %811 = vmatprep.subr.bf16.mxu0 0
      %812 = vmatpush1.bf16.msra.mxu0 0
      %813 = vmatprep.subr.bf16.mxu0 0
      %814 = vmatpush1.bf16.msra.mxu0 0
      %815 = vmatprep.subr.bf16.mxu0 0
      %816 = vmatpush1.bf16.msra.mxu0 0
      %817 = vmatprep.mubr.bf16.mxu0 %v783
      %818 = vmatmul.mubr.bf16.gmra.mrb[0].mxu0 %v778
      %v819 = vpop.f32.mrb[0].mxu0
      %v820 = vadd.f32 %v765, %v819
      %v821 = vpop.f32.mrb[0].mxu0
      %v822 = vadd.f32 %v765, %v821
      %v823 = vpop.f32.mrb[0].mxu0
      %v824 = vadd.f32 %v770, %v823
      %v825 = vpop.f32.mrb[0].mxu0
      %v826 = vadd.f32 %v770, %v825
      %827 = vdwg.mxu0
      %v828 = vld [vmem:[%s4] sm:$0xff]
      %v829 = vld [vmem:[%s4 + $0x8] sm:$0xff]
      %v830 = vld [vmem:[%s5] sm:$0xff]
      %v831 = vld [vmem:[%s5 + $0x8] sm:$0xff]
      %v832 = vpack.c.bf16 %v824, %v820
      %v833 = vpack.c.bf16 %v826, %v822
      %834 = vst [vmem:[#allocation2 + $0x8] sm:$0xff] %v832
      %835 = vst [vmem:[#allocation2 + $0x10] sm:$0xff] %v833
      %v836 = vld [vmem:[#allocation2] sm:$0xff]
      %v837 = vld [vmem:[#allocation2 + $0x8] sm:$0xff]
      %v838 = vld [vmem:[#allocation2 + $0x10] sm:$0xff]
      %v839 = vsel %vm517, %v836, 0
      %v840 = vsel %vm518, %v837, 0
      %v841 = vsel %vm519, %v838, 0
      %845 = vrot.lane.b32.xlu0 %v839, 17
      %v846 = vpop.permute.xlu0 %845
      %847 = vrot.lane.b32.xlu0 %v840, 17
      %v848 = vpop.permute.xlu0 %847
      %849 = vrot.lane.b32.xlu0 %v841, 17
      %v850 = vpop.permute.xlu0 %849
      %v851 = vsel %vm532, %v846, %v848
      %v852 = vsel %vm532, %v848, %v850
      %855 = vst [vmem:[#allocation3] sm:$0xff] %v851
      %856 = vst [vmem:[#allocation3 + $0x8] sm:$0xff] %v852
      %v857 = vld [vmem:[#allocation2] sm:$0xff]
      %v858 = vld [vmem:[#allocation2 + $0x8] sm:$0xff]
      %v859 = vld [vmem:[#allocation2 + $0x10] sm:$0xff]
      %863 = vrot.lane.b32.xlu0 %v857, 16
      %v864 = vpop.permute.xlu0 %863
      %865 = vrot.lane.b32.xlu0 %v858, 16
      %v866 = vpop.permute.xlu0 %865
      %867 = vrot.lane.b32.xlu0 %v859, 16
      %v868 = vpop.permute.xlu0 %867
      %v869 = vsel %vm551, %v864, %v866
      %v870 = vsel %vm551, %v866, %v868
      %873 = vst [vmem:[#allocation3 + $0x10] sm:$0xff] %v869
      %874 = vst [vmem:[#allocation3 + $0x18] sm:$0xff] %v870
      %v875 = vld [vmem:[#allocation2] sm:$0xff]
      %v876 = vld [vmem:[#allocation2 + $0x8] sm:$0xff]
      %v877 = vld [vmem:[#allocation2 + $0x10] sm:$0xff]
      %v878 = vsel %vm581, %v875, 0
      %v879 = vsel %vm582, %v876, 0
      %v880 = vsel %vm583, %v877, 0
      %884 = vrot.lane.b32.xlu0 %v878, 15
      %v885 = vpop.permute.xlu0 %884
      %886 = vrot.lane.b32.xlu0 %v879, 15
      %v887 = vpop.permute.xlu0 %886
      %888 = vrot.lane.b32.xlu0 %v880, 15
      %v889 = vpop.permute.xlu0 %888
      %v890 = vsel %vm596, %v885, %v887
      %v891 = vsel %vm596, %v887, %v889
      %894 = vst [vmem:[#allocation3 + $0x20] sm:$0xff] %v890
      %895 = vst [vmem:[#allocation3 + $0x28] sm:$0xff] %v891
      %v896 = vld [vmem:[#allocation2] sm:$0xff]
      %v897 = vld [vmem:[#allocation2 + $0x8] sm:$0xff]
      %v898 = vld [vmem:[#allocation2 + $0x10] sm:$0xff]
      %v899 = vsel %vm612, %v896, 0
      %v900 = vsel %vm613, %v897, 0
      %v901 = vsel %vm614, %v898, 0
      %905 = vrot.lane.b32.xlu0 %v899, 1
      %v906 = vpop.permute.xlu0 %905
      %907 = vrot.lane.b32.xlu0 %v900, 1
      %v908 = vpop.permute.xlu0 %907
      %909 = vrot.lane.b32.xlu0 %v901, 1
      %v910 = vpop.permute.xlu0 %909
      %v911 = vsel %vm627, %v906, %v908
      %v912 = vsel %vm627, %v908, %v910
      %915 = vst [vmem:[#allocation3 + $0x30] sm:$0xff] %v911
      %916 = vst [vmem:[#allocation3 + $0x38] sm:$0xff] %v912
      %v917 = vld [vmem:[#allocation2 + $0x8] sm:$0xff]
      %v918 = vld [vmem:[#allocation2 + $0x10] sm:$0xff]
      %919 = vst [vmem:[#allocation3 + $0x40] sm:$0xff] %v917
      %920 = vst [vmem:[#allocation3 + $0x48] sm:$0xff] %v918
      %v921 = vld [vmem:[#allocation2 + $0x8] sm:$0xff]
      %v922 = vld [vmem:[#allocation2 + $0x10] sm:$0xff]
      %v923 = vld [vmem:[#allocation2 + $0x18] sm:$0xff]
      %v924 = vsel %vm646, %v921, 0
      %v925 = vsel %vm647, %v922, 0
      %v926 = vsel %vm648, %v923, 0
      %930 = vrot.lane.b32.xlu0 %v924, 127
      %v931 = vpop.permute.xlu0 %930
      %932 = vrot.lane.b32.xlu0 %v925, 127
      %v933 = vpop.permute.xlu0 %932
      %934 = vrot.lane.b32.xlu0 %v926, 127
      %v935 = vpop.permute.xlu0 %934
      %v936 = vsel %vm610, %v931, %v933
      %v937 = vsel %vm610, %v933, %v935
      %940 = vst [vmem:[#allocation3 + $0x50] sm:$0xff] %v936
      %941 = vst [vmem:[#allocation3 + $0x58] sm:$0xff] %v937
      %v942 = vld [vmem:[#allocation2 + $0x8] sm:$0xff]
      %v943 = vld [vmem:[#allocation2 + $0x10] sm:$0xff]
      %v944 = vld [vmem:[#allocation2 + $0x18] sm:$0xff]
      %v945 = vsel %vm675, %v942, 0
      %v946 = vsel %vm676, %v943, 0
      %v947 = vsel %vm677, %v944, 0
      %951 = vrot.lane.b32.xlu0 %v945, 113
      %v952 = vpop.permute.xlu0 %951
      %953 = vrot.lane.b32.xlu0 %v946, 113
      %v954 = vpop.permute.xlu0 %953
      %955 = vrot.lane.b32.xlu0 %v947, 113
      %v956 = vpop.permute.xlu0 %955
      %v957 = vsel %vm579, %v952, %v954
      %v958 = vsel %vm579, %v954, %v956
      %961 = vst [vmem:[#allocation3 + $0x60] sm:$0xff] %v957
      %962 = vst [vmem:[#allocation3 + $0x68] sm:$0xff] %v958
      %v963 = vld [vmem:[#allocation2 + $0x8] sm:$0xff]
      %v964 = vld [vmem:[#allocation2 + $0x10] sm:$0xff]
      %v965 = vld [vmem:[#allocation2 + $0x18] sm:$0xff]
      %969 = vrot.lane.b32.xlu0 %v963, 112
      %v970 = vpop.permute.xlu0 %969
      %971 = vrot.lane.b32.xlu0 %v964, 112
      %v972 = vpop.permute.xlu0 %971
      %973 = vrot.lane.b32.xlu0 %v965, 112
      %v974 = vpop.permute.xlu0 %973
      %v975 = vsel %vm708, %v970, %v972
      %v976 = vsel %vm708, %v972, %v974
      %979 = vst [vmem:[#allocation3 + $0x70] sm:$0xff] %v975
      %980 = vst [vmem:[#allocation3 + $0x78] sm:$0xff] %v976
      %v981 = vld [vmem:[#allocation2 + $0x8] sm:$0xff]
      %v982 = vld [vmem:[#allocation2 + $0x10] sm:$0xff]
      %v983 = vld [vmem:[#allocation2 + $0x18] sm:$0xff]
      %v984 = vsel %vm723, %v981, 0
      %v985 = vsel %vm724, %v982, 0
      %v986 = vsel %vm725, %v983, 0
      %990 = vrot.lane.b32.xlu0 %v984, 111
      %v991 = vpop.permute.xlu0 %990
      %992 = vrot.lane.b32.xlu0 %v985, 111
      %v993 = vpop.permute.xlu0 %992
      %994 = vrot.lane.b32.xlu0 %v986, 111
      %v995 = vpop.permute.xlu0 %994
      %v996 = vsel %vm515, %v991, %v993
      %v997 = vsel %vm515, %v993, %v995
      %1000 = vst [vmem:[#allocation3 + $0x80] sm:$0xff] %v996
      %1001 = vst [vmem:[#allocation3 + $0x88] sm:$0xff] %v997
      %v1002 = vld [vmem:[#allocation3] sm:$0xff]
      %v1003 = vld [vmem:[#allocation3 + $0x8] sm:$0xff]
      %v1004 = vld [vmem:[#allocation3 + $0x10] sm:$0xff]
      %v1005 = vld [vmem:[#allocation3 + $0x18] sm:$0xff]
      %v1006 = vld [vmem:[#allocation3 + $0x20] sm:$0xff]
      %v1007 = vld [vmem:[#allocation3 + $0x28] sm:$0xff]
      %v1008 = vld [vmem:[#allocation3 + $0x30] sm:$0xff]
      %v1009 = vld [vmem:[#allocation3 + $0x38] sm:$0xff]
      %v1010 = vld [vmem:[#allocation3 + $0x40] sm:$0xff]
      %v1011 = vld [vmem:[#allocation3 + $0x48] sm:$0xff]
      %v1012 = vld [vmem:[#allocation3 + $0x50] sm:$0xff]
      %v1013 = vld [vmem:[#allocation3 + $0x58] sm:$0xff]
      %v1014 = vld [vmem:[#allocation3 + $0x60] sm:$0xff]
      %v1015 = vld [vmem:[#allocation3 + $0x68] sm:$0xff]
      %v1016 = vld [vmem:[#allocation3 + $0x70] sm:$0xff]
      %v1017 = vld [vmem:[#allocation3 + $0x78] sm:$0xff]
      %v1018 = vld [vmem:[#allocation3 + $0x80] sm:$0xff]
      %v1019 = vld [vmem:[#allocation3 + $0x88] sm:$0xff]
      %1021 = vset.pattern.permute.xlu0 0
      %1022 = vperm.xlu0 %1021, %v830
      %v1023 = vpop.permute.xlu0 %1022
      %1026 = vset.pattern.permute.xlu0 0
      %1027 = vperm.xlu0 %1026, %v831
      %v1028 = vpop.permute.xlu0 %1027
      %v1032 = vunpack.c.l.b16 %v828
      %v1033 = vunpack.c.h.b16 %v828
      %v1034 = vunpack.c.l.b16 %v829
      %v1035 = vunpack.c.h.b16 %v829
      %v1036 = vpack.c.b16 %v1034, %v1032
      %v1037 = vpack.c.b16 %v1035, %v1033
      %v1040 = vsel %vm781, %v1037, 0
      %1042 = vmatprep.subr.bf16.mxu0 %v1003
      %1043 = vmatpush1.bf16.msra.mxu0 %v1002
      %1044 = vmatprep.subr.bf16.mxu0 %v1005
      %1045 = vmatpush1.bf16.msra.mxu0 %v1004
      %1046 = vmatprep.subr.bf16.mxu0 %v1007
      %1047 = vmatpush1.bf16.msra.mxu0 %v1006
      %1048 = vmatprep.subr.bf16.mxu0 %v1009
      %1049 = vmatpush1.bf16.msra.mxu0 %v1008
      %1050 = vmatprep.subr.bf16.mxu0 %v1011
      %1051 = vmatpush1.bf16.msra.mxu0 %v1010
      %1052 = vmatprep.subr.bf16.mxu0 %v1013
      %1053 = vmatpush1.bf16.msra.mxu0 %v1012
      %1054 = vmatprep.subr.bf16.mxu0 %v1015
      %1055 = vmatpush1.bf16.msra.mxu0 %v1014
      %1056 = vmatprep.subr.bf16.mxu0 %v1017
      %1057 = vmatpush1.bf16.msra.mxu0 %v1016
      %1058 = vmatprep.subr.bf16.mxu0 %v1019
      %1059 = vmatpush1.bf16.msra.mxu0 %v1018
      %1060 = vmatprep.subr.bf16.mxu0 0
      %1061 = vmatpush1.bf16.msra.mxu0 0
      %1062 = vmatprep.subr.bf16.mxu0 0
      %1063 = vmatpush1.bf16.msra.mxu0 0
      %1064 = vmatprep.subr.bf16.mxu0 0
      %1065 = vmatpush1.bf16.msra.mxu0 0
      %1066 = vmatprep.subr.bf16.mxu0 0
      %1067 = vmatpush1.bf16.msra.mxu0 0
      %1068 = vmatprep.subr.bf16.mxu0 0
      %1069 = vmatpush1.bf16.msra.mxu0 0
      %1070 = vmatprep.subr.bf16.mxu0 0
      %1071 = vmatpush1.bf16.msra.mxu0 0
      %1072 = vmatprep.subr.bf16.mxu0 0
      %1073 = vmatpush1.bf16.msra.mxu0 0
      %1074 = vmatprep.mubr.bf16.mxu0 %v1040
      %1075 = vmatmul.mubr.bf16.gmra.mrb[0].mxu0 %v1036
      %v1076 = vpop.f32.mrb[0].mxu0
      %v1077 = vadd.f32 %v1023, %v1076
      %v1078 = vpop.f32.mrb[0].mxu0
      %v1079 = vadd.f32 %v1023, %v1078
      %v1080 = vpop.f32.mrb[0].mxu0
      %v1081 = vadd.f32 %v1028, %v1080
      %v1082 = vpop.f32.mrb[0].mxu0
      %v1083 = vadd.f32 %v1028, %v1082
      %1084 = vdwg.mxu0
      %v1085 = vmax.f32 %v1077, 0.0
      %v1086 = vmax.f32 %v1079, 0.0
      %v1087 = vmax.f32 %v1081, 0.0
      %v1088 = vmax.f32 %v1083, 0.0
      %s1089 = scalar_lea.vmem %s4, 16
      %v1090 = vld [vmem:[%s1089] sm:$0xff]
      %v1091 = vld [vmem:[%s1089 + $0x8] sm:$0xff]
      %s1092 = scalar_lea.vmem %s5, 16
      %v1093 = vld [vmem:[%s1092] sm:$0xff]
      %v1094 = vld [vmem:[%s1092 + $0x8] sm:$0xff]
      %v1095 = vpack.c.bf16 %v1087, %v1085
      %v1096 = vpack.c.bf16 %v1088, %v1086
      %1097 = vst [vmem:[#allocation2 + $0x8] sm:$0xff] %v1095
      %1098 = vst [vmem:[#allocation2 + $0x10] sm:$0xff] %v1096
      %v1099 = vld [vmem:[#allocation2] sm:$0xff]
      %v1100 = vld [vmem:[#allocation2 + $0x8] sm:$0xff]
      %v1101 = vld [vmem:[#allocation2 + $0x10] sm:$0xff]
      %v1102 = vsel %vm517, %v1099, 0
      %v1103 = vsel %vm518, %v1100, 0
      %v1104 = vsel %vm519, %v1101, 0
      %1108 = vrot.lane.b32.xlu0 %v1102, 17
      %v1109 = vpop.permute.xlu0 %1108
      %1110 = vrot.lane.b32.xlu0 %v1103, 17
      %v1111 = vpop.permute.xlu0 %1110
      %1112 = vrot.lane.b32.xlu0 %v1104, 17
      %v1113 = vpop.permute.xlu0 %1112
      %v1114 = vsel %vm532, %v1109, %v1111
      %v1115 = vsel %vm532, %v1111, %v1113
      %1118 = vst [vmem:[#allocation3] sm:$0xff] %v1114
      %1119 = vst [vmem:[#allocation3 + $0x8] sm:$0xff] %v1115
      %v1120 = vld [vmem:[#allocation2] sm:$0xff]
      %v1121 = vld [vmem:[#allocation2 + $0x8] sm:$0xff]
      %v1122 = vld [vmem:[#allocation2 + $0x10] sm:$0xff]
      %1126 = vrot.lane.b32.xlu0 %v1120, 16
      %v1127 = vpop.permute.xlu0 %1126
      %1128 = vrot.lane.b32.xlu0 %v1121, 16
      %v1129 = vpop.permute.xlu0 %1128
      %1130 = vrot.lane.b32.xlu0 %v1122, 16
      %v1131 = vpop.permute.xlu0 %1130
      %v1132 = vsel %vm551, %v1127, %v1129
      %v1133 = vsel %vm551, %v1129, %v1131
      %1136 = vst [vmem:[#allocation3 + $0x10] sm:$0xff] %v1132
      %1137 = vst [vmem:[#allocation3 + $0x18] sm:$0xff] %v1133
      %v1138 = vld [vmem:[#allocation2] sm:$0xff]
      %v1139 = vld [vmem:[#allocation2 + $0x8] sm:$0xff]
      %v1140 = vld [vmem:[#allocation2 + $0x10] sm:$0xff]
      %v1141 = vsel %vm581, %v1138, 0
      %v1142 = vsel %vm582, %v1139, 0
      %v1143 = vsel %vm583, %v1140, 0
      %1147 = vrot.lane.b32.xlu0 %v1141, 15
      %v1148 = vpop.permute.xlu0 %1147
      %1149 = vrot.lane.b32.xlu0 %v1142, 15
      %v1150 = vpop.permute.xlu0 %1149
      %1151 = vrot.lane.b32.xlu0 %v1143, 15
      %v1152 = vpop.permute.xlu0 %1151
      %v1153 = vsel %vm596, %v1148, %v1150
      %v1154 = vsel %vm596, %v1150, %v1152
      %1157 = vst [vmem:[#allocation3 + $0x20] sm:$0xff] %v1153
      %1158 = vst [vmem:[#allocation3 + $0x28] sm:$0xff] %v1154
      %v1159 = vld [vmem:[#allocation2] sm:$0xff]
      %v1160 = vld [vmem:[#allocation2 + $0x8] sm:$0xff]
      %v1161 = vld [vmem:[#allocation2 + $0x10] sm:$0xff]
      %v1162 = vsel %vm612, %v1159, 0
      %v1163 = vsel %vm613, %v1160, 0
      %v1164 = vsel %vm614, %v1161, 0
      %1168 = vrot.lane.b32.xlu0 %v1162, 1
      %v1169 = vpop.permute.xlu0 %1168
      %1170 = vrot.lane.b32.xlu0 %v1163, 1
      %v1171 = vpop.permute.xlu0 %1170
      %1172 = vrot.lane.b32.xlu0 %v1164, 1
      %v1173 = vpop.permute.xlu0 %1172
      %v1174 = vsel %vm627, %v1169, %v1171
      %v1175 = vsel %vm627, %v1171, %v1173
      %1178 = vst [vmem:[#allocation3 + $0x30] sm:$0xff] %v1174
      %1179 = vst [vmem:[#allocation3 + $0x38] sm:$0xff] %v1175
      %v1180 = vld [vmem:[#allocation2 + $0x8] sm:$0xff]
      %v1181 = vld [vmem:[#allocation2 + $0x10] sm:$0xff]
      %1182 = vst [vmem:[#allocation3 + $0x40] sm:$0xff] %v1180
      %1183 = vst [vmem:[#allocation3 + $0x48] sm:$0xff] %v1181
      %v1184 = vld [vmem:[#allocation2 + $0x8] sm:$0xff]
      %v1185 = vld [vmem:[#allocation2 + $0x10] sm:$0xff]
      %v1186 = vld [vmem:[#allocation2 + $0x18] sm:$0xff]
      %v1187 = vsel %vm646, %v1184, 0
      %v1188 = vsel %vm647, %v1185, 0
      %v1189 = vsel %vm648, %v1186, 0
      %1193 = vrot.lane.b32.xlu0 %v1187, 127
      %v1194 = vpop.permute.xlu0 %1193
      %1195 = vrot.lane.b32.xlu0 %v1188, 127
      %v1196 = vpop.permute.xlu0 %1195
      %1197 = vrot.lane.b32.xlu0 %v1189, 127
      %v1198 = vpop.permute.xlu0 %1197
      %v1199 = vsel %vm610, %v1194, %v1196
      %v1200 = vsel %vm610, %v1196, %v1198
      %1203 = vst [vmem:[#allocation3 + $0x50] sm:$0xff] %v1199
      %1204 = vst [vmem:[#allocation3 + $0x58] sm:$0xff] %v1200
      %v1205 = vld [vmem:[#allocation2 + $0x8] sm:$0xff]
      %v1206 = vld [vmem:[#allocation2 + $0x10] sm:$0xff]
      %v1207 = vld [vmem:[#allocation2 + $0x18] sm:$0xff]
      %v1208 = vsel %vm675, %v1205, 0
      %v1209 = vsel %vm676, %v1206, 0
      %v1210 = vsel %vm677, %v1207, 0
      %1214 = vrot.lane.b32.xlu0 %v1208, 113
      %v1215 = vpop.permute.xlu0 %1214
      %1216 = vrot.lane.b32.xlu0 %v1209, 113
      %v1217 = vpop.permute.xlu0 %1216
      %1218 = vrot.lane.b32.xlu0 %v1210, 113
      %v1219 = vpop.permute.xlu0 %1218
      %v1220 = vsel %vm579, %v1215, %v1217
      %v1221 = vsel %vm579, %v1217, %v1219
      %1224 = vst [vmem:[#allocation3 + $0x60] sm:$0xff] %v1220
      %1225 = vst [vmem:[#allocation3 + $0x68] sm:$0xff] %v1221
      %v1226 = vld [vmem:[#allocation2 + $0x8] sm:$0xff]
      %v1227 = vld [vmem:[#allocation2 + $0x10] sm:$0xff]
      %v1228 = vld [vmem:[#allocation2 + $0x18] sm:$0xff]
      %1232 = vrot.lane.b32.xlu0 %v1226, 112
      %v1233 = vpop.permute.xlu0 %1232
      %1234 = vrot.lane.b32.xlu0 %v1227, 112
      %v1235 = vpop.permute.xlu0 %1234
      %1236 = vrot.lane.b32.xlu0 %v1228, 112
      %v1237 = vpop.permute.xlu0 %1236
      %v1238 = vsel %vm708, %v1233, %v1235
      %v1239 = vsel %vm708, %v1235, %v1237
      %1242 = vst [vmem:[#allocation3 + $0x70] sm:$0xff] %v1238
      %1243 = vst [vmem:[#allocation3 + $0x78] sm:$0xff] %v1239
      %v1244 = vld [vmem:[#allocation2 + $0x8] sm:$0xff]
      %v1245 = vld [vmem:[#allocation2 + $0x10] sm:$0xff]
      %v1246 = vld [vmem:[#allocation2 + $0x18] sm:$0xff]
      %v1247 = vsel %vm723, %v1244, 0
      %v1248 = vsel %vm724, %v1245, 0
      %v1249 = vsel %vm725, %v1246, 0
      %1253 = vrot.lane.b32.xlu0 %v1247, 111
      %v1254 = vpop.permute.xlu0 %1253
      %1255 = vrot.lane.b32.xlu0 %v1248, 111
      %v1256 = vpop.permute.xlu0 %1255
      %1257 = vrot.lane.b32.xlu0 %v1249, 111
      %v1258 = vpop.permute.xlu0 %1257
      %v1259 = vsel %vm515, %v1254, %v1256
      %v1260 = vsel %vm515, %v1256, %v1258
      %1263 = vst [vmem:[#allocation3 + $0x80] sm:$0xff] %v1259
      %1264 = vst [vmem:[#allocation3 + $0x88] sm:$0xff] %v1260
      %v1265 = vld [vmem:[#allocation3] sm:$0xff]
      %v1266 = vld [vmem:[#allocation3 + $0x8] sm:$0xff]
      %v1267 = vld [vmem:[#allocation3 + $0x10] sm:$0xff]
      %v1268 = vld [vmem:[#allocation3 + $0x18] sm:$0xff]
      %v1269 = vld [vmem:[#allocation3 + $0x20] sm:$0xff]
      %v1270 = vld [vmem:[#allocation3 + $0x28] sm:$0xff]
      %v1271 = vld [vmem:[#allocation3 + $0x30] sm:$0xff]
      %v1272 = vld [vmem:[#allocation3 + $0x38] sm:$0xff]
      %v1273 = vld [vmem:[#allocation3 + $0x40] sm:$0xff]
      %v1274 = vld [vmem:[#allocation3 + $0x48] sm:$0xff]
      %v1275 = vld [vmem:[#allocation3 + $0x50] sm:$0xff]
      %v1276 = vld [vmem:[#allocation3 + $0x58] sm:$0xff]
      %v1277 = vld [vmem:[#allocation3 + $0x60] sm:$0xff]
      %v1278 = vld [vmem:[#allocation3 + $0x68] sm:$0xff]
      %v1279 = vld [vmem:[#allocation3 + $0x70] sm:$0xff]
      %v1280 = vld [vmem:[#allocation3 + $0x78] sm:$0xff]
      %v1281 = vld [vmem:[#allocation3 + $0x80] sm:$0xff]
      %v1282 = vld [vmem:[#allocation3 + $0x88] sm:$0xff]
      %1284 = vset.pattern.permute.xlu0 0
      %1285 = vperm.xlu0 %1284, %v1093
      %v1286 = vpop.permute.xlu0 %1285
      %1289 = vset.pattern.permute.xlu0 0
      %1290 = vperm.xlu0 %1289, %v1094
      %v1291 = vpop.permute.xlu0 %1290
      %v1295 = vunpack.c.l.b16 %v1090
      %v1296 = vunpack.c.h.b16 %v1090
      %v1297 = vunpack.c.l.b16 %v1091
      %v1298 = vunpack.c.h.b16 %v1091
      %v1299 = vpack.c.b16 %v1297, %v1295
      %v1300 = vpack.c.b16 %v1298, %v1296
      %v1303 = vsel %vm781, %v1300, 0
      %1305 = vmatprep.subr.bf16.mxu0 %v1266
      %1306 = vmatpush1.bf16.msra.mxu0 %v1265
      %1307 = vmatprep.subr.bf16.mxu0 %v1268
      %1308 = vmatpush1.bf16.msra.mxu0 %v1267
      %1309 = vmatprep.subr.bf16.mxu0 %v1270
      %1310 = vmatpush1.bf16.msra.mxu0 %v1269
      %1311 = vmatprep.subr.bf16.mxu0 %v1272
      %1312 = vmatpush1.bf16.msra.mxu0 %v1271
      %1313 = vmatprep.subr.bf16.mxu0 %v1274
      %1314 = vmatpush1.bf16.msra.mxu0 %v1273
      %1315 = vmatprep.subr.bf16.mxu0 %v1276
      %1316 = vmatpush1.bf16.msra.mxu0 %v1275
      %1317 = vmatprep.subr.bf16.mxu0 %v1278
      %1318 = vmatpush1.bf16.msra.mxu0 %v1277
      %1319 = vmatprep.subr.bf16.mxu0 %v1280
      %1320 = vmatpush1.bf16.msra.mxu0 %v1279
      %1321 = vmatprep.subr.bf16.mxu0 %v1282
      %1322 = vmatpush1.bf16.msra.mxu0 %v1281
      %1323 = vmatprep.subr.bf16.mxu0 0
      %1324 = vmatpush1.bf16.msra.mxu0 0
      %1325 = vmatprep.subr.bf16.mxu0 0
      %1326 = vmatpush1.bf16.msra.mxu0 0
      %1327 = vmatprep.subr.bf16.mxu0 0
      %1328 = vmatpush1.bf16.msra.mxu0 0
      %1329 = vmatprep.subr.bf16.mxu0 0
      %1330 = vmatpush1.bf16.msra.mxu0 0
      %1331 = vmatprep.subr.bf16.mxu0 0
      %1332 = vmatpush1.bf16.msra.mxu0 0
      %1333 = vmatprep.subr.bf16.mxu0 0
      %1334 = vmatpush1.bf16.msra.mxu0 0
      %1335 = vmatprep.subr.bf16.mxu0 0
      %1336 = vmatpush1.bf16.msra.mxu0 0
      %1337 = vmatprep.mubr.bf16.mxu0 %v1303
      %1338 = vmatmul.mubr.bf16.gmra.mrb[0].mxu0 %v1299
      %v1339 = vpop.f32.mrb[0].mxu0
      %v1340 = vadd.f32 %v1286, %v1339
      %v1341 = vpop.f32.mrb[0].mxu0
      %v1342 = vadd.f32 %v1286, %v1341
      %v1343 = vpop.f32.mrb[0].mxu0
      %v1344 = vadd.f32 %v1291, %v1343
      %v1345 = vpop.f32.mrb[0].mxu0
      %v1346 = vadd.f32 %v1291, %v1345
      %1347 = vdwg.mxu0
      %v1348 = vadd.f32 %v1340, %v1342
      %1349 = vadd.xlane.f32.xlu0 %v1348
      %v1350 = vpop.xlane.xlu0 %1349
      %v1351 = vadd.f32 %v1344, %v1346
      %1352 = vadd.xlane.f32.xlu0 %v1351
      %v1353 = vpop.xlane.xlu0 %1352
      %v1354 = vrcp.pop 256.0
      %v1355 = vmul.f32 %v1350, %v1354
      %v1356 = vmul.f32 %v1353, %v1354
      %v1357 = vld [vmem:[%s6] sm:$0xff]
      %v1358 = vld [vmem:[%s6 + $0x8] sm:$0xff]
      %v1359 = vmul.f32 %v1357, %v1355
      %v1360 = vmul.f32 %v1358, %v1356
      %vm1361 = vcmask 31744
      %v1362 = vsel %vm1361, %v1359, 0.0
      %v1363 = vsel %vm1361, %v1360, 0.0
      %v1364 = vadd.f32 %v1362, %v1363
      %v1365 = vrot.slane %v1364, 4
      %v1366 = vadd.f32 %v1364, %v1365
      %v1367 = vrot.slane %v1366, 2
      %v1368 = vadd.f32 %v1366, %v1367
      %v1369 = vrot.slane %v1368, 1
      %v1370 = vadd.f32 %v1368, %v1369
      %v1371 = vld [vmem:[%s7] sm:$0x1]
      %v1372 = vadd.f32 %v1370, %v1371
      %v1373 = vmax.f32 %v1372, 0.0
      %v1374 = vld [vmem:[%s8] sm:$0xff]
      %v1375 = vld [vmem:[%s8 + $0x8] sm:$0xff]
      %v1376 = vlaneseq
      %v1377 = vshrl.u32 %v1376, 7
      %v1378 = vsub.s32 0, %v1377
      %v1379 = vrot.slane %v1373, %v1378
      %v1380 = vmul.f32 %v1374, %v1379
      %v1381 = vmul.f32 %v1375, %v1379
      %v1382 = vsel %vm1361, %v1380, 0.0
      %1383 = vadd.xlane.f32.xlu0 %v1382
      %v1384 = vpop.xlane.xlu0 %1383
      %v1385 = vsel %vm1361, %v1381, 0.0
      %1386 = vadd.xlane.f32.xlu0 %v1385
      %v1387 = vpop.xlane.xlu0 %1386
      %v1388 = vld [vmem:[%s9] sm:$0xff]
      %v1389 = vld [vmem:[%s9 + $0x8] sm:$0xff]
      %v1390 = vadd.f32 %v1384, %v1388
      %v1391 = vadd.f32 %v1387, %v1389
      %v1392 = vxor.u32 %v1390, 2147483648
      %v1393 = vxor.u32 %v1391, 2147483648
      %v1394 = vmul.f32 %v1392, 1.442695
      %v1395 = vpow.pop %v1394
      %v1396 = vmul.f32 %v1393, 1.442695
      %v1397 = vpow.pop %v1396
      %v1398 = vadd.f32 %v1395, 1.0
      %v1399 = vadd.f32 %v1397, 1.0
      %v1400 = vrcp.pop %v1398
      %v1401 = vmul.f32 1.0, %v1400
      %v1402 = vrcp.pop %v1399
      %v1403 = vmul.f32 1.0, %v1402
      %1405 = vset.pattern.permute.xlu0 0
      %1406 = vperm.xlu0 %1405, %v1401
      %v1407 = vpop.permute.xlu0 %1406
      %1410 = vset.pattern.permute.xlu0 0
      %1411 = vperm.xlu0 %1410, %v1403
      %v1412 = vpop.permute.xlu0 %1411
      %v1414 = vmul.f32 %v1340, %v1407
      %v1415 = vmul.f32 %v1342, %v1407
      %v1416 = vmul.f32 %v1344, %v1412
      %v1417 = vmul.f32 %v1346, %v1412
      %v1418 = vadd.f32 %v1414, %v820
      %v1419 = vadd.f32 %v1415, %v822
      %v1420 = vadd.f32 %v1416, %v824
      %v1421 = vadd.f32 %v1417, %v826
      %s1422 = scalar_lea.vmem %s4, 32
      %v1423 = vld [vmem:[%s1422] sm:$0xff]
      %v1424 = vld [vmem:[%s1422 + $0x8] sm:$0xff]
      %s1425 = scalar_lea.vmem %s5, 32
      %v1426 = vld [vmem:[%s1425] sm:$0xff]
      %v1427 = vld [vmem:[%s1425 + $0x8] sm:$0xff]
      %v1428 = vpack.c.bf16 %v1420, %v1418
      %v1429 = vpack.c.bf16 %v1421, %v1419
      %1430 = vst [vmem:[#allocation2 + $0x8] sm:$0xff] %v1428
      %1431 = vst [vmem:[#allocation2 + $0x10] sm:$0xff] %v1429
      %v1432 = vld [vmem:[#allocation2] sm:$0xff]
      %v1433 = vld [vmem:[#allocation2 + $0x8] sm:$0xff]
      %v1434 = vld [vmem:[#allocation2 + $0x10] sm:$0xff]
      %v1435 = vsel %vm517, %v1432, 0
      %v1436 = vsel %vm518, %v1433, 0
      %v1437 = vsel %vm519, %v1434, 0
      %1441 = vrot.lane.b32.xlu0 %v1435, 17
      %v1442 = vpop.permute.xlu0 %1441
      %1443 = vrot.lane.b32.xlu0 %v1436, 17
      %v1444 = vpop.permute.xlu0 %1443
      %1445 = vrot.lane.b32.xlu0 %v1437, 17
      %v1446 = vpop.permute.xlu0 %1445
      %v1447 = vsel %vm532, %v1442, %v1444
      %v1448 = vsel %vm532, %v1444, %v1446
      %1451 = vst [vmem:[#allocation3] sm:$0xff] %v1447
      %1452 = vst [vmem:[#allocation3 + $0x8] sm:$0xff] %v1448
      %v1453 = vld [vmem:[#allocation2] sm:$0xff]
      %v1454 = vld [vmem:[#allocation2 + $0x8] sm:$0xff]
      %v1455 = vld [vmem:[#allocation2 + $0x10] sm:$0xff]
      %1459 = vrot.lane.b32.xlu0 %v1453, 16
      %v1460 = vpop.permute.xlu0 %1459
      %1461 = vrot.lane.b32.xlu0 %v1454, 16
      %v1462 = vpop.permute.xlu0 %1461
      %1463 = vrot.lane.b32.xlu0 %v1455, 16
      %v1464 = vpop.permute.xlu0 %1463
      %v1465 = vsel %vm551, %v1460, %v1462
      %v1466 = vsel %vm551, %v1462, %v1464
      %1469 = vst [vmem:[#allocation3 + $0x10] sm:$0xff] %v1465
      %1470 = vst [vmem:[#allocation3 + $0x18] sm:$0xff] %v1466
      %v1471 = vld [vmem:[#allocation2] sm:$0xff]
      %v1472 = vld [vmem:[#allocation2 + $0x8] sm:$0xff]
      %v1473 = vld [vmem:[#allocation2 + $0x10] sm:$0xff]
      %v1474 = vsel %vm581, %v1471, 0
      %v1475 = vsel %vm582, %v1472, 0
      %v1476 = vsel %vm583, %v1473, 0
      %1480 = vrot.lane.b32.xlu0 %v1474, 15
      %v1481 = vpop.permute.xlu0 %1480
      %1482 = vrot.lane.b32.xlu0 %v1475, 15
      %v1483 = vpop.permute.xlu0 %1482
      %1484 = vrot.lane.b32.xlu0 %v1476, 15
      %v1485 = vpop.permute.xlu0 %1484
      %v1486 = vsel %vm596, %v1481, %v1483
      %v1487 = vsel %vm596, %v1483, %v1485
      %1490 = vst [vmem:[#allocation3 + $0x20] sm:$0xff] %v1486
      %1491 = vst [vmem:[#allocation3 + $0x28] sm:$0xff] %v1487
      %v1492 = vld [vmem:[#allocation2] sm:$0xff]
      %v1493 = vld [vmem:[#allocation2 + $0x8] sm:$0xff]
      %v1494 = vld [vmem:[#allocation2 + $0x10] sm:$0xff]
      %v1495 = vsel %vm612, %v1492, 0
      %v1496 = vsel %vm613, %v1493, 0
      %v1497 = vsel %vm614, %v1494, 0
      %1501 = vrot.lane.b32.xlu0 %v1495, 1
      %v1502 = vpop.permute.xlu0 %1501
      %1503 = vrot.lane.b32.xlu0 %v1496, 1
      %v1504 = vpop.permute.xlu0 %1503
      %1505 = vrot.lane.b32.xlu0 %v1497, 1
      %v1506 = vpop.permute.xlu0 %1505
      %v1507 = vsel %vm627, %v1502, %v1504
      %v1508 = vsel %vm627, %v1504, %v1506
      %1511 = vst [vmem:[#allocation3 + $0x30] sm:$0xff] %v1507
      %1512 = vst [vmem:[#allocation3 + $0x38] sm:$0xff] %v1508
      %v1513 = vld [vmem:[#allocation2 + $0x8] sm:$0xff]
      %v1514 = vld [vmem:[#allocation2 + $0x10] sm:$0xff]
      %1515 = vst [vmem:[#allocation3 + $0x40] sm:$0xff] %v1513
      %1516 = vst [vmem:[#allocation3 + $0x48] sm:$0xff] %v1514
      %v1517 = vld [vmem:[#allocation2 + $0x8] sm:$0xff]
      %v1518 = vld [vmem:[#allocation2 + $0x10] sm:$0xff]
      %v1519 = vld [vmem:[#allocation2 + $0x18] sm:$0xff]
      %v1520 = vsel %vm646, %v1517, 0
      %v1521 = vsel %vm647, %v1518, 0
      %v1522 = vsel %vm648, %v1519, 0
      %1526 = vrot.lane.b32.xlu0 %v1520, 127
      %v1527 = vpop.permute.xlu0 %1526
      %1528 = vrot.lane.b32.xlu0 %v1521, 127
      %v1529 = vpop.permute.xlu0 %1528
      %1530 = vrot.lane.b32.xlu0 %v1522, 127
      %v1531 = vpop.permute.xlu0 %1530
      %v1532 = vsel %vm610, %v1527, %v1529
      %v1533 = vsel %vm610, %v1529, %v1531
      %1536 = vst [vmem:[#allocation3 + $0x50] sm:$0xff] %v1532
      %1537 = vst [vmem:[#allocation3 + $0x58] sm:$0xff] %v1533
      %v1538 = vld [vmem:[#allocation2 + $0x8] sm:$0xff]
      %v1539 = vld [vmem:[#allocation2 + $0x10] sm:$0xff]
      %v1540 = vld [vmem:[#allocation2 + $0x18] sm:$0xff]
      %v1541 = vsel %vm675, %v1538, 0
      %v1542 = vsel %vm676, %v1539, 0
      %v1543 = vsel %vm677, %v1540, 0
      %1547 = vrot.lane.b32.xlu0 %v1541, 113
      %v1548 = vpop.permute.xlu0 %1547
      %1549 = vrot.lane.b32.xlu0 %v1542, 113
      %v1550 = vpop.permute.xlu0 %1549
      %1551 = vrot.lane.b32.xlu0 %v1543, 113
      %v1552 = vpop.permute.xlu0 %1551
      %v1553 = vsel %vm579, %v1548, %v1550
      %v1554 = vsel %vm579, %v1550, %v1552
      %1557 = vst [vmem:[#allocation3 + $0x60] sm:$0xff] %v1553
      %1558 = vst [vmem:[#allocation3 + $0x68] sm:$0xff] %v1554
      %v1559 = vld [vmem:[#allocation2 + $0x8] sm:$0xff]
      %v1560 = vld [vmem:[#allocation2 + $0x10] sm:$0xff]
      %v1561 = vld [vmem:[#allocation2 + $0x18] sm:$0xff]
      %1565 = vrot.lane.b32.xlu0 %v1559, 112
      %v1566 = vpop.permute.xlu0 %1565
      %1567 = vrot.lane.b32.xlu0 %v1560, 112
      %v1568 = vpop.permute.xlu0 %1567
      %1569 = vrot.lane.b32.xlu0 %v1561, 112
      %v1570 = vpop.permute.xlu0 %1569
      %v1571 = vsel %vm708, %v1566, %v1568
      %v1572 = vsel %vm708, %v1568, %v1570
      %1575 = vst [vmem:[#allocation3 + $0x70] sm:$0xff] %v1571
      %1576 = vst [vmem:[#allocation3 + $0x78] sm:$0xff] %v1572
      %v1577 = vld [vmem:[#allocation2 + $0x8] sm:$0xff]
      %v1578 = vld [vmem:[#allocation2 + $0x10] sm:$0xff]
      %v1579 = vld [vmem:[#allocation2 + $0x18] sm:$0xff]
      %v1580 = vsel %vm723, %v1577, 0
      %v1581 = vsel %vm724, %v1578, 0
      %v1582 = vsel %vm725, %v1579, 0
      %1586 = vrot.lane.b32.xlu0 %v1580, 111
      %v1587 = vpop.permute.xlu0 %1586
      %1588 = vrot.lane.b32.xlu0 %v1581, 111
      %v1589 = vpop.permute.xlu0 %1588
      %1590 = vrot.lane.b32.xlu0 %v1582, 111
      %v1591 = vpop.permute.xlu0 %1590
      %v1592 = vsel %vm515, %v1587, %v1589
      %v1593 = vsel %vm515, %v1589, %v1591
      %1596 = vst [vmem:[#allocation3 + $0x80] sm:$0xff] %v1592
      %1597 = vst [vmem:[#allocation3 + $0x88] sm:$0xff] %v1593
      %v1598 = vld [vmem:[#allocation3] sm:$0xff]
      %v1599 = vld [vmem:[#allocation3 + $0x8] sm:$0xff]
      %v1600 = vld [vmem:[#allocation3 + $0x10] sm:$0xff]
      %v1601 = vld [vmem:[#allocation3 + $0x18] sm:$0xff]
      %v1602 = vld [vmem:[#allocation3 + $0x20] sm:$0xff]
      %v1603 = vld [vmem:[#allocation3 + $0x28] sm:$0xff]
      %v1604 = vld [vmem:[#allocation3 + $0x30] sm:$0xff]
      %v1605 = vld [vmem:[#allocation3 + $0x38] sm:$0xff]
      %v1606 = vld [vmem:[#allocation3 + $0x40] sm:$0xff]
      %v1607 = vld [vmem:[#allocation3 + $0x48] sm:$0xff]
      %v1608 = vld [vmem:[#allocation3 + $0x50] sm:$0xff]
      %v1609 = vld [vmem:[#allocation3 + $0x58] sm:$0xff]
      %v1610 = vld [vmem:[#allocation3 + $0x60] sm:$0xff]
      %v1611 = vld [vmem:[#allocation3 + $0x68] sm:$0xff]
      %v1612 = vld [vmem:[#allocation3 + $0x70] sm:$0xff]
      %v1613 = vld [vmem:[#allocation3 + $0x78] sm:$0xff]
      %v1614 = vld [vmem:[#allocation3 + $0x80] sm:$0xff]
      %v1615 = vld [vmem:[#allocation3 + $0x88] sm:$0xff]
      %1617 = vset.pattern.permute.xlu0 0
      %1618 = vperm.xlu0 %1617, %v1426
      %v1619 = vpop.permute.xlu0 %1618
      %1622 = vset.pattern.permute.xlu0 0
      %1623 = vperm.xlu0 %1622, %v1427
      %v1624 = vpop.permute.xlu0 %1623
      %v1628 = vunpack.c.l.b16 %v1423
      %v1629 = vunpack.c.h.b16 %v1423
      %v1630 = vunpack.c.l.b16 %v1424
      %v1631 = vunpack.c.h.b16 %v1424
      %v1632 = vpack.c.b16 %v1630, %v1628
      %v1633 = vpack.c.b16 %v1631, %v1629
      %v1636 = vsel %vm781, %v1633, 0
      %1638 = vmatprep.subr.bf16.mxu0 %v1599
      %1639 = vmatpush1.bf16.msra.mxu0 %v1598
      %1640 = vmatprep.subr.bf16.mxu0 %v1601
      %1641 = vmatpush1.bf16.msra.mxu0 %v1600
      %1642 = vmatprep.subr.bf16.mxu0 %v1603
      %1643 = vmatpush1.bf16.msra.mxu0 %v1602
      %1644 = vmatprep.subr.bf16.mxu0 %v1605
      %1645 = vmatpush1.bf16.msra.mxu0 %v1604
      %1646 = vmatprep.subr.bf16.mxu0 %v1607
      %1647 = vmatpush1.bf16.msra.mxu0 %v1606
      %1648 = vmatprep.subr.bf16.mxu0 %v1609
      %1649 = vmatpush1.bf16.msra.mxu0 %v1608
      %1650 = vmatprep.subr.bf16.mxu0 %v1611
      %1651 = vmatpush1.bf16.msra.mxu0 %v1610
      %1652 = vmatprep.subr.bf16.mxu0 %v1613
      %1653 = vmatpush1.bf16.msra.mxu0 %v1612
      %1654 = vmatprep.subr.bf16.mxu0 %v1615
      %1655 = vmatpush1.bf16.msra.mxu0 %v1614
      %1656 = vmatprep.subr.bf16.mxu0 0
      %1657 = vmatpush1.bf16.msra.mxu0 0
      %1658 = vmatprep.subr.bf16.mxu0 0
      %1659 = vmatpush1.bf16.msra.mxu0 0
      %1660 = vmatprep.subr.bf16.mxu0 0
      %1661 = vmatpush1.bf16.msra.mxu0 0
      %1662 = vmatprep.subr.bf16.mxu0 0
      %1663 = vmatpush1.bf16.msra.mxu0 0
      %1664 = vmatprep.subr.bf16.mxu0 0
      %1665 = vmatpush1.bf16.msra.mxu0 0
      %1666 = vmatprep.subr.bf16.mxu0 0
      %1667 = vmatpush1.bf16.msra.mxu0 0
      %1668 = vmatprep.subr.bf16.mxu0 0
      %1669 = vmatpush1.bf16.msra.mxu0 0
      %1670 = vmatprep.mubr.bf16.mxu0 %v1636
      %1671 = vmatmul.mubr.bf16.gmra.mrb[0].mxu0 %v1632
      %v1672 = vpop.f32.mrb[0].mxu0
      %v1673 = vadd.f32 %v1619, %v1672
      %v1674 = vpop.f32.mrb[0].mxu0
      %v1675 = vadd.f32 %v1619, %v1674
      %v1676 = vpop.f32.mrb[0].mxu0
      %v1677 = vadd.f32 %v1624, %v1676
      %v1678 = vpop.f32.mrb[0].mxu0
      %v1679 = vadd.f32 %v1624, %v1678
      %1680 = vdwg.mxu0
      %v1681 = vmax.f32 %v1673, 0.0
      %v1682 = vmax.f32 %v1675, 0.0
      %v1683 = vmax.f32 %v1677, 0.0
      %v1684 = vmax.f32 %v1679, 0.0
      %s1685 = scalar_lea.vmem %s4, 48
      %v1686 = vld [vmem:[%s1685] sm:$0xff]
      %v1687 = vld [vmem:[%s1685 + $0x8] sm:$0xff]
      %s1688 = scalar_lea.vmem %s5, 48
      %v1689 = vld [vmem:[%s1688] sm:$0xff]
      %v1690 = vld [vmem:[%s1688 + $0x8] sm:$0xff]
      %v1691 = vpack.c.bf16 %v1683, %v1681
      %v1692 = vpack.c.bf16 %v1684, %v1682
      %1693 = vst [vmem:[#allocation2 + $0x8] sm:$0xff] %v1691
      %1694 = vst [vmem:[#allocation2 + $0x10] sm:$0xff] %v1692
      %v1695 = vld [vmem:[#allocation2] sm:$0xff]
      %v1696 = vld [vmem:[#allocation2 + $0x8] sm:$0xff]
      %v1697 = vld [vmem:[#allocation2 + $0x10] sm:$0xff]
      %v1698 = vsel %vm517, %v1695, 0
      %v1699 = vsel %vm518, %v1696, 0
      %v1700 = vsel %vm519, %v1697, 0
      %1704 = vrot.lane.b32.xlu0 %v1698, 17
      %v1705 = vpop.permute.xlu0 %1704
      %1706 = vrot.lane.b32.xlu0 %v1699, 17
      %v1707 = vpop.permute.xlu0 %1706
      %1708 = vrot.lane.b32.xlu0 %v1700, 17
      %v1709 = vpop.permute.xlu0 %1708
      %v1710 = vsel %vm532, %v1705, %v1707
      %v1711 = vsel %vm532, %v1707, %v1709
      %1714 = vst [vmem:[#allocation3] sm:$0xff] %v1710
      %1715 = vst [vmem:[#allocation3 + $0x8] sm:$0xff] %v1711
      %v1716 = vld [vmem:[#allocation2] sm:$0xff]
      %v1717 = vld [vmem:[#allocation2 + $0x8] sm:$0xff]
      %v1718 = vld [vmem:[#allocation2 + $0x10] sm:$0xff]
      %1722 = vrot.lane.b32.xlu0 %v1716, 16
      %v1723 = vpop.permute.xlu0 %1722
      %1724 = vrot.lane.b32.xlu0 %v1717, 16
      %v1725 = vpop.permute.xlu0 %1724
      %1726 = vrot.lane.b32.xlu0 %v1718, 16
      %v1727 = vpop.permute.xlu0 %1726
      %v1728 = vsel %vm551, %v1723, %v1725
      %v1729 = vsel %vm551, %v1725, %v1727
      %1732 = vst [vmem:[#allocation3 + $0x10] sm:$0xff] %v1728
      %1733 = vst [vmem:[#allocation3 + $0x18] sm:$0xff] %v1729
      %v1734 = vld [vmem:[#allocation2] sm:$0xff]
      %v1735 = vld [vmem:[#allocation2 + $0x8] sm:$0xff]
      %v1736 = vld [vmem:[#allocation2 + $0x10] sm:$0xff]
      %v1737 = vsel %vm581, %v1734, 0
      %v1738 = vsel %vm582, %v1735, 0
      %v1739 = vsel %vm583, %v1736, 0
      %1743 = vrot.lane.b32.xlu0 %v1737, 15
      %v1744 = vpop.permute.xlu0 %1743
      %1745 = vrot.lane.b32.xlu0 %v1738, 15
      %v1746 = vpop.permute.xlu0 %1745
      %1747 = vrot.lane.b32.xlu0 %v1739, 15
      %v1748 = vpop.permute.xlu0 %1747
      %v1749 = vsel %vm596, %v1744, %v1746
      %v1750 = vsel %vm596, %v1746, %v1748
      %1753 = vst [vmem:[#allocation3 + $0x20] sm:$0xff] %v1749
      %1754 = vst [vmem:[#allocation3 + $0x28] sm:$0xff] %v1750
      %v1755 = vld [vmem:[#allocation2] sm:$0xff]
      %v1756 = vld [vmem:[#allocation2 + $0x8] sm:$0xff]
      %v1757 = vld [vmem:[#allocation2 + $0x10] sm:$0xff]
      %v1758 = vsel %vm612, %v1755, 0
      %v1759 = vsel %vm613, %v1756, 0
      %v1760 = vsel %vm614, %v1757, 0
      %1764 = vrot.lane.b32.xlu0 %v1758, 1
      %v1765 = vpop.permute.xlu0 %1764
      %1766 = vrot.lane.b32.xlu0 %v1759, 1
      %v1767 = vpop.permute.xlu0 %1766
      %1768 = vrot.lane.b32.xlu0 %v1760, 1
      %v1769 = vpop.permute.xlu0 %1768
      %v1770 = vsel %vm627, %v1765, %v1767
      %v1771 = vsel %vm627, %v1767, %v1769
      %1774 = vst [vmem:[#allocation3 + $0x30] sm:$0xff] %v1770
      %1775 = vst [vmem:[#allocation3 + $0x38] sm:$0xff] %v1771
      %v1776 = vld [vmem:[#allocation2 + $0x8] sm:$0xff]
      %v1777 = vld [vmem:[#allocation2 + $0x10] sm:$0xff]
      %1778 = vst [vmem:[#allocation3 + $0x40] sm:$0xff] %v1776
      %1779 = vst [vmem:[#allocation3 + $0x48] sm:$0xff] %v1777
      %v1780 = vld [vmem:[#allocation2 + $0x8] sm:$0xff]
      %v1781 = vld [vmem:[#allocation2 + $0x10] sm:$0xff]
      %v1782 = vld [vmem:[#allocation2 + $0x18] sm:$0xff]
      %v1783 = vsel %vm646, %v1780, 0
      %v1784 = vsel %vm647, %v1781, 0
      %v1785 = vsel %vm648, %v1782, 0
      %1789 = vrot.lane.b32.xlu0 %v1783, 127
      %v1790 = vpop.permute.xlu0 %1789
      %1791 = vrot.lane.b32.xlu0 %v1784, 127
      %v1792 = vpop.permute.xlu0 %1791
      %1793 = vrot.lane.b32.xlu0 %v1785, 127
      %v1794 = vpop.permute.xlu0 %1793
      %v1795 = vsel %vm610, %v1790, %v1792
      %v1796 = vsel %vm610, %v1792, %v1794
      %1799 = vst [vmem:[#allocation3 + $0x50] sm:$0xff] %v1795
      %1800 = vst [vmem:[#allocation3 + $0x58] sm:$0xff] %v1796
      %v1801 = vld [vmem:[#allocation2 + $0x8] sm:$0xff]
      %v1802 = vld [vmem:[#allocation2 + $0x10] sm:$0xff]
      %v1803 = vld [vmem:[#allocation2 + $0x18] sm:$0xff]
      %v1804 = vsel %vm675, %v1801, 0
      %v1805 = vsel %vm676, %v1802, 0
      %v1806 = vsel %vm677, %v1803, 0
      %1810 = vrot.lane.b32.xlu0 %v1804, 113
      %v1811 = vpop.permute.xlu0 %1810
      %1812 = vrot.lane.b32.xlu0 %v1805, 113
      %v1813 = vpop.permute.xlu0 %1812
      %1814 = vrot.lane.b32.xlu0 %v1806, 113
      %v1815 = vpop.permute.xlu0 %1814
      %v1816 = vsel %vm579, %v1811, %v1813
      %v1817 = vsel %vm579, %v1813, %v1815
      %1820 = vst [vmem:[#allocation3 + $0x60] sm:$0xff] %v1816
      %1821 = vst [vmem:[#allocation3 + $0x68] sm:$0xff] %v1817
      %v1822 = vld [vmem:[#allocation2 + $0x8] sm:$0xff]
      %v1823 = vld [vmem:[#allocation2 + $0x10] sm:$0xff]
      %v1824 = vld [vmem:[#allocation2 + $0x18] sm:$0xff]
      %1828 = vrot.lane.b32.xlu0 %v1822, 112
      %v1829 = vpop.permute.xlu0 %1828
      %1830 = vrot.lane.b32.xlu0 %v1823, 112
      %v1831 = vpop.permute.xlu0 %1830
      %1832 = vrot.lane.b32.xlu0 %v1824, 112
      %v1833 = vpop.permute.xlu0 %1832
      %v1834 = vsel %vm708, %v1829, %v1831
      %v1835 = vsel %vm708, %v1831, %v1833
      %1838 = vst [vmem:[#allocation3 + $0x70] sm:$0xff] %v1834
      %1839 = vst [vmem:[#allocation3 + $0x78] sm:$0xff] %v1835
      %v1840 = vld [vmem:[#allocation2 + $0x8] sm:$0xff]
      %v1841 = vld [vmem:[#allocation2 + $0x10] sm:$0xff]
      %v1842 = vld [vmem:[#allocation2 + $0x18] sm:$0xff]
      %v1843 = vsel %vm723, %v1840, 0
      %v1844 = vsel %vm724, %v1841, 0
      %v1845 = vsel %vm725, %v1842, 0
      %1849 = vrot.lane.b32.xlu0 %v1843, 111
      %v1850 = vpop.permute.xlu0 %1849
      %1851 = vrot.lane.b32.xlu0 %v1844, 111
      %v1852 = vpop.permute.xlu0 %1851
      %1853 = vrot.lane.b32.xlu0 %v1845, 111
      %v1854 = vpop.permute.xlu0 %1853
      %v1855 = vsel %vm515, %v1850, %v1852
      %v1856 = vsel %vm515, %v1852, %v1854
      %1859 = vst [vmem:[#allocation3 + $0x80] sm:$0xff] %v1855
      %1860 = vst [vmem:[#allocation3 + $0x88] sm:$0xff] %v1856
      %v1861 = vld [vmem:[#allocation3] sm:$0xff]
      %v1862 = vld [vmem:[#allocation3 + $0x8] sm:$0xff]
      %v1863 = vld [vmem:[#allocation3 + $0x10] sm:$0xff]
      %v1864 = vld [vmem:[#allocation3 + $0x18] sm:$0xff]
      %v1865 = vld [vmem:[#allocation3 + $0x20] sm:$0xff]
      %v1866 = vld [vmem:[#allocation3 + $0x28] sm:$0xff]
      %v1867 = vld [vmem:[#allocation3 + $0x30] sm:$0xff]
      %v1868 = vld [vmem:[#allocation3 + $0x38] sm:$0xff]
      %v1869 = vld [vmem:[#allocation3 + $0x40] sm:$0xff]
      %v1870 = vld [vmem:[#allocation3 + $0x48] sm:$0xff]
      %v1871 = vld [vmem:[#allocation3 + $0x50] sm:$0xff]
      %v1872 = vld [vmem:[#allocation3 + $0x58] sm:$0xff]
      %v1873 = vld [vmem:[#allocation3 + $0x60] sm:$0xff]
      %v1874 = vld [vmem:[#allocation3 + $0x68] sm:$0xff]
      %v1875 = vld [vmem:[#allocation3 + $0x70] sm:$0xff]
      %v1876 = vld [vmem:[#allocation3 + $0x78] sm:$0xff]
      %v1877 = vld [vmem:[#allocation3 + $0x80] sm:$0xff]
      %v1878 = vld [vmem:[#allocation3 + $0x88] sm:$0xff]
      %1880 = vset.pattern.permute.xlu0 0
      %1881 = vperm.xlu0 %1880, %v1689
      %v1882 = vpop.permute.xlu0 %1881
      %1885 = vset.pattern.permute.xlu0 0
      %1886 = vperm.xlu0 %1885, %v1690
      %v1887 = vpop.permute.xlu0 %1886
      %v1891 = vunpack.c.l.b16 %v1686
      %v1892 = vunpack.c.h.b16 %v1686
      %v1893 = vunpack.c.l.b16 %v1687
      %v1894 = vunpack.c.h.b16 %v1687
      %v1895 = vpack.c.b16 %v1893, %v1891
      %v1896 = vpack.c.b16 %v1894, %v1892
      %v1899 = vsel %vm781, %v1896, 0
      %1901 = vmatprep.subr.bf16.mxu0 %v1862
      %1902 = vmatpush1.bf16.msra.mxu0 %v1861
      %1903 = vmatprep.subr.bf16.mxu0 %v1864
      %1904 = vmatpush1.bf16.msra.mxu0 %v1863
      %1905 = vmatprep.subr.bf16.mxu0 %v1866
      %1906 = vmatpush1.bf16.msra.mxu0 %v1865
      %1907 = vmatprep.subr.bf16.mxu0 %v1868
      %1908 = vmatpush1.bf16.msra.mxu0 %v1867
      %1909 = vmatprep.subr.bf16.mxu0 %v1870
      %1910 = vmatpush1.bf16.msra.mxu0 %v1869
      %1911 = vmatprep.subr.bf16.mxu0 %v1872
      %1912 = vmatpush1.bf16.msra.mxu0 %v1871
      %1913 = vmatprep.subr.bf16.mxu0 %v1874
      %1914 = vmatpush1.bf16.msra.mxu0 %v1873
      %1915 = vmatprep.subr.bf16.mxu0 %v1876
      %1916 = vmatpush1.bf16.msra.mxu0 %v1875
      %1917 = vmatprep.subr.bf16.mxu0 %v1878
      %1918 = vmatpush1.bf16.msra.mxu0 %v1877
      %1919 = vmatprep.subr.bf16.mxu0 0
      %1920 = vmatpush1.bf16.msra.mxu0 0
      %1921 = vmatprep.subr.bf16.mxu0 0
      %1922 = vmatpush1.bf16.msra.mxu0 0
      %1923 = vmatprep.subr.bf16.mxu0 0
      %1924 = vmatpush1.bf16.msra.mxu0 0
      %1925 = vmatprep.subr.bf16.mxu0 0
      %1926 = vmatpush1.bf16.msra.mxu0 0
      %1927 = vmatprep.subr.bf16.mxu0 0
      %1928 = vmatpush1.bf16.msra.mxu0 0
      %1929 = vmatprep.subr.bf16.mxu0 0
      %1930 = vmatpush1.bf16.msra.mxu0 0
      %1931 = vmatprep.subr.bf16.mxu0 0
      %1932 = vmatpush1.bf16.msra.mxu0 0
      %1933 = vmatprep.mubr.bf16.mxu0 %v1899
      %1934 = vmatmul.mubr.bf16.gmra.mrb[0].mxu0 %v1895
      %v1935 = vpop.f32.mrb[0].mxu0
      %v1936 = vadd.f32 %v1882, %v1935
      %v1937 = vpop.f32.mrb[0].mxu0
      %v1938 = vadd.f32 %v1882, %v1937
      %v1939 = vpop.f32.mrb[0].mxu0
      %v1940 = vadd.f32 %v1887, %v1939
      %v1941 = vpop.f32.mrb[0].mxu0
      %v1942 = vadd.f32 %v1887, %v1941
      %1943 = vdwg.mxu0
      %v1944 = vadd.f32 %v1936, %v1938
      %1945 = vadd.xlane.f32.xlu0 %v1944
      %v1946 = vpop.xlane.xlu0 %1945
      %v1947 = vadd.f32 %v1940, %v1942
      %1948 = vadd.xlane.f32.xlu0 %v1947
      %v1949 = vpop.xlane.xlu0 %1948
      %v1950 = vmul.f32 %v1946, %v1354
      %v1951 = vmul.f32 %v1949, %v1354
      %s1952 = scalar_lea.vmem %s6, 16
      %v1953 = vld [vmem:[%s1952] sm:$0xff]
      %v1954 = vld [vmem:[%s1952 + $0x8] sm:$0xff]
      %v1955 = vmul.f32 %v1953, %v1950
      %v1956 = vmul.f32 %v1954, %v1951
      %v1957 = vsel %vm1361, %v1955, 0.0
      %v1958 = vsel %vm1361, %v1956, 0.0
      %v1959 = vadd.f32 %v1957, %v1958
      %v1960 = vrot.slane %v1959, 4
      %v1961 = vadd.f32 %v1959, %v1960
      %v1962 = vrot.slane %v1961, 2
      %v1963 = vadd.f32 %v1961, %v1962
      %v1964 = vrot.slane %v1963, 1
      %v1965 = vadd.f32 %v1963, %v1964
      %s1966 = scalar_lea.vmem %s7, 1
      %v1967 = vld [vmem:[%s1966] sm:$0x1]
      %v1968 = vadd.f32 %v1965, %v1967
      %v1969 = vmax.f32 %v1968, 0.0
      %s1970 = scalar_lea.vmem %s8, 16
      %v1971 = vld [vmem:[%s1970] sm:$0xff]
      %v1972 = vld [vmem:[%s1970 + $0x8] sm:$0xff]
      %v1973 = vlaneseq
      %v1974 = vshrl.u32 %v1973, 7
      %v1975 = vsub.s32 0, %v1974
      %v1976 = vrot.slane %v1969, %v1975
      %v1977 = vmul.f32 %v1971, %v1976
      %v1978 = vmul.f32 %v1972, %v1976
      %v1979 = vsel %vm1361, %v1977, 0.0
      %1980 = vadd.xlane.f32.xlu0 %v1979
      %v1981 = vpop.xlane.xlu0 %1980
      %v1982 = vsel %vm1361, %v1978, 0.0
      %1983 = vadd.xlane.f32.xlu0 %v1982
      %v1984 = vpop.xlane.xlu0 %1983
      %s1985 = scalar_lea.vmem %s9, 16
      %v1986 = vld [vmem:[%s1985] sm:$0xff]
      %v1987 = vld [vmem:[%s1985 + $0x8] sm:$0xff]
      %v1988 = vadd.f32 %v1981, %v1986
      %v1989 = vadd.f32 %v1984, %v1987
      %v1990 = vxor.u32 %v1988, 2147483648
      %v1991 = vxor.u32 %v1989, 2147483648
      %v1992 = vmul.f32 %v1990, 1.442695
      %v1993 = vpow.pop %v1992
      %v1994 = vmul.f32 %v1991, 1.442695
      %v1995 = vpow.pop %v1994
      %v1996 = vadd.f32 %v1993, 1.0
      %v1997 = vadd.f32 %v1995, 1.0
      %v1998 = vrcp.pop %v1996
      %v1999 = vmul.f32 1.0, %v1998
      %v2000 = vrcp.pop %v1997
      %v2001 = vmul.f32 1.0, %v2000
      %2003 = vset.pattern.permute.xlu0 0
      %2004 = vperm.xlu0 %2003, %v1999
      %v2005 = vpop.permute.xlu0 %2004
      %2008 = vset.pattern.permute.xlu0 0
      %2009 = vperm.xlu0 %2008, %v2001
      %v2010 = vpop.permute.xlu0 %2009
      %v2012 = vmul.f32 %v1936, %v2005
      %v2013 = vmul.f32 %v1938, %v2005
      %v2014 = vmul.f32 %v1940, %v2010
      %v2015 = vmul.f32 %v1942, %v2010
      %v2016 = vadd.f32 %v2012, %v1418
      %v2017 = vadd.f32 %v2013, %v1419
      %v2018 = vadd.f32 %v2014, %v1420
      %v2019 = vadd.f32 %v2015, %v1421
      %s2020 = scalar_lea.vmem %s4, 64
      %v2021 = vld [vmem:[%s2020] sm:$0xff]
      %v2022 = vld [vmem:[%s2020 + $0x8] sm:$0xff]
      %s2023 = scalar_lea.vmem %s5, 64
      %v2024 = vld [vmem:[%s2023] sm:$0xff]
      %v2025 = vld [vmem:[%s2023 + $0x8] sm:$0xff]
      %v2026 = vpack.c.bf16 %v2018, %v2016
      %v2027 = vpack.c.bf16 %v2019, %v2017
      %2028 = vst [vmem:[#allocation2 + $0x8] sm:$0xff] %v2026
      %2029 = vst [vmem:[#allocation2 + $0x10] sm:$0xff] %v2027
      %v2030 = vld [vmem:[#allocation2] sm:$0xff]
      %v2031 = vld [vmem:[#allocation2 + $0x8] sm:$0xff]
      %v2032 = vld [vmem:[#allocation2 + $0x10] sm:$0xff]
      %v2033 = vsel %vm517, %v2030, 0
      %v2034 = vsel %vm518, %v2031, 0
      %v2035 = vsel %vm519, %v2032, 0
      %2039 = vrot.lane.b32.xlu0 %v2033, 17
      %v2040 = vpop.permute.xlu0 %2039
      %2041 = vrot.lane.b32.xlu0 %v2034, 17
      %v2042 = vpop.permute.xlu0 %2041
      %2043 = vrot.lane.b32.xlu0 %v2035, 17
      %v2044 = vpop.permute.xlu0 %2043
      %v2045 = vsel %vm532, %v2040, %v2042
      %v2046 = vsel %vm532, %v2042, %v2044
      %2049 = vst [vmem:[#allocation3] sm:$0xff] %v2045
      %2050 = vst [vmem:[#allocation3 + $0x8] sm:$0xff] %v2046
      %v2051 = vld [vmem:[#allocation2] sm:$0xff]
      %v2052 = vld [vmem:[#allocation2 + $0x8] sm:$0xff]
      %v2053 = vld [vmem:[#allocation2 + $0x10] sm:$0xff]
      %2057 = vrot.lane.b32.xlu0 %v2051, 16
      %v2058 = vpop.permute.xlu0 %2057
      %2059 = vrot.lane.b32.xlu0 %v2052, 16
      %v2060 = vpop.permute.xlu0 %2059
      %2061 = vrot.lane.b32.xlu0 %v2053, 16
      %v2062 = vpop.permute.xlu0 %2061
      %v2063 = vsel %vm551, %v2058, %v2060
      %v2064 = vsel %vm551, %v2060, %v2062
      %2067 = vst [vmem:[#allocation3 + $0x10] sm:$0xff] %v2063
      %2068 = vst [vmem:[#allocation3 + $0x18] sm:$0xff] %v2064
      %v2069 = vld [vmem:[#allocation2] sm:$0xff]
      %v2070 = vld [vmem:[#allocation2 + $0x8] sm:$0xff]
      %v2071 = vld [vmem:[#allocation2 + $0x10] sm:$0xff]
      %v2072 = vsel %vm581, %v2069, 0
      %v2073 = vsel %vm582, %v2070, 0
      %v2074 = vsel %vm583, %v2071, 0
      %2078 = vrot.lane.b32.xlu0 %v2072, 15
      %v2079 = vpop.permute.xlu0 %2078
      %2080 = vrot.lane.b32.xlu0 %v2073, 15
      %v2081 = vpop.permute.xlu0 %2080
      %2082 = vrot.lane.b32.xlu0 %v2074, 15
      %v2083 = vpop.permute.xlu0 %2082
      %v2084 = vsel %vm596, %v2079, %v2081
      %v2085 = vsel %vm596, %v2081, %v2083
      %2088 = vst [vmem:[#allocation3 + $0x20] sm:$0xff] %v2084
      %2089 = vst [vmem:[#allocation3 + $0x28] sm:$0xff] %v2085
      %v2090 = vld [vmem:[#allocation2] sm:$0xff]
      %v2091 = vld [vmem:[#allocation2 + $0x8] sm:$0xff]
      %v2092 = vld [vmem:[#allocation2 + $0x10] sm:$0xff]
      %v2093 = vsel %vm612, %v2090, 0
      %v2094 = vsel %vm613, %v2091, 0
      %v2095 = vsel %vm614, %v2092, 0
      %2099 = vrot.lane.b32.xlu0 %v2093, 1
      %v2100 = vpop.permute.xlu0 %2099
      %2101 = vrot.lane.b32.xlu0 %v2094, 1
      %v2102 = vpop.permute.xlu0 %2101
      %2103 = vrot.lane.b32.xlu0 %v2095, 1
      %v2104 = vpop.permute.xlu0 %2103
      %v2105 = vsel %vm627, %v2100, %v2102
      %v2106 = vsel %vm627, %v2102, %v2104
      %2109 = vst [vmem:[#allocation3 + $0x30] sm:$0xff] %v2105
      %2110 = vst [vmem:[#allocation3 + $0x38] sm:$0xff] %v2106
      %v2111 = vld [vmem:[#allocation2 + $0x8] sm:$0xff]
      %v2112 = vld [vmem:[#allocation2 + $0x10] sm:$0xff]
      %2113 = vst [vmem:[#allocation3 + $0x40] sm:$0xff] %v2111
      %2114 = vst [vmem:[#allocation3 + $0x48] sm:$0xff] %v2112
      %v2115 = vld [vmem:[#allocation2 + $0x8] sm:$0xff]
      %v2116 = vld [vmem:[#allocation2 + $0x10] sm:$0xff]
      %v2117 = vld [vmem:[#allocation2 + $0x18] sm:$0xff]
      %v2118 = vsel %vm646, %v2115, 0
      %v2119 = vsel %vm647, %v2116, 0
      %v2120 = vsel %vm648, %v2117, 0
      %2124 = vrot.lane.b32.xlu0 %v2118, 127
      %v2125 = vpop.permute.xlu0 %2124
      %2126 = vrot.lane.b32.xlu0 %v2119, 127
      %v2127 = vpop.permute.xlu0 %2126
      %2128 = vrot.lane.b32.xlu0 %v2120, 127
      %v2129 = vpop.permute.xlu0 %2128
      %v2130 = vsel %vm610, %v2125, %v2127
      %v2131 = vsel %vm610, %v2127, %v2129
      %2134 = vst [vmem:[#allocation3 + $0x50] sm:$0xff] %v2130
      %2135 = vst [vmem:[#allocation3 + $0x58] sm:$0xff] %v2131
      %v2136 = vld [vmem:[#allocation2 + $0x8] sm:$0xff]
      %v2137 = vld [vmem:[#allocation2 + $0x10] sm:$0xff]
      %v2138 = vld [vmem:[#allocation2 + $0x18] sm:$0xff]
      %v2139 = vsel %vm675, %v2136, 0
      %v2140 = vsel %vm676, %v2137, 0
      %v2141 = vsel %vm677, %v2138, 0
      %2145 = vrot.lane.b32.xlu0 %v2139, 113
      %v2146 = vpop.permute.xlu0 %2145
      %2147 = vrot.lane.b32.xlu0 %v2140, 113
      %v2148 = vpop.permute.xlu0 %2147
      %2149 = vrot.lane.b32.xlu0 %v2141, 113
      %v2150 = vpop.permute.xlu0 %2149
      %v2151 = vsel %vm579, %v2146, %v2148
      %v2152 = vsel %vm579, %v2148, %v2150
      %2155 = vst [vmem:[#allocation3 + $0x60] sm:$0xff] %v2151
      %2156 = vst [vmem:[#allocation3 + $0x68] sm:$0xff] %v2152
      %v2157 = vld [vmem:[#allocation2 + $0x8] sm:$0xff]
      %v2158 = vld [vmem:[#allocation2 + $0x10] sm:$0xff]
      %v2159 = vld [vmem:[#allocation2 + $0x18] sm:$0xff]
      %2163 = vrot.lane.b32.xlu0 %v2157, 112
      %v2164 = vpop.permute.xlu0 %2163
      %2165 = vrot.lane.b32.xlu0 %v2158, 112
      %v2166 = vpop.permute.xlu0 %2165
      %2167 = vrot.lane.b32.xlu0 %v2159, 112
      %v2168 = vpop.permute.xlu0 %2167
      %v2169 = vsel %vm708, %v2164, %v2166
      %v2170 = vsel %vm708, %v2166, %v2168
      %2173 = vst [vmem:[#allocation3 + $0x70] sm:$0xff] %v2169
      %2174 = vst [vmem:[#allocation3 + $0x78] sm:$0xff] %v2170
      %v2175 = vld [vmem:[#allocation2 + $0x8] sm:$0xff]
      %v2176 = vld [vmem:[#allocation2 + $0x10] sm:$0xff]
      %v2177 = vld [vmem:[#allocation2 + $0x18] sm:$0xff]
      %v2178 = vsel %vm723, %v2175, 0
      %v2179 = vsel %vm724, %v2176, 0
      %v2180 = vsel %vm725, %v2177, 0
      %2184 = vrot.lane.b32.xlu0 %v2178, 111
      %v2185 = vpop.permute.xlu0 %2184
      %2186 = vrot.lane.b32.xlu0 %v2179, 111
      %v2187 = vpop.permute.xlu0 %2186
      %2188 = vrot.lane.b32.xlu0 %v2180, 111
      %v2189 = vpop.permute.xlu0 %2188
      %v2190 = vsel %vm515, %v2185, %v2187
      %v2191 = vsel %vm515, %v2187, %v2189
      %2194 = vst [vmem:[#allocation3 + $0x80] sm:$0xff] %v2190
      %2195 = vst [vmem:[#allocation3 + $0x88] sm:$0xff] %v2191
      %v2196 = vld [vmem:[#allocation3] sm:$0xff]
      %v2197 = vld [vmem:[#allocation3 + $0x8] sm:$0xff]
      %v2198 = vld [vmem:[#allocation3 + $0x10] sm:$0xff]
      %v2199 = vld [vmem:[#allocation3 + $0x18] sm:$0xff]
      %v2200 = vld [vmem:[#allocation3 + $0x20] sm:$0xff]
      %v2201 = vld [vmem:[#allocation3 + $0x28] sm:$0xff]
      %v2202 = vld [vmem:[#allocation3 + $0x30] sm:$0xff]
      %v2203 = vld [vmem:[#allocation3 + $0x38] sm:$0xff]
      %v2204 = vld [vmem:[#allocation3 + $0x40] sm:$0xff]
      %v2205 = vld [vmem:[#allocation3 + $0x48] sm:$0xff]
      %v2206 = vld [vmem:[#allocation3 + $0x50] sm:$0xff]
      %v2207 = vld [vmem:[#allocation3 + $0x58] sm:$0xff]
      %v2208 = vld [vmem:[#allocation3 + $0x60] sm:$0xff]
      %v2209 = vld [vmem:[#allocation3 + $0x68] sm:$0xff]
      %v2210 = vld [vmem:[#allocation3 + $0x70] sm:$0xff]
      %v2211 = vld [vmem:[#allocation3 + $0x78] sm:$0xff]
      %v2212 = vld [vmem:[#allocation3 + $0x80] sm:$0xff]
      %v2213 = vld [vmem:[#allocation3 + $0x88] sm:$0xff]
      %2215 = vset.pattern.permute.xlu0 0
      %2216 = vperm.xlu0 %2215, %v2024
      %v2217 = vpop.permute.xlu0 %2216
      %2220 = vset.pattern.permute.xlu0 0
      %2221 = vperm.xlu0 %2220, %v2025
      %v2222 = vpop.permute.xlu0 %2221
      %v2226 = vunpack.c.l.b16 %v2021
      %v2227 = vunpack.c.h.b16 %v2021
      %v2228 = vunpack.c.l.b16 %v2022
      %v2229 = vunpack.c.h.b16 %v2022
      %v2230 = vpack.c.b16 %v2228, %v2226
      %v2231 = vpack.c.b16 %v2229, %v2227
      %v2234 = vsel %vm781, %v2231, 0
      %2236 = vmatprep.subr.bf16.mxu0 %v2197
      %2237 = vmatpush1.bf16.msra.mxu0 %v2196
      %2238 = vmatprep.subr.bf16.mxu0 %v2199
      %2239 = vmatpush1.bf16.msra.mxu0 %v2198
      %2240 = vmatprep.subr.bf16.mxu0 %v2201
      %2241 = vmatpush1.bf16.msra.mxu0 %v2200
      %2242 = vmatprep.subr.bf16.mxu0 %v2203
      %2243 = vmatpush1.bf16.msra.mxu0 %v2202
      %2244 = vmatprep.subr.bf16.mxu0 %v2205
      %2245 = vmatpush1.bf16.msra.mxu0 %v2204
      %2246 = vmatprep.subr.bf16.mxu0 %v2207
      %2247 = vmatpush1.bf16.msra.mxu0 %v2206
      %2248 = vmatprep.subr.bf16.mxu0 %v2209
      %2249 = vmatpush1.bf16.msra.mxu0 %v2208
      %2250 = vmatprep.subr.bf16.mxu0 %v2211
      %2251 = vmatpush1.bf16.msra.mxu0 %v2210
      %2252 = vmatprep.subr.bf16.mxu0 %v2213
      %2253 = vmatpush1.bf16.msra.mxu0 %v2212
      %2254 = vmatprep.subr.bf16.mxu0 0
      %2255 = vmatpush1.bf16.msra.mxu0 0
      %2256 = vmatprep.subr.bf16.mxu0 0
      %2257 = vmatpush1.bf16.msra.mxu0 0
      %2258 = vmatprep.subr.bf16.mxu0 0
      %2259 = vmatpush1.bf16.msra.mxu0 0
      %2260 = vmatprep.subr.bf16.mxu0 0
      %2261 = vmatpush1.bf16.msra.mxu0 0
      %2262 = vmatprep.subr.bf16.mxu0 0
      %2263 = vmatpush1.bf16.msra.mxu0 0
      %2264 = vmatprep.subr.bf16.mxu0 0
      %2265 = vmatpush1.bf16.msra.mxu0 0
      %2266 = vmatprep.subr.bf16.mxu0 0
      %2267 = vmatpush1.bf16.msra.mxu0 0
      %2268 = vmatprep.mubr.bf16.mxu0 %v2234
      %2269 = vmatmul.mubr.bf16.gmra.mrb[0].mxu0 %v2230
      %v2270 = vpop.f32.mrb[0].mxu0
      %v2271 = vadd.f32 %v2217, %v2270
      %v2272 = vpop.f32.mrb[0].mxu0
      %v2273 = vadd.f32 %v2217, %v2272
      %v2274 = vpop.f32.mrb[0].mxu0
      %v2275 = vadd.f32 %v2222, %v2274
      %v2276 = vpop.f32.mrb[0].mxu0
      %v2277 = vadd.f32 %v2222, %v2276
      %2278 = vdwg.mxu0
      %v2279 = vmax.f32 %v2271, 0.0
      %v2280 = vmax.f32 %v2273, 0.0
      %v2281 = vmax.f32 %v2275, 0.0
      %v2282 = vmax.f32 %v2277, 0.0
      %s2283 = scalar_lea.vmem %s4, 80
      %v2284 = vld [vmem:[%s2283] sm:$0xff]
      %v2285 = vld [vmem:[%s2283 + $0x8] sm:$0xff]
      %s2286 = scalar_lea.vmem %s5, 80
      %v2287 = vld [vmem:[%s2286] sm:$0xff]
      %v2288 = vld [vmem:[%s2286 + $0x8] sm:$0xff]
      %v2289 = vpack.c.bf16 %v2281, %v2279
      %v2290 = vpack.c.bf16 %v2282, %v2280
      %2291 = vst [vmem:[#allocation2 + $0x8] sm:$0xff] %v2289
      %2292 = vst [vmem:[#allocation2 + $0x10] sm:$0xff] %v2290
      %v2293 = vld [vmem:[#allocation2] sm:$0xff]
      %v2294 = vld [vmem:[#allocation2 + $0x8] sm:$0xff]
      %v2295 = vld [vmem:[#allocation2 + $0x10] sm:$0xff]
      %v2296 = vsel %vm517, %v2293, 0
      %v2297 = vsel %vm518, %v2294, 0
      %v2298 = vsel %vm519, %v2295, 0
      %2302 = vrot.lane.b32.xlu0 %v2296, 17
      %v2303 = vpop.permute.xlu0 %2302
      %2304 = vrot.lane.b32.xlu0 %v2297, 17
      %v2305 = vpop.permute.xlu0 %2304
      %2306 = vrot.lane.b32.xlu0 %v2298, 17
      %v2307 = vpop.permute.xlu0 %2306
      %v2308 = vsel %vm532, %v2303, %v2305
      %v2309 = vsel %vm532, %v2305, %v2307
      %2312 = vst [vmem:[#allocation3] sm:$0xff] %v2308
      %2313 = vst [vmem:[#allocation3 + $0x8] sm:$0xff] %v2309
      %v2314 = vld [vmem:[#allocation2] sm:$0xff]
      %v2315 = vld [vmem:[#allocation2 + $0x8] sm:$0xff]
      %v2316 = vld [vmem:[#allocation2 + $0x10] sm:$0xff]
      %2320 = vrot.lane.b32.xlu0 %v2314, 16
      %v2321 = vpop.permute.xlu0 %2320
      %2322 = vrot.lane.b32.xlu0 %v2315, 16
      %v2323 = vpop.permute.xlu0 %2322
      %2324 = vrot.lane.b32.xlu0 %v2316, 16
      %v2325 = vpop.permute.xlu0 %2324
      %v2326 = vsel %vm551, %v2321, %v2323
      %v2327 = vsel %vm551, %v2323, %v2325
      %2330 = vst [vmem:[#allocation3 + $0x10] sm:$0xff] %v2326
      %2331 = vst [vmem:[#allocation3 + $0x18] sm:$0xff] %v2327
      %v2332 = vld [vmem:[#allocation2] sm:$0xff]
      %v2333 = vld [vmem:[#allocation2 + $0x8] sm:$0xff]
      %v2334 = vld [vmem:[#allocation2 + $0x10] sm:$0xff]
      %v2335 = vsel %vm581, %v2332, 0
      %v2336 = vsel %vm582, %v2333, 0
      %v2337 = vsel %vm583, %v2334, 0
      %2341 = vrot.lane.b32.xlu0 %v2335, 15
      %v2342 = vpop.permute.xlu0 %2341
      %2343 = vrot.lane.b32.xlu0 %v2336, 15
      %v2344 = vpop.permute.xlu0 %2343
      %2345 = vrot.lane.b32.xlu0 %v2337, 15
      %v2346 = vpop.permute.xlu0 %2345
      %v2347 = vsel %vm596, %v2342, %v2344
      %v2348 = vsel %vm596, %v2344, %v2346
      %2351 = vst [vmem:[#allocation3 + $0x20] sm:$0xff] %v2347
      %2352 = vst [vmem:[#allocation3 + $0x28] sm:$0xff] %v2348
      %v2353 = vld [vmem:[#allocation2] sm:$0xff]
      %v2354 = vld [vmem:[#allocation2 + $0x8] sm:$0xff]
      %v2355 = vld [vmem:[#allocation2 + $0x10] sm:$0xff]
      %v2356 = vsel %vm612, %v2353, 0
      %v2357 = vsel %vm613, %v2354, 0
      %v2358 = vsel %vm614, %v2355, 0
      %2362 = vrot.lane.b32.xlu0 %v2356, 1
      %v2363 = vpop.permute.xlu0 %2362
      %2364 = vrot.lane.b32.xlu0 %v2357, 1
      %v2365 = vpop.permute.xlu0 %2364
      %2366 = vrot.lane.b32.xlu0 %v2358, 1
      %v2367 = vpop.permute.xlu0 %2366
      %v2368 = vsel %vm627, %v2363, %v2365
      %v2369 = vsel %vm627, %v2365, %v2367
      %2372 = vst [vmem:[#allocation3 + $0x30] sm:$0xff] %v2368
      %2373 = vst [vmem:[#allocation3 + $0x38] sm:$0xff] %v2369
      %v2374 = vld [vmem:[#allocation2 + $0x8] sm:$0xff]
      %v2375 = vld [vmem:[#allocation2 + $0x10] sm:$0xff]
      %2376 = vst [vmem:[#allocation3 + $0x40] sm:$0xff] %v2374
      %2377 = vst [vmem:[#allocation3 + $0x48] sm:$0xff] %v2375
      %v2378 = vld [vmem:[#allocation2 + $0x8] sm:$0xff]
      %v2379 = vld [vmem:[#allocation2 + $0x10] sm:$0xff]
      %v2380 = vld [vmem:[#allocation2 + $0x18] sm:$0xff]
      %v2381 = vsel %vm646, %v2378, 0
      %v2382 = vsel %vm647, %v2379, 0
      %v2383 = vsel %vm648, %v2380, 0
      %2387 = vrot.lane.b32.xlu0 %v2381, 127
      %v2388 = vpop.permute.xlu0 %2387
      %2389 = vrot.lane.b32.xlu0 %v2382, 127
      %v2390 = vpop.permute.xlu0 %2389
      %2391 = vrot.lane.b32.xlu0 %v2383, 127
      %v2392 = vpop.permute.xlu0 %2391
      %v2393 = vsel %vm610, %v2388, %v2390
      %v2394 = vsel %vm610, %v2390, %v2392
      %2397 = vst [vmem:[#allocation3 + $0x50] sm:$0xff] %v2393
      %2398 = vst [vmem:[#allocation3 + $0x58] sm:$0xff] %v2394
      %v2399 = vld [vmem:[#allocation2 + $0x8] sm:$0xff]
      %v2400 = vld [vmem:[#allocation2 + $0x10] sm:$0xff]
      %v2401 = vld [vmem:[#allocation2 + $0x18] sm:$0xff]
      %v2402 = vsel %vm675, %v2399, 0
      %v2403 = vsel %vm676, %v2400, 0
      %v2404 = vsel %vm677, %v2401, 0
      %2408 = vrot.lane.b32.xlu0 %v2402, 113
      %v2409 = vpop.permute.xlu0 %2408
      %2410 = vrot.lane.b32.xlu0 %v2403, 113
      %v2411 = vpop.permute.xlu0 %2410
      %2412 = vrot.lane.b32.xlu0 %v2404, 113
      %v2413 = vpop.permute.xlu0 %2412
      %v2414 = vsel %vm579, %v2409, %v2411
      %v2415 = vsel %vm579, %v2411, %v2413
      %2418 = vst [vmem:[#allocation3 + $0x60] sm:$0xff] %v2414
      %2419 = vst [vmem:[#allocation3 + $0x68] sm:$0xff] %v2415
      %v2420 = vld [vmem:[#allocation2 + $0x8] sm:$0xff]
      %v2421 = vld [vmem:[#allocation2 + $0x10] sm:$0xff]
      %v2422 = vld [vmem:[#allocation2 + $0x18] sm:$0xff]
      %2426 = vrot.lane.b32.xlu0 %v2420, 112
      %v2427 = vpop.permute.xlu0 %2426
      %2428 = vrot.lane.b32.xlu0 %v2421, 112
      %v2429 = vpop.permute.xlu0 %2428
      %2430 = vrot.lane.b32.xlu0 %v2422, 112
      %v2431 = vpop.permute.xlu0 %2430
      %v2432 = vsel %vm708, %v2427, %v2429
      %v2433 = vsel %vm708, %v2429, %v2431
      %2436 = vst [vmem:[#allocation3 + $0x70] sm:$0xff] %v2432
      %2437 = vst [vmem:[#allocation3 + $0x78] sm:$0xff] %v2433
      %v2438 = vld [vmem:[#allocation2 + $0x8] sm:$0xff]
      %v2439 = vld [vmem:[#allocation2 + $0x10] sm:$0xff]
      %v2440 = vld [vmem:[#allocation2 + $0x18] sm:$0xff]
      %v2441 = vsel %vm723, %v2438, 0
      %v2442 = vsel %vm724, %v2439, 0
      %v2443 = vsel %vm725, %v2440, 0
      %2447 = vrot.lane.b32.xlu0 %v2441, 111
      %v2448 = vpop.permute.xlu0 %2447
      %2449 = vrot.lane.b32.xlu0 %v2442, 111
      %v2450 = vpop.permute.xlu0 %2449
      %2451 = vrot.lane.b32.xlu0 %v2443, 111
      %v2452 = vpop.permute.xlu0 %2451
      %v2453 = vsel %vm515, %v2448, %v2450
      %v2454 = vsel %vm515, %v2450, %v2452
      %2457 = vst [vmem:[#allocation3 + $0x80] sm:$0xff] %v2453
      %2458 = vst [vmem:[#allocation3 + $0x88] sm:$0xff] %v2454
      %v2459 = vld [vmem:[#allocation3] sm:$0xff]
      %v2460 = vld [vmem:[#allocation3 + $0x8] sm:$0xff]
      %v2461 = vld [vmem:[#allocation3 + $0x10] sm:$0xff]
      %v2462 = vld [vmem:[#allocation3 + $0x18] sm:$0xff]
      %v2463 = vld [vmem:[#allocation3 + $0x20] sm:$0xff]
      %v2464 = vld [vmem:[#allocation3 + $0x28] sm:$0xff]
      %v2465 = vld [vmem:[#allocation3 + $0x30] sm:$0xff]
      %v2466 = vld [vmem:[#allocation3 + $0x38] sm:$0xff]
      %v2467 = vld [vmem:[#allocation3 + $0x40] sm:$0xff]
      %v2468 = vld [vmem:[#allocation3 + $0x48] sm:$0xff]
      %v2469 = vld [vmem:[#allocation3 + $0x50] sm:$0xff]
      %v2470 = vld [vmem:[#allocation3 + $0x58] sm:$0xff]
      %v2471 = vld [vmem:[#allocation3 + $0x60] sm:$0xff]
      %v2472 = vld [vmem:[#allocation3 + $0x68] sm:$0xff]
      %v2473 = vld [vmem:[#allocation3 + $0x70] sm:$0xff]
      %v2474 = vld [vmem:[#allocation3 + $0x78] sm:$0xff]
      %v2475 = vld [vmem:[#allocation3 + $0x80] sm:$0xff]
      %v2476 = vld [vmem:[#allocation3 + $0x88] sm:$0xff]
      %2478 = vset.pattern.permute.xlu0 0
      %2479 = vperm.xlu0 %2478, %v2287
      %v2480 = vpop.permute.xlu0 %2479
      %2483 = vset.pattern.permute.xlu0 0
      %2484 = vperm.xlu0 %2483, %v2288
      %v2485 = vpop.permute.xlu0 %2484
      %v2489 = vunpack.c.l.b16 %v2284
      %v2490 = vunpack.c.h.b16 %v2284
      %v2491 = vunpack.c.l.b16 %v2285
      %v2492 = vunpack.c.h.b16 %v2285
      %v2493 = vpack.c.b16 %v2491, %v2489
      %v2494 = vpack.c.b16 %v2492, %v2490
      %v2497 = vsel %vm781, %v2494, 0
      %2499 = vmatprep.subr.bf16.mxu0 %v2460
      %2500 = vmatpush1.bf16.msra.mxu0 %v2459
      %2501 = vmatprep.subr.bf16.mxu0 %v2462
      %2502 = vmatpush1.bf16.msra.mxu0 %v2461
      %2503 = vmatprep.subr.bf16.mxu0 %v2464
      %2504 = vmatpush1.bf16.msra.mxu0 %v2463
      %2505 = vmatprep.subr.bf16.mxu0 %v2466
      %2506 = vmatpush1.bf16.msra.mxu0 %v2465
      %2507 = vmatprep.subr.bf16.mxu0 %v2468
      %2508 = vmatpush1.bf16.msra.mxu0 %v2467
      %2509 = vmatprep.subr.bf16.mxu0 %v2470
      %2510 = vmatpush1.bf16.msra.mxu0 %v2469
      %2511 = vmatprep.subr.bf16.mxu0 %v2472
      %2512 = vmatpush1.bf16.msra.mxu0 %v2471
      %2513 = vmatprep.subr.bf16.mxu0 %v2474
      %2514 = vmatpush1.bf16.msra.mxu0 %v2473
      %2515 = vmatprep.subr.bf16.mxu0 %v2476
      %2516 = vmatpush1.bf16.msra.mxu0 %v2475
      %2517 = vmatprep.subr.bf16.mxu0 0
      %2518 = vmatpush1.bf16.msra.mxu0 0
      %2519 = vmatprep.subr.bf16.mxu0 0
      %2520 = vmatpush1.bf16.msra.mxu0 0
      %2521 = vmatprep.subr.bf16.mxu0 0
      %2522 = vmatpush1.bf16.msra.mxu0 0
      %2523 = vmatprep.subr.bf16.mxu0 0
      %2524 = vmatpush1.bf16.msra.mxu0 0
      %2525 = vmatprep.subr.bf16.mxu0 0
      %2526 = vmatpush1.bf16.msra.mxu0 0
      %2527 = vmatprep.subr.bf16.mxu0 0
      %2528 = vmatpush1.bf16.msra.mxu0 0
      %2529 = vmatprep.subr.bf16.mxu0 0
      %2530 = vmatpush1.bf16.msra.mxu0 0
      %2531 = vmatprep.mubr.bf16.mxu0 %v2497
      %2532 = vmatmul.mubr.bf16.gmra.mrb[0].mxu0 %v2493
      %v2533 = vpop.f32.mrb[0].mxu0
      %v2534 = vadd.f32 %v2480, %v2533
      %v2535 = vpop.f32.mrb[0].mxu0
      %v2536 = vadd.f32 %v2480, %v2535
      %v2537 = vpop.f32.mrb[0].mxu0
      %v2538 = vadd.f32 %v2485, %v2537
      %v2539 = vpop.f32.mrb[0].mxu0
      %v2540 = vadd.f32 %v2485, %v2539
      %2541 = vdwg.mxu0
      %v2542 = vadd.f32 %v2534, %v2536
      %2543 = vadd.xlane.f32.xlu0 %v2542
      %v2544 = vpop.xlane.xlu0 %2543
      %v2545 = vadd.f32 %v2538, %v2540
      %2546 = vadd.xlane.f32.xlu0 %v2545
      %v2547 = vpop.xlane.xlu0 %2546
      %v2548 = vmul.f32 %v2544, %v1354
      %v2549 = vmul.f32 %v2547, %v1354
      %s2550 = scalar_lea.vmem %s6, 32
      %v2551 = vld [vmem:[%s2550] sm:$0xff]
      %v2552 = vld [vmem:[%s2550 + $0x8] sm:$0xff]
      %v2553 = vmul.f32 %v2551, %v2548
      %v2554 = vmul.f32 %v2552, %v2549
      %v2555 = vsel %vm1361, %v2553, 0.0
      %v2556 = vsel %vm1361, %v2554, 0.0
      %v2557 = vadd.f32 %v2555, %v2556
      %v2558 = vrot.slane %v2557, 4
      %v2559 = vadd.f32 %v2557, %v2558
      %v2560 = vrot.slane %v2559, 2
      %v2561 = vadd.f32 %v2559, %v2560
      %v2562 = vrot.slane %v2561, 1
      %v2563 = vadd.f32 %v2561, %v2562
      %s2564 = scalar_lea.vmem %s7, 2
      %v2565 = vld [vmem:[%s2564] sm:$0x1]
      %v2566 = vadd.f32 %v2563, %v2565
      %v2567 = vmax.f32 %v2566, 0.0
      %s2568 = scalar_lea.vmem %s8, 32
      %v2569 = vld [vmem:[%s2568] sm:$0xff]
      %v2570 = vld [vmem:[%s2568 + $0x8] sm:$0xff]
      %v2571 = vlaneseq
      %v2572 = vshrl.u32 %v2571, 7
      %v2573 = vsub.s32 0, %v2572
      %v2574 = vrot.slane %v2567, %v2573
      %v2575 = vmul.f32 %v2569, %v2574
      %v2576 = vmul.f32 %v2570, %v2574
      %v2577 = vsel %vm1361, %v2575, 0.0
      %2578 = vadd.xlane.f32.xlu0 %v2577
      %v2579 = vpop.xlane.xlu0 %2578
      %v2580 = vsel %vm1361, %v2576, 0.0
      %2581 = vadd.xlane.f32.xlu0 %v2580
      %v2582 = vpop.xlane.xlu0 %2581
      %s2583 = scalar_lea.vmem %s9, 32
      %v2584 = vld [vmem:[%s2583] sm:$0xff]
      %v2585 = vld [vmem:[%s2583 + $0x8] sm:$0xff]
      %v2586 = vadd.f32 %v2579, %v2584
      %v2587 = vadd.f32 %v2582, %v2585
      %v2588 = vxor.u32 %v2586, 2147483648
      %v2589 = vxor.u32 %v2587, 2147483648
      %v2590 = vmul.f32 %v2588, 1.442695
      %v2591 = vpow.pop %v2590
      %v2592 = vmul.f32 %v2589, 1.442695
      %v2593 = vpow.pop %v2592
      %v2594 = vadd.f32 %v2591, 1.0
      %v2595 = vadd.f32 %v2593, 1.0
      %v2596 = vrcp.pop %v2594
      %v2597 = vmul.f32 1.0, %v2596
      %v2598 = vrcp.pop %v2595
      %v2599 = vmul.f32 1.0, %v2598
      %2601 = vset.pattern.permute.xlu0 0
      %2602 = vperm.xlu0 %2601, %v2597
      %v2603 = vpop.permute.xlu0 %2602
      %2606 = vset.pattern.permute.xlu0 0
      %2607 = vperm.xlu0 %2606, %v2599
      %v2608 = vpop.permute.xlu0 %2607
      %v2610 = vmul.f32 %v2534, %v2603
      %v2611 = vmul.f32 %v2536, %v2603
      %v2612 = vmul.f32 %v2538, %v2608
      %v2613 = vmul.f32 %v2540, %v2608
      %v2614 = vadd.f32 %v2610, %v2016
      %v2615 = vadd.f32 %v2611, %v2017
      %v2616 = vadd.f32 %v2612, %v2018
      %v2617 = vadd.f32 %v2613, %v2019
      %v2618 = vld [vmem:[%s10] sm:$0xf]
      %v2619 = vld [vmem:[%s11] sm:$0xf]
      %v2620 = vpack.c.bf16 %v2616, %v2614
      %v2621 = vpack.c.bf16 %v2617, %v2615
      %2622 = vst [vmem:[#allocation2 + $0x8] sm:$0xff] %v2620
      %2623 = vst [vmem:[#allocation2 + $0x10] sm:$0xff] %v2621
      %v2624 = vld [vmem:[#allocation2] sm:$0xff]
      %v2625 = vld [vmem:[#allocation2 + $0x8] sm:$0xff]
      %v2626 = vld [vmem:[#allocation2 + $0x10] sm:$0xff]
      %v2627 = vsel %vm517, %v2624, 0
      %v2628 = vsel %vm518, %v2625, 0
      %v2629 = vsel %vm519, %v2626, 0
      %2633 = vrot.lane.b32.xlu0 %v2627, 17
      %v2634 = vpop.permute.xlu0 %2633
      %2635 = vrot.lane.b32.xlu0 %v2628, 17
      %v2636 = vpop.permute.xlu0 %2635
      %2637 = vrot.lane.b32.xlu0 %v2629, 17
      %v2638 = vpop.permute.xlu0 %2637
      %v2639 = vsel %vm532, %v2634, %v2636
      %v2640 = vsel %vm532, %v2636, %v2638
      %2643 = vst [vmem:[#allocation3] sm:$0xff] %v2639
      %2644 = vst [vmem:[#allocation3 + $0x8] sm:$0xff] %v2640
      %v2645 = vld [vmem:[#allocation2] sm:$0xff]
      %v2646 = vld [vmem:[#allocation2 + $0x8] sm:$0xff]
      %v2647 = vld [vmem:[#allocation2 + $0x10] sm:$0xff]
      %2651 = vrot.lane.b32.xlu0 %v2645, 16
      %v2652 = vpop.permute.xlu0 %2651
      %2653 = vrot.lane.b32.xlu0 %v2646, 16
      %v2654 = vpop.permute.xlu0 %2653
      %2655 = vrot.lane.b32.xlu0 %v2647, 16
      %v2656 = vpop.permute.xlu0 %2655
      %v2657 = vsel %vm551, %v2652, %v2654
      %v2658 = vsel %vm551, %v2654, %v2656
      %2661 = vst [vmem:[#allocation3 + $0x10] sm:$0xff] %v2657
      %2662 = vst [vmem:[#allocation3 + $0x18] sm:$0xff] %v2658
      %v2663 = vld [vmem:[#allocation2] sm:$0xff]
      %v2664 = vld [vmem:[#allocation2 + $0x8] sm:$0xff]
      %v2665 = vld [vmem:[#allocation2 + $0x10] sm:$0xff]
      %v2666 = vsel %vm581, %v2663, 0
      %v2667 = vsel %vm582, %v2664, 0
      %v2668 = vsel %vm583, %v2665, 0
      %2672 = vrot.lane.b32.xlu0 %v2666, 15
      %v2673 = vpop.permute.xlu0 %2672
      %2674 = vrot.lane.b32.xlu0 %v2667, 15
      %v2675 = vpop.permute.xlu0 %2674
      %2676 = vrot.lane.b32.xlu0 %v2668, 15
      %v2677 = vpop.permute.xlu0 %2676
      %v2678 = vsel %vm596, %v2673, %v2675
      %v2679 = vsel %vm596, %v2675, %v2677
      %2682 = vst [vmem:[#allocation3 + $0x20] sm:$0xff] %v2678
      %2683 = vst [vmem:[#allocation3 + $0x28] sm:$0xff] %v2679
      %v2684 = vld [vmem:[#allocation2] sm:$0xff]
      %v2685 = vld [vmem:[#allocation2 + $0x8] sm:$0xff]
      %v2686 = vld [vmem:[#allocation2 + $0x10] sm:$0xff]
      %v2687 = vsel %vm612, %v2684, 0
      %v2688 = vsel %vm613, %v2685, 0
      %v2689 = vsel %vm614, %v2686, 0
      %2693 = vrot.lane.b32.xlu0 %v2687, 1
      %v2694 = vpop.permute.xlu0 %2693
      %2695 = vrot.lane.b32.xlu0 %v2688, 1
      %v2696 = vpop.permute.xlu0 %2695
      %2697 = vrot.lane.b32.xlu0 %v2689, 1
      %v2698 = vpop.permute.xlu0 %2697
      %v2699 = vsel %vm627, %v2694, %v2696
      %v2700 = vsel %vm627, %v2696, %v2698
      %2703 = vst [vmem:[#allocation3 + $0x30] sm:$0xff] %v2699
      %2704 = vst [vmem:[#allocation3 + $0x38] sm:$0xff] %v2700
      %v2705 = vld [vmem:[#allocation2 + $0x8] sm:$0xff]
      %v2706 = vld [vmem:[#allocation2 + $0x10] sm:$0xff]
      %2707 = vst [vmem:[#allocation3 + $0x40] sm:$0xff] %v2705
      %2708 = vst [vmem:[#allocation3 + $0x48] sm:$0xff] %v2706
      %v2709 = vld [vmem:[#allocation2 + $0x8] sm:$0xff]
      %v2710 = vld [vmem:[#allocation2 + $0x10] sm:$0xff]
      %v2711 = vld [vmem:[#allocation2 + $0x18] sm:$0xff]
      %v2712 = vsel %vm646, %v2709, 0
      %v2713 = vsel %vm647, %v2710, 0
      %v2714 = vsel %vm648, %v2711, 0
      %2718 = vrot.lane.b32.xlu0 %v2712, 127
      %v2719 = vpop.permute.xlu0 %2718
      %2720 = vrot.lane.b32.xlu0 %v2713, 127
      %v2721 = vpop.permute.xlu0 %2720
      %2722 = vrot.lane.b32.xlu0 %v2714, 127
      %v2723 = vpop.permute.xlu0 %2722
      %v2724 = vsel %vm610, %v2719, %v2721
      %v2725 = vsel %vm610, %v2721, %v2723
      %2728 = vst [vmem:[#allocation3 + $0x50] sm:$0xff] %v2724
      %2729 = vst [vmem:[#allocation3 + $0x58] sm:$0xff] %v2725
      %v2730 = vld [vmem:[#allocation2 + $0x8] sm:$0xff]
      %v2731 = vld [vmem:[#allocation2 + $0x10] sm:$0xff]
      %v2732 = vld [vmem:[#allocation2 + $0x18] sm:$0xff]
      %v2733 = vsel %vm675, %v2730, 0
      %v2734 = vsel %vm676, %v2731, 0
      %v2735 = vsel %vm677, %v2732, 0
      %2739 = vrot.lane.b32.xlu0 %v2733, 113
      %v2740 = vpop.permute.xlu0 %2739
      %2741 = vrot.lane.b32.xlu0 %v2734, 113
      %v2742 = vpop.permute.xlu0 %2741
      %2743 = vrot.lane.b32.xlu0 %v2735, 113
      %v2744 = vpop.permute.xlu0 %2743
      %v2745 = vsel %vm579, %v2740, %v2742
      %v2746 = vsel %vm579, %v2742, %v2744
      %2749 = vst [vmem:[#allocation3 + $0x60] sm:$0xff] %v2745
      %2750 = vst [vmem:[#allocation3 + $0x68] sm:$0xff] %v2746
      %v2751 = vld [vmem:[#allocation2 + $0x8] sm:$0xff]
      %v2752 = vld [vmem:[#allocation2 + $0x10] sm:$0xff]
      %v2753 = vld [vmem:[#allocation2 + $0x18] sm:$0xff]
      %2757 = vrot.lane.b32.xlu0 %v2751, 112
      %v2758 = vpop.permute.xlu0 %2757
      %2759 = vrot.lane.b32.xlu0 %v2752, 112
      %v2760 = vpop.permute.xlu0 %2759
      %2761 = vrot.lane.b32.xlu0 %v2753, 112
      %v2762 = vpop.permute.xlu0 %2761
      %v2763 = vsel %vm708, %v2758, %v2760
      %v2764 = vsel %vm708, %v2760, %v2762
      %2767 = vst [vmem:[#allocation3 + $0x70] sm:$0xff] %v2763
      %2768 = vst [vmem:[#allocation3 + $0x78] sm:$0xff] %v2764
      %v2769 = vld [vmem:[#allocation2 + $0x8] sm:$0xff]
      %v2770 = vld [vmem:[#allocation2 + $0x10] sm:$0xff]
      %v2771 = vld [vmem:[#allocation2 + $0x18] sm:$0xff]
      %v2772 = vsel %vm723, %v2769, 0
      %v2773 = vsel %vm724, %v2770, 0
      %v2774 = vsel %vm725, %v2771, 0
      %2778 = vrot.lane.b32.xlu0 %v2772, 111
      %v2779 = vpop.permute.xlu0 %2778
      %2780 = vrot.lane.b32.xlu0 %v2773, 111
      %v2781 = vpop.permute.xlu0 %2780
      %2782 = vrot.lane.b32.xlu0 %v2774, 111
      %v2783 = vpop.permute.xlu0 %2782
      %v2784 = vsel %vm515, %v2779, %v2781
      %v2785 = vsel %vm515, %v2781, %v2783
      %2788 = vst [vmem:[#allocation3 + $0x80] sm:$0xff] %v2784
      %2789 = vst [vmem:[#allocation3 + $0x88] sm:$0xff] %v2785
      %v2790 = vld [vmem:[#allocation3] sm:$0xff]
      %v2791 = vld [vmem:[#allocation3 + $0x8] sm:$0xff]
      %v2792 = vld [vmem:[#allocation3 + $0x10] sm:$0xff]
      %v2793 = vld [vmem:[#allocation3 + $0x18] sm:$0xff]
      %v2794 = vld [vmem:[#allocation3 + $0x20] sm:$0xff]
      %v2795 = vld [vmem:[#allocation3 + $0x28] sm:$0xff]
      %v2796 = vld [vmem:[#allocation3 + $0x30] sm:$0xff]
      %v2797 = vld [vmem:[#allocation3 + $0x38] sm:$0xff]
      %v2798 = vld [vmem:[#allocation3 + $0x40] sm:$0xff]
      %v2799 = vld [vmem:[#allocation3 + $0x48] sm:$0xff]
      %v2800 = vld [vmem:[#allocation3 + $0x50] sm:$0xff]
      %v2801 = vld [vmem:[#allocation3 + $0x58] sm:$0xff]
      %v2802 = vld [vmem:[#allocation3 + $0x60] sm:$0xff]
      %v2803 = vld [vmem:[#allocation3 + $0x68] sm:$0xff]
      %v2804 = vld [vmem:[#allocation3 + $0x70] sm:$0xff]
      %v2805 = vld [vmem:[#allocation3 + $0x78] sm:$0xff]
      %v2806 = vld [vmem:[#allocation3 + $0x80] sm:$0xff]
      %v2807 = vld [vmem:[#allocation3 + $0x88] sm:$0xff]
      %2809 = vset.pattern.permute.xlu0 0
      %2810 = vperm.xlu0 %2809, %v2619
      %v2811 = vpop.permute.xlu0 %2810
      %v2815 = vunpack.c.l.s4 1983009808
      %v2816 = vunpack.c.0.s8 %v2815
      %v2817 = vlaneseq
      %v2818 = vshrl.u32 %v2817, 7
      %v2819 = vsub.s32 %v2816, %v2818
      %v2820 = vrot.slane %v2618, %v2819
      %v2821 = vcombine.high %v2820, %v2820
      %v2824 = vsel %vm781, %v2821, 0
      %2826 = vmatprep.subr.bf16.mxu0 %v2791
      %2827 = vmatpush1.bf16.msra.mxu0 %v2790
      %2828 = vmatprep.subr.bf16.mxu0 %v2793
      %2829 = vmatpush1.bf16.msra.mxu0 %v2792
      %2830 = vmatprep.subr.bf16.mxu0 %v2795
      %2831 = vmatpush1.bf16.msra.mxu0 %v2794
      %2832 = vmatprep.subr.bf16.mxu0 %v2797
      %2833 = vmatpush1.bf16.msra.mxu0 %v2796
      %2834 = vmatprep.subr.bf16.mxu0 %v2799
      %2835 = vmatpush1.bf16.msra.mxu0 %v2798
      %2836 = vmatprep.subr.bf16.mxu0 %v2801
      %2837 = vmatpush1.bf16.msra.mxu0 %v2800
      %2838 = vmatprep.subr.bf16.mxu0 %v2803
      %2839 = vmatpush1.bf16.msra.mxu0 %v2802
      %2840 = vmatprep.subr.bf16.mxu0 %v2805
      %2841 = vmatpush1.bf16.msra.mxu0 %v2804
      %2842 = vmatprep.subr.bf16.mxu0 %v2807
      %2843 = vmatpush1.bf16.msra.mxu0 %v2806
      %2844 = vmatprep.subr.bf16.mxu0 0
      %2845 = vmatpush1.bf16.msra.mxu0 0
      %2846 = vmatprep.subr.bf16.mxu0 0
      %2847 = vmatpush1.bf16.msra.mxu0 0
      %2848 = vmatprep.subr.bf16.mxu0 0
      %2849 = vmatpush1.bf16.msra.mxu0 0
      %2850 = vmatprep.subr.bf16.mxu0 0
      %2851 = vmatpush1.bf16.msra.mxu0 0
      %2852 = vmatprep.subr.bf16.mxu0 0
      %2853 = vmatpush1.bf16.msra.mxu0 0
      %2854 = vmatprep.subr.bf16.mxu0 0
      %2855 = vmatpush1.bf16.msra.mxu0 0
      %2856 = vmatprep.subr.bf16.mxu0 0
      %2857 = vmatpush1.bf16.msra.mxu0 0
      %2858 = vmatprep.mubr.bf16.mxu0 %v2824
      %2859 = vmatmul.mubr.bf16.gmra.mrb[0].mxu0 %v2820
      %v2860 = vpop.f32.mrb[0].mxu0
      %v2861 = vadd.f32 %v2811, %v2860
      %v2862 = vpop.f32.mrb[0].mxu0
      %v2863 = vadd.f32 %v2811, %v2862
      %v2864 = vpop.f32.mrb[0].mxu0
      %v2865 = vpop.f32.mrb[0].mxu0
      %2866 = vdwg.mxu0
      %v2867 = vxor.u32 %v2861, 2147483648
      %v2868 = vxor.u32 %v2863, 2147483648
      %v2869 = vmul.f32 %v2867, 1.442695
      %v2870 = vpow.pop %v2869
      %v2871 = vmul.f32 %v2868, 1.442695
      %v2872 = vpow.pop %v2871
      %v2873 = vadd.f32 %v2870, 1.0
      %v2874 = vadd.f32 %v2872, 1.0
      %v2875 = vrcp.pop %v2873
      %v2876 = vmul.f32 1.0, %v2875
      %v2877 = vrcp.pop %v2874
      %v2878 = vmul.f32 1.0, %v2877
      %v2881 = vcombine.low %v2876, %v2878
      %2883 = vst [vmem:[%s433] sm:$0xff] %v2881
      %p2884 = scmp.lt.s32.totalorder %s23, 1
      %s2885 = scalar_select %p2884, %s23, 1
      %s2886 = smul.addr %s2885, 2
      %s2887 = smul.addr %s2886, 4
      %s2888 = scalar_lea.vmem %s12, %s2887
      // Predicated region
      $region69: #{_lambda_.1} parent=67 // pred_check
        %p2889 = pneg %p303
      $region70: #{_lambda_.1} parent=67 // pred_check_branch
        %2891 = sbr.rel (%p2889) target = $region72
      $region71: #{_lambda_.1} parent=67 // pred_region
        _
      $region72: #{_lambda_.1} parent=67 // pred_fallthru
        _
    $region68: #{_lambda_.1} parent=5 // pred_fallthru
      _
    %p2892 = scmp.le.s32.totalorder 2, %s18
    // Predicated region
    $region73: #{_lambda_.1} parent=5 // pred_check
      %p2893 = pneg %p2892
    $region74: #{_lambda_.1} parent=5 // pred_check_branch
      %2895 = sbr.rel (%p2893) target = $region76
    $region75: #{_lambda_.1} parent=5 // pred_region
      %s2896 = ssub.s32 %s18, 2
      // Predicated region
      $region77: #{_lambda_.1} parent=75 // pred_check
        %p2897 = pneg %p309
      $region78: #{_lambda_.1} parent=75 // pred_check_branch
        %2899 = sbr.rel (%p2897) target = $region80
      $region79: #{_lambda_.1} parent=75 // pred_region
        %p2900 = scmp.lt.s32.totalorder %s24, 1
        %s2901 = scalar_select %p2900, %s24, 1
        %s2902 = smul.addr %s2901, 2
        %s2903 = smul.addr %s2902, 4
        %s2904 = scalar_lea.vmem %s12, %s2903
      $region80: #{_lambda_.1} parent=75 // pred_fallthru
        _
    $region76: #{_lambda_.1} parent=5 // pred_fallthru
      _
  $region6: #{_lambda_.1} parent=0 // loop_footer
    %s22 = sadd.s32 1, %s18
  $region7: #{_lambda_.1} parent=0 // loop_footer_branch
    %17 = sbr.rel target = $region3
  $region8: #{_lambda_.1} parent=0 // loop_exit
    _

</llo_original>
